<compile_context>
chip_gen: v6e
topology: v6e:2x2x1
jax: 0.10.0
libtpu: 0.0.40
codegen_flags: <defaults>
</compile_context>

<pallas_src>
import functools
import math

import jax
import jax.numpy as jnp
from jax import lax
from jax.experimental import pallas as pl
from jax.experimental.pallas import tpu as pltpu


# -----------------------------------------------------------------------------
# Helpers (all trace-time Python)
# -----------------------------------------------------------------------------
def _conv_margin(w_pad, ksize):
    """Flat-index margin for the KxK conv, rounded up to a lane multiple."""
    p = ksize // 2
    need = p * (w_pad + 1)                 # max |di*w_pad + dj|
    return ((need + 127) // 128) * 128


def _pad_spatial(H, W):
    """Smallest (Hp, Wp) >= (H, W) with Hp*Wp % 128 == 0 (lane-dense layout)."""
    if (H * W) % 128 == 0:
        return H, W
    best = None
    for wp in range(W, W + 129):
        g = 128 // math.gcd(wp, 128)       # Hp must be a multiple of g
        hp = ((H + g - 1) // g) * g
        if best is None or hp * wp < best[0] * best[1]:
            best = (hp, wp)
    return best


def _vmem_capacity_bytes():
    """Physical VMEM per TensorCore; conservative fallback = v7x (64 MiB)."""
    try:
        info = pltpu.get_tpu_info()
        for name in ("vmem_capacity_bytes", "vmem_size_bytes", "vmem_bytes"):
            v = getattr(info, name, None)
            if v:
                return int(v)
    except Exception:
        pass
    return 64 << 20


def _pick_hw_chunk(hwp, bytes_per_lane_f32, target_bytes):
    """Largest divisor of hwp that is a multiple of 128 and fits the f32 chunk target."""
    best = 128
    for d in range(128, hwp + 1, 128):
        if hwp % d == 0 and d * bytes_per_lane_f32 <= target_bytes:
            best = d
    return best


def _step_vmem_bytes(nb, C, hwp, margin, hwch, ksize, Cr, in_item, out_item):
    """Conservative true per-grid-step VMEM footprint (bytes)."""
    blk_in = nb * C * hwp * in_item
    blk_out = nb * C * hwp * out_item
    pipelined = 2 * (blk_in + blk_out)              # double-buffered in + out blocks
    pad_scr = 2 * nb * (hwp + 2 * margin) * 4       # conv pad scratch (f32)
    chunk_tmp = 3 * nb * C * hwch * 4               # streamed f32 working set
    plane_tmp = 10 * nb * hwp * 4                   # conv acc/part/satt/plane temps
    small = 2 * (2 * C * Cr * 4 + (ksize + 1) * hwp * 4)  # weights + masks
    slack = 2 << 20                                 # compiler temps / spill headroom
    return pipelined + pad_scr + chunk_tmp + plane_tmp + small + slack


# -----------------------------------------------------------------------------
# Fused CBAM kernel: one block = (NB, C, HWp), lane-dense on HWp.
# -----------------------------------------------------------------------------
def _cbam_kernel(x_ref, w1t_ref, w2t_ref, cmask_ref, negb_ref, wsp_ref, bsp_ref,
                 o_ref, pad_ref, *, w_pad, ksize, margin, true_hw, hwch,
                 use_mxu, has_pad):
    f32 = jnp.float32
    NB, C, HWp = x_ref.shape
    pad_k = ksize // 2
    nhw = HWp // hwch                      # static number of H*W chunks

    # ---------------- Phase A: channel pools (max / avg over H*W) ------------
    if nhw == 1:
        x32 = x_ref[...].astype(f32)                              # (NB, C, HWp)
        xm = x32 + negb_ref[...].reshape(1, 1, HWp) if has_pad else x32
        maxp = jnp.max(xm, axis=2)                                # (NB, C)
        sump = jnp.sum(x32, axis=2)
    else:
        def pool_body(j, carry):
            mx, sm = carry
            off = pl.multiple_of(j * hwch, hwch)
            xc = x_ref[:, :, pl.ds(off, hwch)].astype(f32)        # (NB, C, hwch)
            if has_pad:
                xcm = xc + negb_ref[:, pl.ds(off, hwch)].reshape(1, 1, hwch)
            else:
                xcm = xc
            return (jnp.maximum(mx, jnp.max(xcm, axis=2)),
                    sm + jnp.sum(xc, axis=2))
        maxp, sump = lax.fori_loop(
            0, nhw, pool_body,
            (jnp.full((NB, C), -jnp.inf, f32), jnp.zeros((NB, C), f32)))
    avgp = sump * (1.0 / true_hw)
    pools = jnp.concatenate([maxp, avgp], axis=0)                 # (2*NB, C)

    # ---------------- shared MLP -> channel attention -------------------------
    w1t = w1t_ref[...]                                            # (C, Cr)
    w2t = w2t_ref[...]                                            # (Cr, C)
    if use_mxu:
        h = jnp.maximum(jnp.dot(pools, w1t, preferred_element_type=f32,
                                precision=lax.Precision.HIGHEST), 0.0)
        se = jnp.dot(h, w2t, preferred_element_type=f32,
                     precision=lax.Precision.HIGHEST)
    else:
        # Tiny C: exact f32 on the VPU (no MXU fill/drain bubble per step).
        h = jnp.maximum(jnp.sum(pools[:, :, None] * w1t[None], axis=1), 0.0)
        se = jnp.sum(h[:, :, None] * w2t[None], axis=1)           # (2*NB, C)
    catt = jax.nn.sigmoid(se[:NB] + se[NB:])                      # (NB, C)

    # ---------------- Phase B: spatial planes (channel max / mean of x*catt) --
    # pad_ref layout: [2*NB, margin | HWp | margin]; rows 0..NB-1 = max plane,
    # rows NB..2*NB-1 = mean plane.  Only the margin strips need zeroing.
    pad_ref[:, 0:margin] = jnp.zeros((2 * NB, margin), f32)
    pad_ref[:, margin + HWp:] = jnp.zeros((2 * NB, margin), f32)
    if nhw == 1:
        yc = x32 * catt[:, :, None]
        pad_ref[0:NB, margin:margin + HWp] = jnp.max(yc, axis=1)
        pad_ref[NB:2 * NB, margin:margin + HWp] = jnp.sum(yc, axis=1) * (1.0 / C)
    else:
        def plane_body(j, _):
            off = pl.multiple_of(j * hwch, hwch)
            yc = x_ref[:, :, pl.ds(off, hwch)].astype(f32) * catt[:, :, None]
            dst = pl.multiple_of(margin + off, 128)
            pad_ref[0:NB, pl.ds(dst, hwch)] = jnp.max(yc, axis=1)
            pad_ref[NB:2 * NB, pl.ds(dst, hwch)] = jnp.sum(yc, axis=1) * (1.0 / C)
            return 0
        lax.fori_loop(0, nhw, plane_body, 0)

    # ---------------- Phase C: KxK conv on the two pooled planes --------------
    # One misaligned slice load per (di, dj) covering BOTH planes; per-plane
    # taps are applied via a row-select vector.  Column-wrap taps are killed by
    # the precomputed lane masks; row/column zero padding lives in the margins
    # and in the spatially padded (zero) region.
    rsel = (lax.broadcasted_iota(jnp.int32, (2 * NB, 1), 0) < NB).astype(f32)
    rsel_c = 1.0 - rsel
    acc = jnp.zeros((2 * NB, HWp), f32)
    for dj in range(-pad_k, pad_k + 1):
        part = jnp.zeros((2 * NB, HWp), f32)
        for di in range(-pad_k, pad_k + 1):
            off = margin + di * w_pad + dj                 # static offset
            sl = pad_ref[:, off:off + HWp]                 # (2*NB, HWp), one load
            t_max = wsp_ref[(di + pad_k) * ksize + (dj + pad_k)]
            t_avg = wsp_ref[ksize * ksize + (di + pad_k) * ksize + (dj + pad_k)]
            part = part + (t_max * rsel + t_avg * rsel_c) * sl
        acc = acc + cmask_ref[dj + pad_k:dj + pad_k + 1, :] * part
    conv = acc[0:NB] + acc[NB:2 * NB]                      # (NB, HWp)
    satt = jax.nn.sigmoid(conv + bsp_ref[0])

    # ---------------- Phase D: out = x * catt * satt ---------------------------
    if nhw == 1:
        o_ref[...] = (x32 * catt[:, :, None] * satt[:, None, :]).astype(o_ref.dtype)
    else:
        # Stash satt in the (now free) max-plane interior for aligned re-reads.
        pad_ref[0:NB, margin:margin + HWp] = satt
        def out_body(j, _):
            off = pl.multiple_of(j * hwch, hwch)
            xc = x_ref[:, :, pl.ds(off, hwch)].astype(f32)
            sc = pad_ref[0:NB, pl.ds(pl.multiple_of(margin + off, 128), hwch)]
            o_ref[:, :, pl.ds(off, hwch)] = (
                xc * catt[:, :, None] * sc[:, None, :]).astype(o_ref.dtype)
            return 0
        lax.fori_loop(0, nhw, out_body, 0)


# -----------------------------------------------------------------------------
# cbam_block forward
# -----------------------------------------------------------------------------
@jax.jit
def cbam_forward(x, w1, w2, w_sp, b_sp):
    N, C, H, W = x.shape
    Cr = w1.shape[0]
    ksize = w_sp.shape[-1]
    pad_k = ksize // 2

    # Lane-dense spatial layout (pad to a multiple of 128 positions if needed).
    Hp, Wp = _pad_spatial(H, W)
    has_pad = (Hp, Wp) != (H, W)
    HWp = Hp * Wp
    margin = _conv_margin(Wp, ksize)

    xin = x
    if has_pad:
        xin = jnp.pad(x, ((0, 0), (0, 0), (0, Hp - H), (0, Wp - W)))
    xf = xin.reshape(N, C, HWp)

    w1t = jnp.transpose(w1).astype(jnp.float32)        # (C, Cr)
    w2t = jnp.transpose(w2).astype(jnp.float32)        # (Cr, C)
    w_flat = w_sp.reshape(-1).astype(jnp.float32)      # (2*ks*ks,) -> SMEM
    b_flat = b_sp.reshape(-1).astype(jnp.float32)      # (1,)       -> SMEM

    # Column-validity masks (per dj shift) and the max-pool lane bias.
    idx = jnp.arange(HWp, dtype=jnp.int32)
    col = idx % Wp
    row = idx // Wp
    cmask = jnp.stack(
        [((col + dj >= 0) & (col + dj < W)).astype(jnp.float32)
         for dj in range(-pad_k, pad_k + 1)], axis=0)            # (ks, HWp)
    neg_bias = jnp.where((row < H) & (col < W), 0.0, -1e30)
    neg_bias = neg_bias.astype(jnp.float32).reshape(1, HWp)

    # ---- generation-aware, true-footprint VMEM accounting --------------------
    cap = _vmem_capacity_bytes()                       # 128 MiB v5e/v6e, 64 MiB v7x
    budget = min(cap // 2, 48 << 20)                   # accounted footprint budget
    hard_cap = cap - (8 << 20)
    itemsize = x.dtype.itemsize

    def chunk_for(nb):
        return _pick_hw_chunk(HWp, nb * C * 4, 2 << 20)

    def footprint(nb):
        return _step_vmem_bytes(nb, C, HWp, margin, chunk_for(nb),
                                ksize, Cr, itemsize, itemsize)

    # Guarantee >= min(N, 4) grid steps for DMA overlap / v7x dual-TC use.
    min_steps = min(N, 4)
    nb = 1
    for d in range(1, N + 1):
        if N % d == 0 and N // d >= min_steps and footprint(d) <= budget:
            nb = d
    fp = footprint(nb)
    if fp > hard_cap:
        raise ValueError(
            f"cbam_forward: single batch element needs ~{fp >> 20} MiB VMEM "
            f"(cap {cap >> 20} MiB); a C-chunked grid would be required.")
    hwch = chunk_for(nb)
    use_mxu = C >= 128
    vmem_limit = int(min(hard_cap, max(2 * fp, 32 << 20)))

    kernel = functools.partial(
        _cbam_kernel, w_pad=Wp, ksize=ksize, margin=margin, true_hw=H * W,
        hwch=hwch, use_mxu=use_mxu, has_pad=has_pad)

    out = pl.pallas_call(
        kernel,
        out_shape=jax.ShapeDtypeStruct((N, C, HWp), x.dtype),
        grid=(N // nb,),
        in_specs=[
            pl.BlockSpec((nb, C, HWp), lambda n: (n, 0, 0)),
            pl.BlockSpec((C, Cr), lambda n: (0, 0)),
            pl.BlockSpec((Cr, C), lambda n: (0, 0)),
            pl.BlockSpec((ksize, HWp), lambda n: (0, 0)),
            pl.BlockSpec((1, HWp), lambda n: (0, 0)),
            pl.BlockSpec(memory_space=pltpu.MemorySpace.SMEM),
            pl.BlockSpec(memory_space=pltpu.MemorySpace.SMEM),
        ],
        out_specs=pl.BlockSpec((nb, C, HWp), lambda n: (n, 0, 0)),
        scratch_shapes=[pltpu.VMEM((2 * nb, HWp + 2 * margin), jnp.float32)],
        compiler_params=pltpu.CompilerParams(
            dimension_semantics=("parallel",),
            vmem_limit_bytes=vmem_limit),
    )(xf, w1t, w2t, cmask, neg_bias, w_flat, b_flat)

    out = out.reshape(N, C, Hp, Wp)
    if has_pad:
        out = out[:, :, :H, :W]
    return out


# Pure-JAX reference (mirrors the PyTorch forward) for the correctness check.
def cbam_reference(x, w1, w2, w_sp, b_sp):
    xf = x.astype(jnp.float32)
    maxp = jnp.max(xf, axis=(2, 3))                          # (N, C)
    avgp = jnp.mean(xf, axis=(2, 3))

    def se(p):
        h = jnp.maximum(jnp.einsum("nc,rc->nr", p, w1,
                                   precision=lax.Precision.HIGHEST), 0.0)
        return jnp.einsum("nr,cr->nc", h, w2, precision=lax.Precision.HIGHEST)

    catt = jax.nn.sigmoid(se(maxp) + se(avgp))               # (N, C)
    y = xf * catt[:, :, None, None]

    cmax = jnp.max(y, axis=1, keepdims=True)
    cmean = jnp.mean(y, axis=1, keepdims=True)
    s_in = jnp.concatenate([cmax, cmean], axis=1)            # (N, 2, H, W)
    p = w_sp.shape[-1] // 2
    conv = lax.conv_general_dilated(
        s_in, w_sp, window_strides=(1, 1), padding=((p, p), (p, p)),
        dimension_numbers=("NCHW", "OIHW", "NCHW"),
        precision=lax.Precision.HIGHEST)
    satt = jax.nn.sigmoid(conv + b_sp.reshape(1, 1, 1, 1))
    return (y * satt).astype(x.dtype)


if __name__ == "__main__":
    def run_case(N, C, H, W):
        # Shapes consistent with cbam_block(channel=C) (reduction=8 -> Cr=C//8).
        Cr = max(C // 8, 1)
        KS = 7
        key = jax.random.PRNGKey(0)
        kx, k1, k2, k3, k4 = jax.random.split(key, 5)
        x = jax.random.normal(kx, (N, C, H, W), dtype=jnp.float32)
        w1 = 0.2 * jax.random.normal(k1, (Cr, C), dtype=jnp.float32)          # Conv2d(C, Cr, 1)
        w2 = 0.2 * jax.random.normal(k2, (C, Cr), dtype=jnp.float32)          # Conv2d(Cr, C, 1)
        w_sp = 0.1 * jax.random.normal(k3, (1, 2, KS, KS), dtype=jnp.float32)  # Conv2d(2, 1, 7)
        b_sp = 0.1 * jax.random.normal(k4, (1,), dtype=jnp.float32)

        out = jax.block_until_ready(cbam_forward(x, w1, w2, w_sp, b_sp))
        ref = cbam_reference(x, w1, w2, w_sp, b_sp)
        assert out.shape == (N, C, H, W)
        max_err = float(jnp.max(jnp.abs(out - ref)))
        assert jnp.allclose(out, ref, rtol=1e-3, atol=1e-3), (N, C, H, W, max_err)

    run_case(2, 16, 16, 16)   # lane-dense path (H*W % 128 == 0), 2 grid steps
    run_case(2, 16, 10, 10)   # spatial-padding path (H*W = 100 -> padded 16x16)
    print("KERNEL_OK")
</pallas_src>

<mosaic_0001>
module attributes {stable_mosaic.version = 11 : i64} {
  func.func @_cbam_kernel(%arg0: i32, %arg1: memref<1x16x256xf32, #tpu.memory_space<vmem>>, %arg2: memref<16x2xf32, #tpu.memory_space<vmem>>, %arg3: memref<2x16xf32, #tpu.memory_space<vmem>>, %arg4: memref<7x256xf32, #tpu.memory_space<vmem>>, %arg5: memref<1x256xf32, #tpu.memory_space<vmem>>, %arg6: memref<98xf32, #tpu.memory_space<smem>>, %arg7: memref<1xf32, #tpu.memory_space<smem>>, %arg8: memref<1x16x256xf32, #tpu.memory_space<vmem>>, %arg9: memref<2x512xf32, #tpu.memory_space<vmem>>) attributes {dimension_semantics = [#tpu.dimension_semantics<parallel>], iteration_bounds = array<i64: 2>, scalar_prefetch = 0 : i64, scratch_operands = 1 : i64, tpu.core_type = #tpu.core_type<tc>, window_params = [{transform_indices = @transform_0, window_bounds = array<i64: 1, 16, 256>}, {pipeline_mode = #tpu.pipeline_mode<synchronous>, transform_indices = @transform_1, window_bounds = array<i64: 16, 2>}, {pipeline_mode = #tpu.pipeline_mode<synchronous>, transform_indices = @transform_2, window_bounds = array<i64: 2, 16>}, {pipeline_mode = #tpu.pipeline_mode<synchronous>, transform_indices = @transform_3, window_bounds = array<i64: 7, 256>}, {pipeline_mode = #tpu.pipeline_mode<synchronous>, transform_indices = @transform_4, window_bounds = array<i64: 1, 256>}, {transform_indices = @transform_5, window_bounds = array<i64: 98>}, {transform_indices = @transform_6, window_bounds = array<i64: 1>}, {transform_indices = @transform_7, window_bounds = array<i64: 1, 16, 256>}]} {
    %c0 = arith.constant 0 : index
    %c0_0 = arith.constant 0 : index
    %c0_1 = arith.constant 0 : index
    %0 = vector.load %arg1[%c0, %c0_0, %c0_1] : memref<1x16x256xf32, #tpu.memory_space<vmem>>, vector<1x16x256xf32>
    %cst = arith.constant dense<0xFF800000> : vector<1x16xf32>
    %1 = vector.multi_reduction <maximumf>, %0, %cst [2] : vector<1x16x256xf32> to vector<1x16xf32>
    %cst_2 = arith.constant dense<0.000000e+00> : vector<1x16xf32>
    %2 = vector.multi_reduction <add>, %0, %cst_2 [2] : vector<1x16x256xf32> to vector<1x16xf32>
    %cst_3 = arith.constant 3.906250e-03 : f32
    %3 = vector.broadcast %cst_3 : f32 to vector<1x16xf32>
    %4 = arith.mulf %2, %3 : vector<1x16xf32>
    %5 = tpu.concatenate %1, %4 in 0 : vector<1x16xf32>, vector<1x16xf32> -> vector<2x16xf32>
    %c0_4 = arith.constant 0 : index
    %c0_5 = arith.constant 0 : index
    %6 = vector.load %arg2[%c0_4, %c0_5] : memref<16x2xf32, #tpu.memory_space<vmem>>, vector<16x2xf32>
    %c0_6 = arith.constant 0 : index
    %c0_7 = arith.constant 0 : index
    %7 = vector.load %arg3[%c0_6, %c0_7] : memref<2x16xf32, #tpu.memory_space<vmem>>, vector<2x16xf32>
    %8 = vector.shape_cast %5 : vector<2x16xf32> to vector<2x16x1xf32>
    %9 = vector.shape_cast %6 : vector<16x2xf32> to vector<1x16x2xf32>
    %10 = vector.broadcast %8 : vector<2x16x1xf32> to vector<2x16x2xf32>
    %11 = vector.broadcast %9 : vector<1x16x2xf32> to vector<2x16x2xf32>
    %12 = arith.mulf %10, %11 : vector<2x16x2xf32>
    %cst_8 = arith.constant dense<0.000000e+00> : vector<2x2xf32>
    %13 = vector.multi_reduction <add>, %12, %cst_8 [1] : vector<2x16x2xf32> to vector<2x2xf32>
    %cst_9 = arith.constant 0.000000e+00 : f32
    %14 = vector.broadcast %cst_9 : f32 to vector<2x2xf32>
    %15 = arith.maximumf %13, %14 : vector<2x2xf32>
    %16 = vector.shape_cast %15 : vector<2x2xf32> to vector<2x2x1xf32>
    %17 = vector.shape_cast %7 : vector<2x16xf32> to vector<1x2x16xf32>
    %18 = vector.broadcast %16 : vector<2x2x1xf32> to vector<2x2x16xf32>
    %19 = vector.broadcast %17 : vector<1x2x16xf32> to vector<2x2x16xf32>
    %20 = arith.mulf %18, %19 : vector<2x2x16xf32>
    %cst_10 = arith.constant dense<0.000000e+00> : vector<2x16xf32>
    %21 = vector.multi_reduction <add>, %20, %cst_10 [1] : vector<2x2x16xf32> to vector<2x16xf32>
    %22 = vector.extract_strided_slice %21 {offsets = [0, 0], sizes = [1, 16], strides = [1, 1]} : vector<2x16xf32> to vector<1x16xf32>
    %23 = vector.extract_strided_slice %21 {offsets = [1, 0], sizes = [1, 16], strides = [1, 1]} : vector<2x16xf32> to vector<1x16xf32>
    %24 = arith.addf %22, %23 : vector<1x16xf32>
    %25 = arith.negf %24 : vector<1x16xf32>
    %26 = math.exp %25 : vector<1x16xf32>
    %cst_11 = arith.constant 1.000000e+00 : f32
    %27 = vector.broadcast %cst_11 : f32 to vector<1x16xf32>
    %28 = arith.addf %27, %26 : vector<1x16xf32>
    %29 = arith.divf %27, %28 : vector<1x16xf32>
    %cst_12 = arith.constant 0.000000e+00 : f32
    %30 = vector.broadcast %cst_12 : f32 to vector<2x128xf32>
    %c0_13 = arith.constant 0 : index
    %c0_14 = arith.constant 0 : index
    %31 = vector.load %arg9[%c0_13, %c0_14] : memref<2x512xf32, #tpu.memory_space<vmem>>, vector<2x128xf32>
    tpu.vector_store %arg9[%c0_13, %c0_14], %30 {strides = array<i32>} : memref<2x512xf32, #tpu.memory_space<vmem>>, vector<2x128xf32>,
    %cst_15 = arith.constant 0.000000e+00 : f32
    %32 = vector.broadcast %cst_15 : f32 to vector<2x128xf32>
    %c0_16 = arith.constant 0 : index
    %c384 = arith.constant 384 : index
    %33 = vector.load %arg9[%c0_16, %c384] : memref<2x512xf32, #tpu.memory_space<vmem>>, vector<2x128xf32>
    tpu.vector_store %arg9[%c0_16, %c384], %32 {strides = array<i32>} : memref<2x512xf32, #tpu.memory_space<vmem>>, vector<2x128xf32>,
    %34 = vector.shape_cast %29 : vector<1x16xf32> to vector<1x16x1xf32>
    %35 = vector.broadcast %34 : vector<1x16x1xf32> to vector<1x16x256xf32>
    %36 = arith.mulf %0, %35 : vector<1x16x256xf32>
    %cst_17 = arith.constant dense<0xFF800000> : vector<1x256xf32>
    %37 = vector.multi_reduction <maximumf>, %36, %cst_17 [1] : vector<1x16x256xf32> to vector<1x256xf32>
    %c0_18 = arith.constant 0 : index
    %c128 = arith.constant 128 : index
    %38 = vector.load %arg9[%c0_18, %c128] : memref<2x512xf32, #tpu.memory_space<vmem>>, vector<1x256xf32>
    tpu.vector_store %arg9[%c0_18, %c128], %37 {strides = array<i32>} : memref<2x512xf32, #tpu.memory_space<vmem>>, vector<1x256xf32>,
    %cst_19 = arith.constant dense<0.000000e+00> : vector<1x256xf32>
    %39 = vector.multi_reduction <add>, %36, %cst_19 [1] : vector<1x16x256xf32> to vector<1x256xf32>
    %cst_20 = arith.constant 6.250000e-02 : f32
    %40 = vector.broadcast %cst_20 : f32 to vector<1x256xf32>
    %41 = arith.mulf %39, %40 : vector<1x256xf32>
    %c1 = arith.constant 1 : index
    %c128_21 = arith.constant 128 : index
    %42 = vector.load %arg9[%c1, %c128_21] : memref<2x512xf32, #tpu.memory_space<vmem>>, vector<1x256xf32>
    tpu.vector_store %arg9[%c1, %c128_21], %41 {strides = array<i32>} : memref<2x512xf32, #tpu.memory_space<vmem>>, vector<1x256xf32>,
    %43 = tpu.iota {dimensions = array<i32: 0>} : vector<2x1xi32>
    %c1_i32 = arith.constant 1 : i32
    %44 = vector.broadcast %c1_i32 : i32 to vector<2x1xi32>
    %45 = arith.cmpi slt, %43, %44 : vector<2x1xi32>
    %46 = arith.extui %45 : vector<2x1xi1> to vector<2x1xi32>
    %47 = arith.sitofp %46 : vector<2x1xi32> to vector<2x1xf32>
    %cst_22 = arith.constant 1.000000e+00 : f32
    %48 = vector.broadcast %cst_22 : f32 to vector<2x1xf32>
    %49 = arith.subf %48, %47 : vector<2x1xf32>
    %cst_23 = arith.constant 0.000000e+00 : f32
    %50 = vector.broadcast %cst_23 : f32 to vector<2x256xf32>
    %cst_24 = arith.constant 0.000000e+00 : f32
    %51 = vector.broadcast %cst_24 : f32 to vector<2x256xf32>
    %c0_25 = arith.constant 0 : index
    %c77 = arith.constant 77 : index
    %52 = vector.load %arg9[%c0_25, %c77] : memref<2x512xf32, #tpu.memory_space<vmem>>, vector<2x256xf32>
    %c0_26 = arith.constant 0 : index
    %53 = memref.load %arg6[%c0_26] : memref<98xf32, #tpu.memory_space<smem>>
    %c49 = arith.constant 49 : index
    %54 = memref.load %arg6[%c49] : memref<98xf32, #tpu.memory_space<smem>>
    %55 = vector.broadcast %53 : f32 to vector<2x1xf32>
    %56 = arith.mulf %55, %47 : vector<2x1xf32>
    %57 = vector.broadcast %54 : f32 to vector<2x1xf32>
    %58 = arith.mulf %57, %49 : vector<2x1xf32>
    %59 = arith.addf %56, %58 : vector<2x1xf32>
    %60 = vector.broadcast %59 : vector<2x1xf32> to vector<2x256xf32>
    %61 = arith.mulf %60, %52 : vector<2x256xf32>
    %62 = arith.addf %51, %61 : vector<2x256xf32>
    %c0_27 = arith.constant 0 : index
    %c93 = arith.constant 93 : index
    %63 = vector.load %arg9[%c0_27, %c93] : memref<2x512xf32, #tpu.memory_space<vmem>>, vector<2x256xf32>
    %c7 = arith.constant 7 : index
    %64 = memref.load %arg6[%c7] : memref<98xf32, #tpu.memory_space<smem>>
    %c56 = arith.constant 56 : index
    %65 = memref.load %arg6[%c56] : memref<98xf32, #tpu.memory_space<smem>>
    %66 = vector.broadcast %64 : f32 to vector<2x1xf32>
    %67 = arith.mulf %66, %47 : vector<2x1xf32>
    %68 = vector.broadcast %65 : f32 to vector<2x1xf32>
    %69 = arith.mulf %68, %49 : vector<2x1xf32>
    %70 = arith.addf %67, %69 : vector<2x1xf32>
    %71 = vector.broadcast %70 : vector<2x1xf32> to vector<2x256xf32>
    %72 = arith.mulf %71, %63 : vector<2x256xf32>
    %73 = arith.addf %62, %72 : vector<2x256xf32>
    %c0_28 = arith.constant 0 : index
    %c109 = arith.constant 109 : index
    %74 = vector.load %arg9[%c0_28, %c109] : memref<2x512xf32, #tpu.memory_space<vmem>>, vector<2x256xf32>
    %c14 = arith.constant 14 : index
    %75 = memref.load %arg6[%c14] : memref<98xf32, #tpu.memory_space<smem>>
    %c63 = arith.constant 63 : index
    %76 = memref.load %arg6[%c63] : memref<98xf32, #tpu.memory_space<smem>>
    %77 = vector.broadcast %75 : f32 to vector<2x1xf32>
    %78 = arith.mulf %77, %47 : vector<2x1xf32>
    %79 = vector.broadcast %76 : f32 to vector<2x1xf32>
    %80 = arith.mulf %79, %49 : vector<2x1xf32>
    %81 = arith.addf %78, %80 : vector<2x1xf32>
    %82 = vector.broadcast %81 : vector<2x1xf32> to vector<2x256xf32>
    %83 = arith.mulf %82, %74 : vector<2x256xf32>
    %84 = arith.addf %73, %83 : vector<2x256xf32>
    %c0_29 = arith.constant 0 : index
    %c125 = arith.constant 125 : index
    %85 = vector.load %arg9[%c0_29, %c125] : memref<2x512xf32, #tpu.memory_space<vmem>>, vector<2x256xf32>
    %c21 = arith.constant 21 : index
    %86 = memref.load %arg6[%c21] : memref<98xf32, #tpu.memory_space<smem>>
    %c70 = arith.constant 70 : index
    %87 = memref.load %arg6[%c70] : memref<98xf32, #tpu.memory_space<smem>>
    %88 = vector.broadcast %86 : f32 to vector<2x1xf32>
    %89 = arith.mulf %88, %47 : vector<2x1xf32>
    %90 = vector.broadcast %87 : f32 to vector<2x1xf32>
    %91 = arith.mulf %90, %49 : vector<2x1xf32>
    %92 = arith.addf %89, %91 : vector<2x1xf32>
    %93 = vector.broadcast %92 : vector<2x1xf32> to vector<2x256xf32>
    %94 = arith.mulf %93, %85 : vector<2x256xf32>
    %95 = arith.addf %84, %94 : vector<2x256xf32>
    %c0_30 = arith.constant 0 : index
    %c141 = arith.constant 141 : index
    %96 = vector.load %arg9[%c0_30, %c141] : memref<2x512xf32, #tpu.memory_space<vmem>>, vector<2x256xf32>
    %c28 = arith.constant 28 : index
    %97 = memref.load %arg6[%c28] : memref<98xf32, #tpu.memory_space<smem>>
    %c77_31 = arith.constant 77 : index
    %98 = memref.load %arg6[%c77_31] : memref<98xf32, #tpu.memory_space<smem>>
    %99 = vector.broadcast %97 : f32 to vector<2x1xf32>
    %100 = arith.mulf %99, %47 : vector<2x1xf32>
    %101 = vector.broadcast %98 : f32 to vector<2x1xf32>
    %102 = arith.mulf %101, %49 : vector<2x1xf32>
    %103 = arith.addf %100, %102 : vector<2x1xf32>
    %104 = vector.broadcast %103 : vector<2x1xf32> to vector<2x256xf32>
    %105 = arith.mulf %104, %96 : vector<2x256xf32>
    %106 = arith.addf %95, %105 : vector<2x256xf32>
    %c0_32 = arith.constant 0 : index
    %c157 = arith.constant 157 : index
    %107 = vector.load %arg9[%c0_32, %c157] : memref<2x512xf32, #tpu.memory_space<vmem>>, vector<2x256xf32>
    %c35 = arith.constant 35 : index
    %108 = memref.load %arg6[%c35] : memref<98xf32, #tpu.memory_space<smem>>
    %c84 = arith.constant 84 : index
    %109 = memref.load %arg6[%c84] : memref<98xf32, #tpu.memory_space<smem>>
    %110 = vector.broadcast %108 : f32 to vector<2x1xf32>
    %111 = arith.mulf %110, %47 : vector<2x1xf32>
    %112 = vector.broadcast %109 : f32 to vector<2x1xf32>
    %113 = arith.mulf %112, %49 : vector<2x1xf32>
    %114 = arith.addf %111, %113 : vector<2x1xf32>
    %115 = vector.broadcast %114 : vector<2x1xf32> to vector<2x256xf32>
    %116 = arith.mulf %115, %107 : vector<2x256xf32>
    %117 = arith.addf %106, %116 : vector<2x256xf32>
    %c0_33 = arith.constant 0 : index
    %c173 = arith.constant 173 : index
    %118 = vector.load %arg9[%c0_33, %c173] : memref<2x512xf32, #tpu.memory_space<vmem>>, vector<2x256xf32>
    %c42 = arith.constant 42 : index
    %119 = memref.load %arg6[%c42] : memref<98xf32, #tpu.memory_space<smem>>
    %c91 = arith.constant 91 : index
    %120 = memref.load %arg6[%c91] : memref<98xf32, #tpu.memory_space<smem>>
    %121 = vector.broadcast %119 : f32 to vector<2x1xf32>
    %122 = arith.mulf %121, %47 : vector<2x1xf32>
    %123 = vector.broadcast %120 : f32 to vector<2x1xf32>
    %124 = arith.mulf %123, %49 : vector<2x1xf32>
    %125 = arith.addf %122, %124 : vector<2x1xf32>
    %126 = vector.broadcast %125 : vector<2x1xf32> to vector<2x256xf32>
    %127 = arith.mulf %126, %118 : vector<2x256xf32>
    %128 = arith.addf %117, %127 : vector<2x256xf32>
    %c0_34 = arith.constant 0 : index
    %c0_35 = arith.constant 0 : index
    %129 = vector.load %arg4[%c0_34, %c0_35] : memref<7x256xf32, #tpu.memory_space<vmem>>, vector<1x256xf32>
    %130 = vector.broadcast %129 : vector<1x256xf32> to vector<2x256xf32>
    %131 = arith.mulf %130, %128 : vector<2x256xf32>
    %132 = arith.addf %50, %131 : vector<2x256xf32>
    %cst_36 = arith.constant 0.000000e+00 : f32
    %133 = vector.broadcast %cst_36 : f32 to vector<2x256xf32>
    %c0_37 = arith.constant 0 : index
    %c78 = arith.constant 78 : index
    %134 = vector.load %arg9[%c0_37, %c78] : memref<2x512xf32, #tpu.memory_space<vmem>>, vector<2x256xf32>
    %c1_38 = arith.constant 1 : index
    %135 = memref.load %arg6[%c1_38] : memref<98xf32, #tpu.memory_space<smem>>
    %c50 = arith.constant 50 : index
    %136 = memref.load %arg6[%c50] : memref<98xf32, #tpu.memory_space<smem>>
    %137 = vector.broadcast %135 : f32 to vector<2x1xf32>
    %138 = arith.mulf %137, %47 : vector<2x1xf32>
    %139 = vector.broadcast %136 : f32 to vector<2x1xf32>
    %140 = arith.mulf %139, %49 : vector<2x1xf32>
    %141 = arith.addf %138, %140 : vector<2x1xf32>
    %142 = vector.broadcast %141 : vector<2x1xf32> to vector<2x256xf32>
    %143 = arith.mulf %142, %134 : vector<2x256xf32>
    %144 = arith.addf %133, %143 : vector<2x256xf32>
    %c0_39 = arith.constant 0 : index
    %c94 = arith.constant 94 : index
    %145 = vector.load %arg9[%c0_39, %c94] : memref<2x512xf32, #tpu.memory_space<vmem>>, vector<2x256xf32>
    %c8 = arith.constant 8 : index
    %146 = memref.load %arg6[%c8] : memref<98xf32, #tpu.memory_space<smem>>
    %c57 = arith.constant 57 : index
    %147 = memref.load %arg6[%c57] : memref<98xf32, #tpu.memory_space<smem>>
    %148 = vector.broadcast %146 : f32 to vector<2x1xf32>
    %149 = arith.mulf %148, %47 : vector<2x1xf32>
    %150 = vector.broadcast %147 : f32 to vector<2x1xf32>
    %151 = arith.mulf %150, %49 : vector<2x1xf32>
    %152 = arith.addf %149, %151 : vector<2x1xf32>
    %153 = vector.broadcast %152 : vector<2x1xf32> to vector<2x256xf32>
    %154 = arith.mulf %153, %145 : vector<2x256xf32>
    %155 = arith.addf %144, %154 : vector<2x256xf32>
    %c0_40 = arith.constant 0 : index
    %c110 = arith.constant 110 : index
    %156 = vector.load %arg9[%c0_40, %c110] : memref<2x512xf32, #tpu.memory_space<vmem>>, vector<2x256xf32>
    %c15 = arith.constant 15 : index
    %157 = memref.load %arg6[%c15] : memref<98xf32, #tpu.memory_space<smem>>
    %c64 = arith.constant 64 : index
    %158 = memref.load %arg6[%c64] : memref<98xf32, #tpu.memory_space<smem>>
    %159 = vector.broadcast %157 : f32 to vector<2x1xf32>
    %160 = arith.mulf %159, %47 : vector<2x1xf32>
    %161 = vector.broadcast %158 : f32 to vector<2x1xf32>
    %162 = arith.mulf %161, %49 : vector<2x1xf32>
    %163 = arith.addf %160, %162 : vector<2x1xf32>
    %164 = vector.broadcast %163 : vector<2x1xf32> to vector<2x256xf32>
    %165 = arith.mulf %164, %156 : vector<2x256xf32>
    %166 = arith.addf %155, %165 : vector<2x256xf32>
    %c0_41 = arith.constant 0 : index
    %c126 = arith.constant 126 : index
    %167 = vector.load %arg9[%c0_41, %c126] : memref<2x512xf32, #tpu.memory_space<vmem>>, vector<2x256xf32>
    %c22 = arith.constant 22 : index
    %168 = memref.load %arg6[%c22] : memref<98xf32, #tpu.memory_space<smem>>
    %c71 = arith.constant 71 : index
    %169 = memref.load %arg6[%c71] : memref<98xf32, #tpu.memory_space<smem>>
    %170 = vector.broadcast %168 : f32 to vector<2x1xf32>
    %171 = arith.mulf %170, %47 : vector<2x1xf32>
    %172 = vector.broadcast %169 : f32 to vector<2x1xf32>
    %173 = arith.mulf %172, %49 : vector<2x1xf32>
    %174 = arith.addf %171, %173 : vector<2x1xf32>
    %175 = vector.broadcast %174 : vector<2x1xf32> to vector<2x256xf32>
    %176 = arith.mulf %175, %167 : vector<2x256xf32>
    %177 = arith.addf %166, %176 : vector<2x256xf32>
    %c0_42 = arith.constant 0 : index
    %c142 = arith.constant 142 : index
    %178 = vector.load %arg9[%c0_42, %c142] : memref<2x512xf32, #tpu.memory_space<vmem>>, vector<2x256xf32>
    %c29 = arith.constant 29 : index
    %179 = memref.load %arg6[%c29] : memref<98xf32, #tpu.memory_space<smem>>
    %c78_43 = arith.constant 78 : index
    %180 = memref.load %arg6[%c78_43] : memref<98xf32, #tpu.memory_space<smem>>
    %181 = vector.broadcast %179 : f32 to vector<2x1xf32>
    %182 = arith.mulf %181, %47 : vector<2x1xf32>
    %183 = vector.broadcast %180 : f32 to vector<2x1xf32>
    %184 = arith.mulf %183, %49 : vector<2x1xf32>
    %185 = arith.addf %182, %184 : vector<2x1xf32>
    %186 = vector.broadcast %185 : vector<2x1xf32> to vector<2x256xf32>
    %187 = arith.mulf %186, %178 : vector<2x256xf32>
    %188 = arith.addf %177, %187 : vector<2x256xf32>
    %c0_44 = arith.constant 0 : index
    %c158 = arith.constant 158 : index
    %189 = vector.load %arg9[%c0_44, %c158] : memref<2x512xf32, #tpu.memory_space<vmem>>, vector<2x256xf32>
    %c36 = arith.constant 36 : index
    %190 = memref.load %arg6[%c36] : memref<98xf32, #tpu.memory_space<smem>>
    %c85 = arith.constant 85 : index
    %191 = memref.load %arg6[%c85] : memref<98xf32, #tpu.memory_space<smem>>
    %192 = vector.broadcast %190 : f32 to vector<2x1xf32>
    %193 = arith.mulf %192, %47 : vector<2x1xf32>
    %194 = vector.broadcast %191 : f32 to vector<2x1xf32>
    %195 = arith.mulf %194, %49 : vector<2x1xf32>
    %196 = arith.addf %193, %195 : vector<2x1xf32>
    %197 = vector.broadcast %196 : vector<2x1xf32> to vector<2x256xf32>
    %198 = arith.mulf %197, %189 : vector<2x256xf32>
    %199 = arith.addf %188, %198 : vector<2x256xf32>
    %c0_45 = arith.constant 0 : index
    %c174 = arith.constant 174 : index
    %200 = vector.load %arg9[%c0_45, %c174] : memref<2x512xf32, #tpu.memory_space<vmem>>, vector<2x256xf32>
    %c43 = arith.constant 43 : index
    %201 = memref.load %arg6[%c43] : memref<98xf32, #tpu.memory_space<smem>>
    %c92 = arith.constant 92 : index
    %202 = memref.load %arg6[%c92] : memref<98xf32, #tpu.memory_space<smem>>
    %203 = vector.broadcast %201 : f32 to vector<2x1xf32>
    %204 = arith.mulf %203, %47 : vector<2x1xf32>
    %205 = vector.broadcast %202 : f32 to vector<2x1xf32>
    %206 = arith.mulf %205, %49 : vector<2x1xf32>
    %207 = arith.addf %204, %206 : vector<2x1xf32>
    %208 = vector.broadcast %207 : vector<2x1xf32> to vector<2x256xf32>
    %209 = arith.mulf %208, %200 : vector<2x256xf32>
    %210 = arith.addf %199, %209 : vector<2x256xf32>
    %c1_46 = arith.constant 1 : index
    %c0_47 = arith.constant 0 : index
    %211 = vector.load %arg4[%c1_46, %c0_47] : memref<7x256xf32, #tpu.memory_space<vmem>>, vector<1x256xf32>
    %212 = vector.broadcast %211 : vector<1x256xf32> to vector<2x256xf32>
    %213 = arith.mulf %212, %210 : vector<2x256xf32>
    %214 = arith.addf %132, %213 : vector<2x256xf32>
    %cst_48 = arith.constant 0.000000e+00 : f32
    %215 = vector.broadcast %cst_48 : f32 to vector<2x256xf32>
    %c0_49 = arith.constant 0 : index
    %c79 = arith.constant 79 : index
    %216 = vector.load %arg9[%c0_49, %c79] : memref<2x512xf32, #tpu.memory_space<vmem>>, vector<2x256xf32>
    %c2 = arith.constant 2 : index
    %217 = memref.load %arg6[%c2] : memref<98xf32, #tpu.memory_space<smem>>
    %c51 = arith.constant 51 : index
    %218 = memref.load %arg6[%c51] : memref<98xf32, #tpu.memory_space<smem>>
    %219 = vector.broadcast %217 : f32 to vector<2x1xf32>
    %220 = arith.mulf %219, %47 : vector<2x1xf32>
    %221 = vector.broadcast %218 : f32 to vector<2x1xf32>
    %222 = arith.mulf %221, %49 : vector<2x1xf32>
    %223 = arith.addf %220, %222 : vector<2x1xf32>
    %224 = vector.broadcast %223 : vector<2x1xf32> to vector<2x256xf32>
    %225 = arith.mulf %224, %216 : vector<2x256xf32>
    %226 = arith.addf %215, %225 : vector<2x256xf32>
    %c0_50 = arith.constant 0 : index
    %c95 = arith.constant 95 : index
    %227 = vector.load %arg9[%c0_50, %c95] : memref<2x512xf32, #tpu.memory_space<vmem>>, vector<2x256xf32>
    %c9 = arith.constant 9 : index
    %228 = memref.load %arg6[%c9] : memref<98xf32, #tpu.memory_space<smem>>
    %c58 = arith.constant 58 : index
    %229 = memref.load %arg6[%c58] : memref<98xf32, #tpu.memory_space<smem>>
    %230 = vector.broadcast %228 : f32 to vector<2x1xf32>
    %231 = arith.mulf %230, %47 : vector<2x1xf32>
    %232 = vector.broadcast %229 : f32 to vector<2x1xf32>
    %233 = arith.mulf %232, %49 : vector<2x1xf32>
    %234 = arith.addf %231, %233 : vector<2x1xf32>
    %235 = vector.broadcast %234 : vector<2x1xf32> to vector<2x256xf32>
    %236 = arith.mulf %235, %227 : vector<2x256xf32>
    %237 = arith.addf %226, %236 : vector<2x256xf32>
    %c0_51 = arith.constant 0 : index
    %c111 = arith.constant 111 : index
    %238 = vector.load %arg9[%c0_51, %c111] : memref<2x512xf32, #tpu.memory_space<vmem>>, vector<2x256xf32>
    %c16 = arith.constant 16 : index
    %239 = memref.load %arg6[%c16] : memref<98xf32, #tpu.memory_space<smem>>
    %c65 = arith.constant 65 : index
    %240 = memref.load %arg6[%c65] : memref<98xf32, #tpu.memory_space<smem>>
    %241 = vector.broadcast %239 : f32 to vector<2x1xf32>
    %242 = arith.mulf %241, %47 : vector<2x1xf32>
    %243 = vector.broadcast %240 : f32 to vector<2x1xf32>
    %244 = arith.mulf %243, %49 : vector<2x1xf32>
    %245 = arith.addf %242, %244 : vector<2x1xf32>
    %246 = vector.broadcast %245 : vector<2x1xf32> to vector<2x256xf32>
    %247 = arith.mulf %246, %238 : vector<2x256xf32>
    %248 = arith.addf %237, %247 : vector<2x256xf32>
    %c0_52 = arith.constant 0 : index
    %c127 = arith.constant 127 : index
    %249 = vector.load %arg9[%c0_52, %c127] : memref<2x512xf32, #tpu.memory_space<vmem>>, vector<2x256xf32>
    %c23 = arith.constant 23 : index
    %250 = memref.load %arg6[%c23] : memref<98xf32, #tpu.memory_space<smem>>
    %c72 = arith.constant 72 : index
    %251 = memref.load %arg6[%c72] : memref<98xf32, #tpu.memory_space<smem>>
    %252 = vector.broadcast %250 : f32 to vector<2x1xf32>
    %253 = arith.mulf %252, %47 : vector<2x1xf32>
    %254 = vector.broadcast %251 : f32 to vector<2x1xf32>
    %255 = arith.mulf %254, %49 : vector<2x1xf32>
    %256 = arith.addf %253, %255 : vector<2x1xf32>
    %257 = vector.broadcast %256 : vector<2x1xf32> to vector<2x256xf32>
    %258 = arith.mulf %257, %249 : vector<2x256xf32>
    %259 = arith.addf %248, %258 : vector<2x256xf32>
    %c0_53 = arith.constant 0 : index
    %c143 = arith.constant 143 : index
    %260 = vector.load %arg9[%c0_53, %c143] : memref<2x512xf32, #tpu.memory_space<vmem>>, vector<2x256xf32>
    %c30 = arith.constant 30 : index
    %261 = memref.load %arg6[%c30] : memref<98xf32, #tpu.memory_space<smem>>
    %c79_54 = arith.constant 79 : index
    %262 = memref.load %arg6[%c79_54] : memref<98xf32, #tpu.memory_space<smem>>
    %263 = vector.broadcast %261 : f32 to vector<2x1xf32>
    %264 = arith.mulf %263, %47 : vector<2x1xf32>
    %265 = vector.broadcast %262 : f32 to vector<2x1xf32>
    %266 = arith.mulf %265, %49 : vector<2x1xf32>
    %267 = arith.addf %264, %266 : vector<2x1xf32>
    %268 = vector.broadcast %267 : vector<2x1xf32> to vector<2x256xf32>
    %269 = arith.mulf %268, %260 : vector<2x256xf32>
    %270 = arith.addf %259, %269 : vector<2x256xf32>
    %c0_55 = arith.constant 0 : index
    %c159 = arith.constant 159 : index
    %271 = vector.load %arg9[%c0_55, %c159] : memref<2x512xf32, #tpu.memory_space<vmem>>, vector<2x256xf32>
    %c37 = arith.constant 37 : index
    %272 = memref.load %arg6[%c37] : memref<98xf32, #tpu.memory_space<smem>>
    %c86 = arith.constant 86 : index
    %273 = memref.load %arg6[%c86] : memref<98xf32, #tpu.memory_space<smem>>
    %274 = vector.broadcast %272 : f32 to vector<2x1xf32>
    %275 = arith.mulf %274, %47 : vector<2x1xf32>
    %276 = vector.broadcast %273 : f32 to vector<2x1xf32>
    %277 = arith.mulf %276, %49 : vector<2x1xf32>
    %278 = arith.addf %275, %277 : vector<2x1xf32>
    %279 = vector.broadcast %278 : vector<2x1xf32> to vector<2x256xf32>
    %280 = arith.mulf %279, %271 : vector<2x256xf32>
    %281 = arith.addf %270, %280 : vector<2x256xf32>
    %c0_56 = arith.constant 0 : index
    %c175 = arith.constant 175 : index
    %282 = vector.load %arg9[%c0_56, %c175] : memref<2x512xf32, #tpu.memory_space<vmem>>, vector<2x256xf32>
    %c44 = arith.constant 44 : index
    %283 = memref.load %arg6[%c44] : memref<98xf32, #tpu.memory_space<smem>>
    %c93_57 = arith.constant 93 : index
    %284 = memref.load %arg6[%c93_57] : memref<98xf32, #tpu.memory_space<smem>>
    %285 = vector.broadcast %283 : f32 to vector<2x1xf32>
    %286 = arith.mulf %285, %47 : vector<2x1xf32>
    %287 = vector.broadcast %284 : f32 to vector<2x1xf32>
    %288 = arith.mulf %287, %49 : vector<2x1xf32>
    %289 = arith.addf %286, %288 : vector<2x1xf32>
    %290 = vector.broadcast %289 : vector<2x1xf32> to vector<2x256xf32>
    %291 = arith.mulf %290, %282 : vector<2x256xf32>
    %292 = arith.addf %281, %291 : vector<2x256xf32>
    %c2_58 = arith.constant 2 : index
    %c0_59 = arith.constant 0 : index
    %293 = vector.load %arg4[%c2_58, %c0_59] : memref<7x256xf32, #tpu.memory_space<vmem>>, vector<1x256xf32>
    %294 = vector.broadcast %293 : vector<1x256xf32> to vector<2x256xf32>
    %295 = arith.mulf %294, %292 : vector<2x256xf32>
    %296 = arith.addf %214, %295 : vector<2x256xf32>
    %cst_60 = arith.constant 0.000000e+00 : f32
    %297 = vector.broadcast %cst_60 : f32 to vector<2x256xf32>
    %c0_61 = arith.constant 0 : index
    %c80 = arith.constant 80 : index
    %298 = vector.load %arg9[%c0_61, %c80] : memref<2x512xf32, #tpu.memory_space<vmem>>, vector<2x256xf32>
    %c3 = arith.constant 3 : index
    %299 = memref.load %arg6[%c3] : memref<98xf32, #tpu.memory_space<smem>>
    %c52 = arith.constant 52 : index
    %300 = memref.load %arg6[%c52] : memref<98xf32, #tpu.memory_space<smem>>
    %301 = vector.broadcast %299 : f32 to vector<2x1xf32>
    %302 = arith.mulf %301, %47 : vector<2x1xf32>
    %303 = vector.broadcast %300 : f32 to vector<2x1xf32>
    %304 = arith.mulf %303, %49 : vector<2x1xf32>
    %305 = arith.addf %302, %304 : vector<2x1xf32>
    %306 = vector.broadcast %305 : vector<2x1xf32> to vector<2x256xf32>
    %307 = arith.mulf %306, %298 : vector<2x256xf32>
    %308 = arith.addf %297, %307 : vector<2x256xf32>
    %c0_62 = arith.constant 0 : index
    %c96 = arith.constant 96 : index
    %309 = vector.load %arg9[%c0_62, %c96] : memref<2x512xf32, #tpu.memory_space<vmem>>, vector<2x256xf32>
    %c10 = arith.constant 10 : index
    %310 = memref.load %arg6[%c10] : memref<98xf32, #tpu.memory_space<smem>>
    %c59 = arith.constant 59 : index
    %311 = memref.load %arg6[%c59] : memref<98xf32, #tpu.memory_space<smem>>
    %312 = vector.broadcast %310 : f32 to vector<2x1xf32>
    %313 = arith.mulf %312, %47 : vector<2x1xf32>
    %314 = vector.broadcast %311 : f32 to vector<2x1xf32>
    %315 = arith.mulf %314, %49 : vector<2x1xf32>
    %316 = arith.addf %313, %315 : vector<2x1xf32>
    %317 = vector.broadcast %316 : vector<2x1xf32> to vector<2x256xf32>
    %318 = arith.mulf %317, %309 : vector<2x256xf32>
    %319 = arith.addf %308, %318 : vector<2x256xf32>
    %c0_63 = arith.constant 0 : index
    %c112 = arith.constant 112 : index
    %320 = vector.load %arg9[%c0_63, %c112] : memref<2x512xf32, #tpu.memory_space<vmem>>, vector<2x256xf32>
    %c17 = arith.constant 17 : index
    %321 = memref.load %arg6[%c17] : memref<98xf32, #tpu.memory_space<smem>>
    %c66 = arith.constant 66 : index
    %322 = memref.load %arg6[%c66] : memref<98xf32, #tpu.memory_space<smem>>
    %323 = vector.broadcast %321 : f32 to vector<2x1xf32>
    %324 = arith.mulf %323, %47 : vector<2x1xf32>
    %325 = vector.broadcast %322 : f32 to vector<2x1xf32>
    %326 = arith.mulf %325, %49 : vector<2x1xf32>
    %327 = arith.addf %324, %326 : vector<2x1xf32>
    %328 = vector.broadcast %327 : vector<2x1xf32> to vector<2x256xf32>
    %329 = arith.mulf %328, %320 : vector<2x256xf32>
    %330 = arith.addf %319, %329 : vector<2x256xf32>
    %c0_64 = arith.constant 0 : index
    %c128_65 = arith.constant 128 : index
    %331 = vector.load %arg9[%c0_64, %c128_65] : memref<2x512xf32, #tpu.memory_space<vmem>>, vector<2x256xf32>
    %c24 = arith.constant 24 : index
    %332 = memref.load %arg6[%c24] : memref<98xf32, #tpu.memory_space<smem>>
    %c73 = arith.constant 73 : index
    %333 = memref.load %arg6[%c73] : memref<98xf32, #tpu.memory_space<smem>>
    %334 = vector.broadcast %332 : f32 to vector<2x1xf32>
    %335 = arith.mulf %334, %47 : vector<2x1xf32>
    %336 = vector.broadcast %333 : f32 to vector<2x1xf32>
    %337 = arith.mulf %336, %49 : vector<2x1xf32>
    %338 = arith.addf %335, %337 : vector<2x1xf32>
    %339 = vector.broadcast %338 : vector<2x1xf32> to vector<2x256xf32>
    %340 = arith.mulf %339, %331 : vector<2x256xf32>
    %341 = arith.addf %330, %340 : vector<2x256xf32>
    %c0_66 = arith.constant 0 : index
    %c144 = arith.constant 144 : index
    %342 = vector.load %arg9[%c0_66, %c144] : memref<2x512xf32, #tpu.memory_space<vmem>>, vector<2x256xf32>
    %c31 = arith.constant 31 : index
    %343 = memref.load %arg6[%c31] : memref<98xf32, #tpu.memory_space<smem>>
    %c80_67 = arith.constant 80 : index
    %344 = memref.load %arg6[%c80_67] : memref<98xf32, #tpu.memory_space<smem>>
    %345 = vector.broadcast %343 : f32 to vector<2x1xf32>
    %346 = arith.mulf %345, %47 : vector<2x1xf32>
    %347 = vector.broadcast %344 : f32 to vector<2x1xf32>
    %348 = arith.mulf %347, %49 : vector<2x1xf32>
    %349 = arith.addf %346, %348 : vector<2x1xf32>
    %350 = vector.broadcast %349 : vector<2x1xf32> to vector<2x256xf32>
    %351 = arith.mulf %350, %342 : vector<2x256xf32>
    %352 = arith.addf %341, %351 : vector<2x256xf32>
    %c0_68 = arith.constant 0 : index
    %c160 = arith.constant 160 : index
    %353 = vector.load %arg9[%c0_68, %c160] : memref<2x512xf32, #tpu.memory_space<vmem>>, vector<2x256xf32>
    %c38 = arith.constant 38 : index
    %354 = memref.load %arg6[%c38] : memref<98xf32, #tpu.memory_space<smem>>
    %c87 = arith.constant 87 : index
    %355 = memref.load %arg6[%c87] : memref<98xf32, #tpu.memory_space<smem>>
    %356 = vector.broadcast %354 : f32 to vector<2x1xf32>
    %357 = arith.mulf %356, %47 : vector<2x1xf32>
    %358 = vector.broadcast %355 : f32 to vector<2x1xf32>
    %359 = arith.mulf %358, %49 : vector<2x1xf32>
    %360 = arith.addf %357, %359 : vector<2x1xf32>
    %361 = vector.broadcast %360 : vector<2x1xf32> to vector<2x256xf32>
    %362 = arith.mulf %361, %353 : vector<2x256xf32>
    %363 = arith.addf %352, %362 : vector<2x256xf32>
    %c0_69 = arith.constant 0 : index
    %c176 = arith.constant 176 : index
    %364 = vector.load %arg9[%c0_69, %c176] : memref<2x512xf32, #tpu.memory_space<vmem>>, vector<2x256xf32>
    %c45 = arith.constant 45 : index
    %365 = memref.load %arg6[%c45] : memref<98xf32, #tpu.memory_space<smem>>
    %c94_70 = arith.constant 94 : index
    %366 = memref.load %arg6[%c94_70] : memref<98xf32, #tpu.memory_space<smem>>
    %367 = vector.broadcast %365 : f32 to vector<2x1xf32>
    %368 = arith.mulf %367, %47 : vector<2x1xf32>
    %369 = vector.broadcast %366 : f32 to vector<2x1xf32>
    %370 = arith.mulf %369, %49 : vector<2x1xf32>
    %371 = arith.addf %368, %370 : vector<2x1xf32>
    %372 = vector.broadcast %371 : vector<2x1xf32> to vector<2x256xf32>
    %373 = arith.mulf %372, %364 : vector<2x256xf32>
    %374 = arith.addf %363, %373 : vector<2x256xf32>
    %c3_71 = arith.constant 3 : index
    %c0_72 = arith.constant 0 : index
    %375 = vector.load %arg4[%c3_71, %c0_72] : memref<7x256xf32, #tpu.memory_space<vmem>>, vector<1x256xf32>
    %376 = vector.broadcast %375 : vector<1x256xf32> to vector<2x256xf32>
    %377 = arith.mulf %376, %374 : vector<2x256xf32>
    %378 = arith.addf %296, %377 : vector<2x256xf32>
    %cst_73 = arith.constant 0.000000e+00 : f32
    %379 = vector.broadcast %cst_73 : f32 to vector<2x256xf32>
    %c0_74 = arith.constant 0 : index
    %c81 = arith.constant 81 : index
    %380 = vector.load %arg9[%c0_74, %c81] : memref<2x512xf32, #tpu.memory_space<vmem>>, vector<2x256xf32>
    %c4 = arith.constant 4 : index
    %381 = memref.load %arg6[%c4] : memref<98xf32, #tpu.memory_space<smem>>
    %c53 = arith.constant 53 : index
    %382 = memref.load %arg6[%c53] : memref<98xf32, #tpu.memory_space<smem>>
    %383 = vector.broadcast %381 : f32 to vector<2x1xf32>
    %384 = arith.mulf %383, %47 : vector<2x1xf32>
    %385 = vector.broadcast %382 : f32 to vector<2x1xf32>
    %386 = arith.mulf %385, %49 : vector<2x1xf32>
    %387 = arith.addf %384, %386 : vector<2x1xf32>
    %388 = vector.broadcast %387 : vector<2x1xf32> to vector<2x256xf32>
    %389 = arith.mulf %388, %380 : vector<2x256xf32>
    %390 = arith.addf %379, %389 : vector<2x256xf32>
    %c0_75 = arith.constant 0 : index
    %c97 = arith.constant 97 : index
    %391 = vector.load %arg9[%c0_75, %c97] : memref<2x512xf32, #tpu.memory_space<vmem>>, vector<2x256xf32>
    %c11 = arith.constant 11 : index
    %392 = memref.load %arg6[%c11] : memref<98xf32, #tpu.memory_space<smem>>
    %c60 = arith.constant 60 : index
    %393 = memref.load %arg6[%c60] : memref<98xf32, #tpu.memory_space<smem>>
    %394 = vector.broadcast %392 : f32 to vector<2x1xf32>
    %395 = arith.mulf %394, %47 : vector<2x1xf32>
    %396 = vector.broadcast %393 : f32 to vector<2x1xf32>
    %397 = arith.mulf %396, %49 : vector<2x1xf32>
    %398 = arith.addf %395, %397 : vector<2x1xf32>
    %399 = vector.broadcast %398 : vector<2x1xf32> to vector<2x256xf32>
    %400 = arith.mulf %399, %391 : vector<2x256xf32>
    %401 = arith.addf %390, %400 : vector<2x256xf32>
    %c0_76 = arith.constant 0 : index
    %c113 = arith.constant 113 : index
    %402 = vector.load %arg9[%c0_76, %c113] : memref<2x512xf32, #tpu.memory_space<vmem>>, vector<2x256xf32>
    %c18 = arith.constant 18 : index
    %403 = memref.load %arg6[%c18] : memref<98xf32, #tpu.memory_space<smem>>
    %c67 = arith.constant 67 : index
    %404 = memref.load %arg6[%c67] : memref<98xf32, #tpu.memory_space<smem>>
    %405 = vector.broadcast %403 : f32 to vector<2x1xf32>
    %406 = arith.mulf %405, %47 : vector<2x1xf32>
    %407 = vector.broadcast %404 : f32 to vector<2x1xf32>
    %408 = arith.mulf %407, %49 : vector<2x1xf32>
    %409 = arith.addf %406, %408 : vector<2x1xf32>
    %410 = vector.broadcast %409 : vector<2x1xf32> to vector<2x256xf32>
    %411 = arith.mulf %410, %402 : vector<2x256xf32>
    %412 = arith.addf %401, %411 : vector<2x256xf32>
    %c0_77 = arith.constant 0 : index
    %c129 = arith.constant 129 : index
    %413 = vector.load %arg9[%c0_77, %c129] : memref<2x512xf32, #tpu.memory_space<vmem>>, vector<2x256xf32>
    %c25 = arith.constant 25 : index
    %414 = memref.load %arg6[%c25] : memref<98xf32, #tpu.memory_space<smem>>
    %c74 = arith.constant 74 : index
    %415 = memref.load %arg6[%c74] : memref<98xf32, #tpu.memory_space<smem>>
    %416 = vector.broadcast %414 : f32 to vector<2x1xf32>
    %417 = arith.mulf %416, %47 : vector<2x1xf32>
    %418 = vector.broadcast %415 : f32 to vector<2x1xf32>
    %419 = arith.mulf %418, %49 : vector<2x1xf32>
    %420 = arith.addf %417, %419 : vector<2x1xf32>
    %421 = vector.broadcast %420 : vector<2x1xf32> to vector<2x256xf32>
    %422 = arith.mulf %421, %413 : vector<2x256xf32>
    %423 = arith.addf %412, %422 : vector<2x256xf32>
    %c0_78 = arith.constant 0 : index
    %c145 = arith.constant 145 : index
    %424 = vector.load %arg9[%c0_78, %c145] : memref<2x512xf32, #tpu.memory_space<vmem>>, vector<2x256xf32>
    %c32 = arith.constant 32 : index
    %425 = memref.load %arg6[%c32] : memref<98xf32, #tpu.memory_space<smem>>
    %c81_79 = arith.constant 81 : index
    %426 = memref.load %arg6[%c81_79] : memref<98xf32, #tpu.memory_space<smem>>
    %427 = vector.broadcast %425 : f32 to vector<2x1xf32>
    %428 = arith.mulf %427, %47 : vector<2x1xf32>
    %429 = vector.broadcast %426 : f32 to vector<2x1xf32>
    %430 = arith.mulf %429, %49 : vector<2x1xf32>
    %431 = arith.addf %428, %430 : vector<2x1xf32>
    %432 = vector.broadcast %431 : vector<2x1xf32> to vector<2x256xf32>
    %433 = arith.mulf %432, %424 : vector<2x256xf32>
    %434 = arith.addf %423, %433 : vector<2x256xf32>
    %c0_80 = arith.constant 0 : index
    %c161 = arith.constant 161 : index
    %435 = vector.load %arg9[%c0_80, %c161] : memref<2x512xf32, #tpu.memory_space<vmem>>, vector<2x256xf32>
    %c39 = arith.constant 39 : index
    %436 = memref.load %arg6[%c39] : memref<98xf32, #tpu.memory_space<smem>>
    %c88 = arith.constant 88 : index
    %437 = memref.load %arg6[%c88] : memref<98xf32, #tpu.memory_space<smem>>
    %438 = vector.broadcast %436 : f32 to vector<2x1xf32>
    %439 = arith.mulf %438, %47 : vector<2x1xf32>
    %440 = vector.broadcast %437 : f32 to vector<2x1xf32>
    %441 = arith.mulf %440, %49 : vector<2x1xf32>
    %442 = arith.addf %439, %441 : vector<2x1xf32>
    %443 = vector.broadcast %442 : vector<2x1xf32> to vector<2x256xf32>
    %444 = arith.mulf %443, %435 : vector<2x256xf32>
    %445 = arith.addf %434, %444 : vector<2x256xf32>
    %c0_81 = arith.constant 0 : index
    %c177 = arith.constant 177 : index
    %446 = vector.load %arg9[%c0_81, %c177] : memref<2x512xf32, #tpu.memory_space<vmem>>, vector<2x256xf32>
    %c46 = arith.constant 46 : index
    %447 = memref.load %arg6[%c46] : memref<98xf32, #tpu.memory_space<smem>>
    %c95_82 = arith.constant 95 : index
    %448 = memref.load %arg6[%c95_82] : memref<98xf32, #tpu.memory_space<smem>>
    %449 = vector.broadcast %447 : f32 to vector<2x1xf32>
    %450 = arith.mulf %449, %47 : vector<2x1xf32>
    %451 = vector.broadcast %448 : f32 to vector<2x1xf32>
    %452 = arith.mulf %451, %49 : vector<2x1xf32>
    %453 = arith.addf %450, %452 : vector<2x1xf32>
    %454 = vector.broadcast %453 : vector<2x1xf32> to vector<2x256xf32>
    %455 = arith.mulf %454, %446 : vector<2x256xf32>
    %456 = arith.addf %445, %455 : vector<2x256xf32>
    %c4_83 = arith.constant 4 : index
    %c0_84 = arith.constant 0 : index
    %457 = vector.load %arg4[%c4_83, %c0_84] : memref<7x256xf32, #tpu.memory_space<vmem>>, vector<1x256xf32>
    %458 = vector.broadcast %457 : vector<1x256xf32> to vector<2x256xf32>
    %459 = arith.mulf %458, %456 : vector<2x256xf32>
    %460 = arith.addf %378, %459 : vector<2x256xf32>
    %cst_85 = arith.constant 0.000000e+00 : f32
    %461 = vector.broadcast %cst_85 : f32 to vector<2x256xf32>
    %c0_86 = arith.constant 0 : index
    %c82 = arith.constant 82 : index
    %462 = vector.load %arg9[%c0_86, %c82] : memref<2x512xf32, #tpu.memory_space<vmem>>, vector<2x256xf32>
    %c5 = arith.constant 5 : index
    %463 = memref.load %arg6[%c5] : memref<98xf32, #tpu.memory_space<smem>>
    %c54 = arith.constant 54 : index
    %464 = memref.load %arg6[%c54] : memref<98xf32, #tpu.memory_space<smem>>
    %465 = vector.broadcast %463 : f32 to vector<2x1xf32>
    %466 = arith.mulf %465, %47 : vector<2x1xf32>
    %467 = vector.broadcast %464 : f32 to vector<2x1xf32>
    %468 = arith.mulf %467, %49 : vector<2x1xf32>
    %469 = arith.addf %466, %468 : vector<2x1xf32>
    %470 = vector.broadcast %469 : vector<2x1xf32> to vector<2x256xf32>
    %471 = arith.mulf %470, %462 : vector<2x256xf32>
    %472 = arith.addf %461, %471 : vector<2x256xf32>
    %c0_87 = arith.constant 0 : index
    %c98 = arith.constant 98 : index
    %473 = vector.load %arg9[%c0_87, %c98] : memref<2x512xf32, #tpu.memory_space<vmem>>, vector<2x256xf32>
    %c12 = arith.constant 12 : index
    %474 = memref.load %arg6[%c12] : memref<98xf32, #tpu.memory_space<smem>>
    %c61 = arith.constant 61 : index
    %475 = memref.load %arg6[%c61] : memref<98xf32, #tpu.memory_space<smem>>
    %476 = vector.broadcast %474 : f32 to vector<2x1xf32>
    %477 = arith.mulf %476, %47 : vector<2x1xf32>
    %478 = vector.broadcast %475 : f32 to vector<2x1xf32>
    %479 = arith.mulf %478, %49 : vector<2x1xf32>
    %480 = arith.addf %477, %479 : vector<2x1xf32>
    %481 = vector.broadcast %480 : vector<2x1xf32> to vector<2x256xf32>
    %482 = arith.mulf %481, %473 : vector<2x256xf32>
    %483 = arith.addf %472, %482 : vector<2x256xf32>
    %c0_88 = arith.constant 0 : index
    %c114 = arith.constant 114 : index
    %484 = vector.load %arg9[%c0_88, %c114] : memref<2x512xf32, #tpu.memory_space<vmem>>, vector<2x256xf32>
    %c19 = arith.constant 19 : index
    %485 = memref.load %arg6[%c19] : memref<98xf32, #tpu.memory_space<smem>>
    %c68 = arith.constant 68 : index
    %486 = memref.load %arg6[%c68] : memref<98xf32, #tpu.memory_space<smem>>
    %487 = vector.broadcast %485 : f32 to vector<2x1xf32>
    %488 = arith.mulf %487, %47 : vector<2x1xf32>
    %489 = vector.broadcast %486 : f32 to vector<2x1xf32>
    %490 = arith.mulf %489, %49 : vector<2x1xf32>
    %491 = arith.addf %488, %490 : vector<2x1xf32>
    %492 = vector.broadcast %491 : vector<2x1xf32> to vector<2x256xf32>
    %493 = arith.mulf %492, %484 : vector<2x256xf32>
    %494 = arith.addf %483, %493 : vector<2x256xf32>
    %c0_89 = arith.constant 0 : index
    %c130 = arith.constant 130 : index
    %495 = vector.load %arg9[%c0_89, %c130] : memref<2x512xf32, #tpu.memory_space<vmem>>, vector<2x256xf32>
    %c26 = arith.constant 26 : index
    %496 = memref.load %arg6[%c26] : memref<98xf32, #tpu.memory_space<smem>>
    %c75 = arith.constant 75 : index
    %497 = memref.load %arg6[%c75] : memref<98xf32, #tpu.memory_space<smem>>
    %498 = vector.broadcast %496 : f32 to vector<2x1xf32>
    %499 = arith.mulf %498, %47 : vector<2x1xf32>
    %500 = vector.broadcast %497 : f32 to vector<2x1xf32>
    %501 = arith.mulf %500, %49 : vector<2x1xf32>
    %502 = arith.addf %499, %501 : vector<2x1xf32>
    %503 = vector.broadcast %502 : vector<2x1xf32> to vector<2x256xf32>
    %504 = arith.mulf %503, %495 : vector<2x256xf32>
    %505 = arith.addf %494, %504 : vector<2x256xf32>
    %c0_90 = arith.constant 0 : index
    %c146 = arith.constant 146 : index
    %506 = vector.load %arg9[%c0_90, %c146] : memref<2x512xf32, #tpu.memory_space<vmem>>, vector<2x256xf32>
    %c33 = arith.constant 33 : index
    %507 = memref.load %arg6[%c33] : memref<98xf32, #tpu.memory_space<smem>>
    %c82_91 = arith.constant 82 : index
    %508 = memref.load %arg6[%c82_91] : memref<98xf32, #tpu.memory_space<smem>>
    %509 = vector.broadcast %507 : f32 to vector<2x1xf32>
    %510 = arith.mulf %509, %47 : vector<2x1xf32>
    %511 = vector.broadcast %508 : f32 to vector<2x1xf32>
    %512 = arith.mulf %511, %49 : vector<2x1xf32>
    %513 = arith.addf %510, %512 : vector<2x1xf32>
    %514 = vector.broadcast %513 : vector<2x1xf32> to vector<2x256xf32>
    %515 = arith.mulf %514, %506 : vector<2x256xf32>
    %516 = arith.addf %505, %515 : vector<2x256xf32>
    %c0_92 = arith.constant 0 : index
    %c162 = arith.constant 162 : index
    %517 = vector.load %arg9[%c0_92, %c162] : memref<2x512xf32, #tpu.memory_space<vmem>>, vector<2x256xf32>
    %c40 = arith.constant 40 : index
    %518 = memref.load %arg6[%c40] : memref<98xf32, #tpu.memory_space<smem>>
    %c89 = arith.constant 89 : index
    %519 = memref.load %arg6[%c89] : memref<98xf32, #tpu.memory_space<smem>>
    %520 = vector.broadcast %518 : f32 to vector<2x1xf32>
    %521 = arith.mulf %520, %47 : vector<2x1xf32>
    %522 = vector.broadcast %519 : f32 to vector<2x1xf32>
    %523 = arith.mulf %522, %49 : vector<2x1xf32>
    %524 = arith.addf %521, %523 : vector<2x1xf32>
    %525 = vector.broadcast %524 : vector<2x1xf32> to vector<2x256xf32>
    %526 = arith.mulf %525, %517 : vector<2x256xf32>
    %527 = arith.addf %516, %526 : vector<2x256xf32>
    %c0_93 = arith.constant 0 : index
    %c178 = arith.constant 178 : index
    %528 = vector.load %arg9[%c0_93, %c178] : memref<2x512xf32, #tpu.memory_space<vmem>>, vector<2x256xf32>
    %c47 = arith.constant 47 : index
    %529 = memref.load %arg6[%c47] : memref<98xf32, #tpu.memory_space<smem>>
    %c96_94 = arith.constant 96 : index
    %530 = memref.load %arg6[%c96_94] : memref<98xf32, #tpu.memory_space<smem>>
    %531 = vector.broadcast %529 : f32 to vector<2x1xf32>
    %532 = arith.mulf %531, %47 : vector<2x1xf32>
    %533 = vector.broadcast %530 : f32 to vector<2x1xf32>
    %534 = arith.mulf %533, %49 : vector<2x1xf32>
    %535 = arith.addf %532, %534 : vector<2x1xf32>
    %536 = vector.broadcast %535 : vector<2x1xf32> to vector<2x256xf32>
    %537 = arith.mulf %536, %528 : vector<2x256xf32>
    %538 = arith.addf %527, %537 : vector<2x256xf32>
    %c5_95 = arith.constant 5 : index
    %c0_96 = arith.constant 0 : index
    %539 = vector.load %arg4[%c5_95, %c0_96] : memref<7x256xf32, #tpu.memory_space<vmem>>, vector<1x256xf32>
    %540 = vector.broadcast %539 : vector<1x256xf32> to vector<2x256xf32>
    %541 = arith.mulf %540, %538 : vector<2x256xf32>
    %542 = arith.addf %460, %541 : vector<2x256xf32>
    %cst_97 = arith.constant 0.000000e+00 : f32
    %543 = vector.broadcast %cst_97 : f32 to vector<2x256xf32>
    %c0_98 = arith.constant 0 : index
    %c83 = arith.constant 83 : index
    %544 = vector.load %arg9[%c0_98, %c83] : memref<2x512xf32, #tpu.memory_space<vmem>>, vector<2x256xf32>
    %c6 = arith.constant 6 : index
    %545 = memref.load %arg6[%c6] : memref<98xf32, #tpu.memory_space<smem>>
    %c55 = arith.constant 55 : index
    %546 = memref.load %arg6[%c55] : memref<98xf32, #tpu.memory_space<smem>>
    %547 = vector.broadcast %545 : f32 to vector<2x1xf32>
    %548 = arith.mulf %547, %47 : vector<2x1xf32>
    %549 = vector.broadcast %546 : f32 to vector<2x1xf32>
    %550 = arith.mulf %549, %49 : vector<2x1xf32>
    %551 = arith.addf %548, %550 : vector<2x1xf32>
    %552 = vector.broadcast %551 : vector<2x1xf32> to vector<2x256xf32>
    %553 = arith.mulf %552, %544 : vector<2x256xf32>
    %554 = arith.addf %543, %553 : vector<2x256xf32>
    %c0_99 = arith.constant 0 : index
    %c99 = arith.constant 99 : index
    %555 = vector.load %arg9[%c0_99, %c99] : memref<2x512xf32, #tpu.memory_space<vmem>>, vector<2x256xf32>
    %c13 = arith.constant 13 : index
    %556 = memref.load %arg6[%c13] : memref<98xf32, #tpu.memory_space<smem>>
    %c62 = arith.constant 62 : index
    %557 = memref.load %arg6[%c62] : memref<98xf32, #tpu.memory_space<smem>>
    %558 = vector.broadcast %556 : f32 to vector<2x1xf32>
    %559 = arith.mulf %558, %47 : vector<2x1xf32>
    %560 = vector.broadcast %557 : f32 to vector<2x1xf32>
    %561 = arith.mulf %560, %49 : vector<2x1xf32>
    %562 = arith.addf %559, %561 : vector<2x1xf32>
    %563 = vector.broadcast %562 : vector<2x1xf32> to vector<2x256xf32>
    %564 = arith.mulf %563, %555 : vector<2x256xf32>
    %565 = arith.addf %554, %564 : vector<2x256xf32>
    %c0_100 = arith.constant 0 : index
    %c115 = arith.constant 115 : index
    %566 = vector.load %arg9[%c0_100, %c115] : memref<2x512xf32, #tpu.memory_space<vmem>>, vector<2x256xf32>
    %c20 = arith.constant 20 : index
    %567 = memref.load %arg6[%c20] : memref<98xf32, #tpu.memory_space<smem>>
    %c69 = arith.constant 69 : index
    %568 = memref.load %arg6[%c69] : memref<98xf32, #tpu.memory_space<smem>>
    %569 = vector.broadcast %567 : f32 to vector<2x1xf32>
    %570 = arith.mulf %569, %47 : vector<2x1xf32>
    %571 = vector.broadcast %568 : f32 to vector<2x1xf32>
    %572 = arith.mulf %571, %49 : vector<2x1xf32>
    %573 = arith.addf %570, %572 : vector<2x1xf32>
    %574 = vector.broadcast %573 : vector<2x1xf32> to vector<2x256xf32>
    %575 = arith.mulf %574, %566 : vector<2x256xf32>
    %576 = arith.addf %565, %575 : vector<2x256xf32>
    %c0_101 = arith.constant 0 : index
    %c131 = arith.constant 131 : index
    %577 = vector.load %arg9[%c0_101, %c131] : memref<2x512xf32, #tpu.memory_space<vmem>>, vector<2x256xf32>
    %c27 = arith.constant 27 : index
    %578 = memref.load %arg6[%c27] : memref<98xf32, #tpu.memory_space<smem>>
    %c76 = arith.constant 76 : index
    %579 = memref.load %arg6[%c76] : memref<98xf32, #tpu.memory_space<smem>>
    %580 = vector.broadcast %578 : f32 to vector<2x1xf32>
    %581 = arith.mulf %580, %47 : vector<2x1xf32>
    %582 = vector.broadcast %579 : f32 to vector<2x1xf32>
    %583 = arith.mulf %582, %49 : vector<2x1xf32>
    %584 = arith.addf %581, %583 : vector<2x1xf32>
    %585 = vector.broadcast %584 : vector<2x1xf32> to vector<2x256xf32>
    %586 = arith.mulf %585, %577 : vector<2x256xf32>
    %587 = arith.addf %576, %586 : vector<2x256xf32>
    %c0_102 = arith.constant 0 : index
    %c147 = arith.constant 147 : index
    %588 = vector.load %arg9[%c0_102, %c147] : memref<2x512xf32, #tpu.memory_space<vmem>>, vector<2x256xf32>
    %c34 = arith.constant 34 : index
    %589 = memref.load %arg6[%c34] : memref<98xf32, #tpu.memory_space<smem>>
    %c83_103 = arith.constant 83 : index
    %590 = memref.load %arg6[%c83_103] : memref<98xf32, #tpu.memory_space<smem>>
    %591 = vector.broadcast %589 : f32 to vector<2x1xf32>
    %592 = arith.mulf %591, %47 : vector<2x1xf32>
    %593 = vector.broadcast %590 : f32 to vector<2x1xf32>
    %594 = arith.mulf %593, %49 : vector<2x1xf32>
    %595 = arith.addf %592, %594 : vector<2x1xf32>
    %596 = vector.broadcast %595 : vector<2x1xf32> to vector<2x256xf32>
    %597 = arith.mulf %596, %588 : vector<2x256xf32>
    %598 = arith.addf %587, %597 : vector<2x256xf32>
    %c0_104 = arith.constant 0 : index
    %c163 = arith.constant 163 : index
    %599 = vector.load %arg9[%c0_104, %c163] : memref<2x512xf32, #tpu.memory_space<vmem>>, vector<2x256xf32>
    %c41 = arith.constant 41 : index
    %600 = memref.load %arg6[%c41] : memref<98xf32, #tpu.memory_space<smem>>
    %c90 = arith.constant 90 : index
    %601 = memref.load %arg6[%c90] : memref<98xf32, #tpu.memory_space<smem>>
    %602 = vector.broadcast %600 : f32 to vector<2x1xf32>
    %603 = arith.mulf %602, %47 : vector<2x1xf32>
    %604 = vector.broadcast %601 : f32 to vector<2x1xf32>
    %605 = arith.mulf %604, %49 : vector<2x1xf32>
    %606 = arith.addf %603, %605 : vector<2x1xf32>
    %607 = vector.broadcast %606 : vector<2x1xf32> to vector<2x256xf32>
    %608 = arith.mulf %607, %599 : vector<2x256xf32>
    %609 = arith.addf %598, %608 : vector<2x256xf32>
    %c0_105 = arith.constant 0 : index
    %c179 = arith.constant 179 : index
    %610 = vector.load %arg9[%c0_105, %c179] : memref<2x512xf32, #tpu.memory_space<vmem>>, vector<2x256xf32>
    %c48 = arith.constant 48 : index
    %611 = memref.load %arg6[%c48] : memref<98xf32, #tpu.memory_space<smem>>
    %c97_106 = arith.constant 97 : index
    %612 = memref.load %arg6[%c97_106] : memref<98xf32, #tpu.memory_space<smem>>
    %613 = vector.broadcast %611 : f32 to vector<2x1xf32>
    %614 = arith.mulf %613, %47 : vector<2x1xf32>
    %615 = vector.broadcast %612 : f32 to vector<2x1xf32>
    %616 = arith.mulf %615, %49 : vector<2x1xf32>
    %617 = arith.addf %614, %616 : vector<2x1xf32>
    %618 = vector.broadcast %617 : vector<2x1xf32> to vector<2x256xf32>
    %619 = arith.mulf %618, %610 : vector<2x256xf32>
    %620 = arith.addf %609, %619 : vector<2x256xf32>
    %c6_107 = arith.constant 6 : index
    %c0_108 = arith.constant 0 : index
    %621 = vector.load %arg4[%c6_107, %c0_108] : memref<7x256xf32, #tpu.memory_space<vmem>>, vector<1x256xf32>
    %622 = vector.broadcast %621 : vector<1x256xf32> to vector<2x256xf32>
    %623 = arith.mulf %622, %620 : vector<2x256xf32>
    %624 = arith.addf %542, %623 : vector<2x256xf32>
    %625 = vector.extract_strided_slice %624 {offsets = [0, 0], sizes = [1, 256], strides = [1, 1]} : vector<2x256xf32> to vector<1x256xf32>
    %626 = vector.extract_strided_slice %624 {offsets = [1, 0], sizes = [1, 256], strides = [1, 1]} : vector<2x256xf32> to vector<1x256xf32>
    %627 = arith.addf %625, %626 : vector<1x256xf32>
    %c0_109 = arith.constant 0 : index
    %628 = memref.load %arg7[%c0_109] : memref<1xf32, #tpu.memory_space<smem>>
    %629 = vector.broadcast %628 : f32 to vector<1x256xf32>
    %630 = arith.addf %627, %629 : vector<1x256xf32>
    %631 = arith.negf %630 : vector<1x256xf32>
    %632 = math.exp %631 : vector<1x256xf32>
    %cst_110 = arith.constant 1.000000e+00 : f32
    %633 = vector.broadcast %cst_110 : f32 to vector<1x256xf32>
    %634 = arith.addf %633, %632 : vector<1x256xf32>
    %635 = arith.divf %633, %634 : vector<1x256xf32>
    %636 = vector.shape_cast %29 : vector<1x16xf32> to vector<1x16x1xf32>
    %637 = vector.broadcast %636 : vector<1x16x1xf32> to vector<1x16x256xf32>
    %638 = arith.mulf %0, %637 : vector<1x16x256xf32>
    %639 = vector.shape_cast %635 : vector<1x256xf32> to vector<1x1x256xf32>
    %640 = vector.broadcast %639 : vector<1x1x256xf32> to vector<1x16x256xf32>
    %641 = arith.mulf %638, %640 : vector<1x16x256xf32>
    %c0_111 = arith.constant 0 : index
    %c0_112 = arith.constant 0 : index
    %c0_113 = arith.constant 0 : index
    %642 = vector.load %arg8[%c0_111, %c0_112, %c0_113] : memref<1x16x256xf32, #tpu.memory_space<vmem>>, vector<1x16x256xf32>
    tpu.vector_store %arg8[%c0_111, %c0_112, %c0_113], %641 {strides = array<i32>} : memref<1x16x256xf32, #tpu.memory_space<vmem>>, vector<1x16x256xf32>,
    return
  }
  func.func @transform_0(%arg0: i32) -> (i32, i32, i32) {
    %c0_i32 = arith.constant 0 : i32
    %c0_i32_0 = arith.constant 0 : i32
    %c0_i32_1 = arith.constant 0 : i32
    return %arg0, %c0_i32, %c0_i32_0 : i32, i32, i32
  }
  func.func @transform_1(%arg0: i32) -> (i32, i32) {
    %c0_i32 = arith.constant 0 : i32
    %c0_i32_0 = arith.constant 0 : i32
    %c0_i32_1 = arith.constant 0 : i32
    return %c0_i32, %c0_i32_0 : i32, i32
  }
  func.func @transform_2(%arg0: i32) -> (i32, i32) {
    %c0_i32 = arith.constant 0 : i32
    %c0_i32_0 = arith.constant 0 : i32
    %c0_i32_1 = arith.constant 0 : i32
    return %c0_i32, %c0_i32_0 : i32, i32
  }
  func.func @transform_3(%arg0: i32) -> (i32, i32) {
    %c0_i32 = arith.constant 0 : i32
    %c0_i32_0 = arith.constant 0 : i32
    %c0_i32_1 = arith.constant 0 : i32
    return %c0_i32, %c0_i32_0 : i32, i32
  }
  func.func @transform_4(%arg0: i32) -> (i32, i32) {
    %c0_i32 = arith.constant 0 : i32
    %c0_i32_0 = arith.constant 0 : i32
    %c0_i32_1 = arith.constant 0 : i32
    return %c0_i32, %c0_i32_0 : i32, i32
  }
  func.func @transform_5(%arg0: i32) -> i32 {
    %c0_i32 = arith.constant 0 : i32
    %c0_i32_0 = arith.constant 0 : i32
    return %c0_i32 : i32
  }
  func.func @transform_6(%arg0: i32) -> i32 {
    %c0_i32 = arith.constant 0 : i32
    %c0_i32_0 = arith.constant 0 : i32
    return %c0_i32 : i32
  }
  func.func @transform_7(%arg0: i32) -> (i32, i32, i32) {
    %c0_i32 = arith.constant 0 : i32
    %c0_i32_0 = arith.constant 0 : i32
    %c0_i32_1 = arith.constant 0 : i32
    return %arg0, %c0_i32, %c0_i32_0 : i32, i32, i32
  }
}

</mosaic_0001>

<llo_original>
// kernel: cbam_forward.1
$region0: #{cbam_forward.1}
  #allocation0 [shape = 'u32[]', space=smem, size = 0x4, offset = 0x4, fixed_abs, tag = 'smem constant byte address 0x4 - core index']
  #allocation1 [shape = 'u32[144,128]{1,0:T(1,128)}', space=vmem, size = 0x12000, scoped, tag = 'internal scratch']
  #allocation2 [shape = 'f32[2,512]{1,0:T(2,128)}', space=vmem, size = 0x1000, scoped, tag = 'scratch operand']
  #allocation3 [shape = 'f32[1]{0:T(128)S(6)}', space=smem, size = 0x200, scoped, tag = 'scoped memory for cbam_forward.1']
  %s0 = inlined_call_operand.vmem [shape: f32[2,16,256], index: 0, kind: input, shape index: {}]
  %s1 = inlined_call_operand.vmem [shape: f32[16,2], index: 1, kind: input, shape index: {}]
  %s2 = inlined_call_operand.vmem [shape: f32[2,16], index: 2, kind: input, shape index: {}]
  %s3 = inlined_call_operand.vmem [shape: f32[7,256], index: 3, kind: input, shape index: {}]
  %s4 = inlined_call_operand.vmem [shape: f32[1,256], index: 4, kind: input, shape index: {}]
  %s5 = inlined_call_operand.vmem [shape: f32[98], index: 5, kind: input, shape index: {}]
  %s6 = inlined_call_operand.<no memory space> [shape: f32[1], index: 6, kind: input, shape index: {}]
  %s7 = inlined_call_operand.vmem [shape: f32[2,16,256], index: 7, kind: output, shape index: {}]
  %s8 = sld [smem:[#allocation0]]
  $region65: #{cbam_forward.1} parent=0
    _
  %s10 = ssub.s32 1, %s8
  %s11 = scalar_select 0, %s10, %s8
  %12 = sst [smem:[#allocation3]] %s6
  $region1: #{cbam_forward.1} parent=0
    #allocation4 [shape = 'u8[512]{0}', space=smem, size = 0x200, scoped, tag = 'input window, operand 5, single buffered']
    #allocation5 [shape = 's32[2]{0}', space=sflag, size = 0x8, scoped, tag = 'scoped memory for cbam_forward.1']
    %13 = vsyncpa [#allocation5], 0
    loop: start=0, step=1, limit=4
    $region2: #{cbam_forward.1} parent=1 // loop_pre_header
      _
    $region3: #{cbam_forward.1} parent=1 // loop_header
      %s15 = sphi 0, %s19
      %p16 = scmp.ge.s32.totalorder %s15, 4
      %s25 = sphi 0, %s27
      %s28 = sphi 0, %s25
      %s29 = sphi 0, %s28
      %s45 = sphi 0, %s29
      %s49 = sphi 0, %s49
      %s51 = sphi 0, %s49
      %s52 = sphi 0, %s51
      %s66 = sphi 0, %s52
      %s70 = sphi 0, %s70
      %s72 = sphi 0, %s70
      %s73 = sphi 0, %s72
      %s87 = sphi 0, %s73
      %s91 = sphi 0, %s91
      %s93 = sphi 0, %s91
      %s94 = sphi 0, %s93
      %s108 = sphi 0, %s94
      %s112 = sphi 0, %s112
      %s114 = sphi 0, %s112
      %s115 = sphi 0, %s114
      %s129 = sphi 0, %s115
      %s133 = sphi 0, %s133
      %s135 = sphi 0, %s133
      %s136 = sphi 0, %s135
      %s150 = sphi 0, %s136
      %s154 = sphi 0, %s154
      %s156 = sphi 0, %s154
      %s157 = sphi 0, %s156
      %s171 = sphi 0, %s157
      %s177 = sphi 0, %s179
      %s180 = sphi 0, %s177
      %s181 = sphi 0, %s180
      %s197 = sphi 0, %s181
    $region4: #{cbam_forward.1} parent=1 // loop_header_branch
      %18 = sbr.rel (%p16) target = $region8
    $region5: #{cbam_forward.1} parent=1 // loop_body
      %s20 = ssub.s32 %s15, 1
      %s21 = ssub.s32 %s15, 2
      %s22 = sadd.s32 %s15, 1
      %s23 = ssub.s32 %s15, %s22
      %p24 = scmp.eq.s32.totalorder %s23, 0
      %s26 = sadd.s32 %s25, 1
      %s27 = scalar_select %p24, %s25, %s26
      %p30 = pneg %p24
      %p31 = scmp.eq.s32.totalorder %s15, 1
      %p32 = por %p30, %p31
      %p33 = scmp.ne.s32.totalorder %s25, %s28
      %p34 = scmp.eq.s32.totalorder %s15, 0
      %p35 = por %p33, %p34
      %p36 = scmp.ne.s32.totalorder %s25, %s28
      %p37 = scmp.eq.s32.totalorder %s20, 1
      %p38 = por %p36, %p37
      %p39 = scmp.ne.s32.totalorder %s28, %s29
      %p40 = scmp.eq.s32.totalorder %s20, 0
      %p41 = por %p39, %p40
      %p42 = scmp.ne.s32.totalorder %s28, %s29
      %p43 = scmp.eq.s32.totalorder %s21, 1
      %p44 = por %p42, %p43
      %p46 = scmp.ne.s32.totalorder %s29, %s45
      %p47 = scmp.eq.s32.totalorder %s21, 0
      %p48 = por %p46, %p47
      %s50 = sadd.s32 %s49, 1
      %p53 = scmp.eq.s32.totalorder %s15, 1
      %p54 = scmp.ne.s32.totalorder %s49, %s51
      %p55 = scmp.eq.s32.totalorder %s15, 0
      %p56 = por %p54, %p55
      %p57 = scmp.ne.s32.totalorder %s49, %s51
      %p58 = scmp.eq.s32.totalorder %s20, 1
      %p59 = por %p57, %p58
      %p60 = scmp.ne.s32.totalorder %s51, %s52
      %p61 = scmp.eq.s32.totalorder %s20, 0
      %p62 = por %p60, %p61
      %p63 = scmp.ne.s32.totalorder %s51, %s52
      %p64 = scmp.eq.s32.totalorder %s21, 1
      %p65 = por %p63, %p64
      %p67 = scmp.ne.s32.totalorder %s52, %s66
      %p68 = scmp.eq.s32.totalorder %s21, 0
      %p69 = por %p67, %p68
      %s71 = sadd.s32 %s70, 1
      %p74 = scmp.eq.s32.totalorder %s15, 1
      %p75 = scmp.ne.s32.totalorder %s70, %s72
      %p76 = scmp.eq.s32.totalorder %s15, 0
      %p77 = por %p75, %p76
      %p78 = scmp.ne.s32.totalorder %s70, %s72
      %p79 = scmp.eq.s32.totalorder %s20, 1
      %p80 = por %p78, %p79
      %p81 = scmp.ne.s32.totalorder %s72, %s73
      %p82 = scmp.eq.s32.totalorder %s20, 0
      %p83 = por %p81, %p82
      %p84 = scmp.ne.s32.totalorder %s72, %s73
      %p85 = scmp.eq.s32.totalorder %s21, 1
      %p86 = por %p84, %p85
      %p88 = scmp.ne.s32.totalorder %s73, %s87
      %p89 = scmp.eq.s32.totalorder %s21, 0
      %p90 = por %p88, %p89
      %s92 = sadd.s32 %s91, 1
      %p95 = scmp.eq.s32.totalorder %s15, 1
      %p96 = scmp.ne.s32.totalorder %s91, %s93
      %p97 = scmp.eq.s32.totalorder %s15, 0
      %p98 = por %p96, %p97
      %p99 = scmp.ne.s32.totalorder %s91, %s93
      %p100 = scmp.eq.s32.totalorder %s20, 1
      %p101 = por %p99, %p100
      %p102 = scmp.ne.s32.totalorder %s93, %s94
      %p103 = scmp.eq.s32.totalorder %s20, 0
      %p104 = por %p102, %p103
      %p105 = scmp.ne.s32.totalorder %s93, %s94
      %p106 = scmp.eq.s32.totalorder %s21, 1
      %p107 = por %p105, %p106
      %p109 = scmp.ne.s32.totalorder %s94, %s108
      %p110 = scmp.eq.s32.totalorder %s21, 0
      %p111 = por %p109, %p110
      %s113 = sadd.s32 %s112, 1
      %p116 = scmp.eq.s32.totalorder %s15, 1
      %p117 = scmp.ne.s32.totalorder %s112, %s114
      %p118 = scmp.eq.s32.totalorder %s15, 0
      %p119 = por %p117, %p118
      %p120 = scmp.ne.s32.totalorder %s112, %s114
      %p121 = scmp.eq.s32.totalorder %s20, 1
      %p122 = por %p120, %p121
      %p123 = scmp.ne.s32.totalorder %s114, %s115
      %p124 = scmp.eq.s32.totalorder %s20, 0
      %p125 = por %p123, %p124
      %p126 = scmp.ne.s32.totalorder %s114, %s115
      %p127 = scmp.eq.s32.totalorder %s21, 1
      %p128 = por %p126, %p127
      %p130 = scmp.ne.s32.totalorder %s115, %s129
      %p131 = scmp.eq.s32.totalorder %s21, 0
      %p132 = por %p130, %p131
      %s134 = sadd.s32 %s133, 1
      %p137 = scmp.eq.s32.totalorder %s15, 1
      %p138 = scmp.ne.s32.totalorder %s133, %s135
      %p139 = scmp.eq.s32.totalorder %s15, 0
      %p140 = por %p138, %p139
      %p141 = scmp.ne.s32.totalorder %s133, %s135
      %p142 = scmp.eq.s32.totalorder %s20, 1
      %p143 = por %p141, %p142
      %p144 = scmp.ne.s32.totalorder %s135, %s136
      %p145 = scmp.eq.s32.totalorder %s20, 0
      %p146 = por %p144, %p145
      %p147 = scmp.ne.s32.totalorder %s135, %s136
      %p148 = scmp.eq.s32.totalorder %s21, 1
      %p149 = por %p147, %p148
      %p151 = scmp.ne.s32.totalorder %s136, %s150
      %p152 = scmp.eq.s32.totalorder %s21, 0
      %p153 = por %p151, %p152
      %s155 = sadd.s32 %s154, 1
      %p158 = scmp.eq.s32.totalorder %s15, 1
      %p159 = scmp.ne.s32.totalorder %s154, %s156
      %p160 = scmp.eq.s32.totalorder %s15, 0
      %p161 = por %p159, %p160
      %p162 = scmp.ne.s32.totalorder %s154, %s156
      %p163 = scmp.eq.s32.totalorder %s20, 1
      %p164 = por %p162, %p163
      %p165 = scmp.ne.s32.totalorder %s156, %s157
      %p166 = scmp.eq.s32.totalorder %s20, 0
      %p167 = por %p165, %p166
      %p168 = scmp.ne.s32.totalorder %s156, %s157
      %p169 = scmp.eq.s32.totalorder %s21, 1
      %p170 = por %p168, %p169
      %p172 = scmp.ne.s32.totalorder %s157, %s171
      %p173 = scmp.eq.s32.totalorder %s21, 0
      %p174 = por %p172, %p173
      %s175 = ssub.s32 %s15, %s22
      %p176 = scmp.eq.s32.totalorder %s175, 0
      %s178 = sadd.s32 %s177, 1
      %s179 = scalar_select %p176, %s177, %s178
      %p182 = pneg %p176
      %p183 = scmp.eq.s32.totalorder %s15, 1
      %p184 = por %p182, %p183
      %p185 = scmp.ne.s32.totalorder %s177, %s180
      %p186 = scmp.eq.s32.totalorder %s15, 0
      %p187 = por %p185, %p186
      %p188 = scmp.ne.s32.totalorder %s177, %s180
      %p189 = scmp.eq.s32.totalorder %s20, 1
      %p190 = por %p188, %p189
      %p191 = scmp.ne.s32.totalorder %s180, %s181
      %p192 = scmp.eq.s32.totalorder %s20, 0
      %p193 = por %p191, %p192
      %p194 = scmp.ne.s32.totalorder %s180, %s181
      %p195 = scmp.eq.s32.totalorder %s21, 1
      %p196 = por %p194, %p195
      %p198 = scmp.ne.s32.totalorder %s181, %s197
      %p199 = scmp.eq.s32.totalorder %s21, 0
      %p200 = por %p198, %p199
      %p201 = scmp.le.s32.totalorder 1, %s15
      %p202 = scmp.lt.s32.totalorder %s15, 3
      %p203 = pnand %p201, %p202
      %p204 = pneg %p203
      // Predicated region
      $region9: #{cbam_forward.1} parent=5 // pred_check
        _
      $region10: #{cbam_forward.1} parent=5 // pred_check_branch
        %206 = sbr.rel (%p203) target = $region12
      $region11: #{cbam_forward.1} parent=5 // pred_region
        %s207 = ssub.s32 %s15, 1
        // Predicated region
        $region13: #{cbam_forward.1} parent=11 // pred_check
          %p208 = pneg %p62
        $region14: #{cbam_forward.1} parent=11 // pred_check_branch
          %210 = sbr.rel (%p208) target = $region16
        $region15: #{cbam_forward.1} parent=11 // pred_region
          _
        $region16: #{cbam_forward.1} parent=11 // pred_fallthru
          _
        // Predicated region
        $region17: #{cbam_forward.1} parent=11 // pred_check
          %p211 = pneg %p83
        $region18: #{cbam_forward.1} parent=11 // pred_check_branch
          %213 = sbr.rel (%p211) target = $region20
        $region19: #{cbam_forward.1} parent=11 // pred_region
          _
        $region20: #{cbam_forward.1} parent=11 // pred_fallthru
          _
        // Predicated region
        $region21: #{cbam_forward.1} parent=11 // pred_check
          %p214 = pneg %p104
        $region22: #{cbam_forward.1} parent=11 // pred_check_branch
          %216 = sbr.rel (%p214) target = $region24
        $region23: #{cbam_forward.1} parent=11 // pred_region
          _
        $region24: #{cbam_forward.1} parent=11 // pred_fallthru
          _
        // Predicated region
        $region25: #{cbam_forward.1} parent=11 // pred_check
          %p217 = pneg %p125
        $region26: #{cbam_forward.1} parent=11 // pred_check_branch
          %219 = sbr.rel (%p217) target = $region28
        $region27: #{cbam_forward.1} parent=11 // pred_region
          _
        $region28: #{cbam_forward.1} parent=11 // pred_fallthru
          _
        // Predicated region
        $region29: #{cbam_forward.1} parent=11 // pred_check
          %p220 = pneg %p146
        $region30: #{cbam_forward.1} parent=11 // pred_check_branch
          %222 = sbr.rel (%p220) target = $region32
        $region31: #{cbam_forward.1} parent=11 // pred_region
          %s224 = ssub.s32 16, 16
          %225 = vsyncadd [#allocation5], %s224
          %s227 = sshll.u32 %s5, 4
          %s228 = int_to_ptr.vmem [resolvable:$true] %s227
          %230 = dma.vmem_to_smem %s228, 16, [#allocation4], [#allocation5]
        $region32: #{cbam_forward.1} parent=11 // pred_fallthru
          _
        // Predicated region
        $region33: #{cbam_forward.1} parent=11 // pred_check
          %p231 = pneg %p167
        $region34: #{cbam_forward.1} parent=11 // pred_check_branch
          %233 = sbr.rel (%p231) target = $region36
        $region35: #{cbam_forward.1} parent=11 // pred_region
          _
        $region36: #{cbam_forward.1} parent=11 // pred_fallthru
          _
      $region12: #{cbam_forward.1} parent=5 // pred_fallthru
        _
      %p234 = scmp.lt.s32.totalorder %s15, 2
      // Predicated region
      $region37: #{cbam_forward.1} parent=5 // pred_check
        %p235 = pneg %p234
      $region38: #{cbam_forward.1} parent=5 // pred_check_branch
        %237 = sbr.rel (%p235) target = $region40
      $region39: #{cbam_forward.1} parent=5 // pred_region
        // Predicated region
        $region41: #{cbam_forward.1} parent=39 // pred_check
          %p238 = pneg %p35
        $region42: #{cbam_forward.1} parent=39 // pred_check_branch
          %240 = sbr.rel (%p238) target = $region44
        $region43: #{cbam_forward.1} parent=39 // pred_region
          %p241 = scmp.lt.s32.totalorder %s15, 1
          %s242 = scalar_select %p241, %s15, 1
          %s243 = smul.addr %s242, 4
          %s244 = smul.addr %s243, 8
          %s245 = scalar_lea.vmem %s0, %s244
        $region44: #{cbam_forward.1} parent=39 // pred_fallthru
          _
      $region40: #{cbam_forward.1} parent=5 // pred_fallthru
        _
      %p246 = scmp.le.s32.totalorder 1, %s15
      %p247 = scmp.lt.s32.totalorder %s15, 3
      %p248 = pnand %p246, %p247
      %p249 = pneg %p248
      // Predicated region
      $region45: #{cbam_forward.1} parent=5 // pred_check
        _
      $region46: #{cbam_forward.1} parent=5 // pred_check_branch
        %251 = sbr.rel (%p248) target = $region48
      $region47: #{cbam_forward.1} parent=5 // pred_region
        %s252 = ssub.s32 %s15, 1
        // Predicated region
        $region49: #{cbam_forward.1} parent=47 // pred_check
          %p253 = pneg %p146
        $region50: #{cbam_forward.1} parent=47 // pred_check_branch
          %255 = sbr.rel (%p253) target = $region52
        $region51: #{cbam_forward.1} parent=47 // pred_region
          %256 = dma.done [#allocation5], 16
        $region52: #{cbam_forward.1} parent=47 // pred_fallthru
          _
        %257 = sfence
        %p258 = scmp.lt.s32.totalorder %s20, 1
        %s259 = scalar_select %p258, %s20, 1
        %s260 = smul.addr %s259, 4
        %s261 = smul.addr %s260, 8
        %s262 = scalar_lea.vmem %s0, %s261
        %p263 = pneg %p41
        %p264 = pneg %p38
        %p265 = pneg %p62
        %p266 = pneg %p59
        %p267 = pneg %p83
        %p268 = pneg %p80
        %p269 = pneg %p104
        %p270 = pneg %p101
        %p271 = pneg %p125
        %p272 = pneg %p122
        %p273 = pneg %p146
        %p274 = pneg %p143
        %p275 = pneg %p167
        %p276 = pneg %p164
        %p277 = pneg %p193
        %p278 = pneg %p190
        %p279 = scmp.lt.s32.totalorder %s20, 1
        %s280 = scalar_select %p279, %s20, 1
        %s281 = smul.addr %s280, 4
        %s282 = smul.addr %s281, 8
        %s283 = scalar_lea.vmem %s7, %s282
        %p284 = scmp.lt.s32.totalorder %s20, 1
        %s285 = scalar_select %p284, %s20, 1
        %s286 = smul.addr %s285, 4
        %s287 = smul.addr %s286, 8
        %s288 = scalar_lea.vmem %s0, %s287
        %p289 = scmp.lt.s32.totalorder %s20, 1
        %s290 = scalar_select %p289, %s20, 1
        %s291 = smul.addr %s290, 4
        %s292 = smul.addr %s291, 8
        %s293 = scalar_lea.vmem %s7, %s292
        %v294 = vld [vmem:[%s288] sm:$0xff]
        %v295 = vld [vmem:[%s288 + $0x8] sm:$0xff]
        %v296 = vld [vmem:[%s288 + $0x10] sm:$0xff]
        %v297 = vld [vmem:[%s288 + $0x18] sm:$0xff]
        %v298 = vmax.f32 %v294, %v295
        %299 = vmax.xlane.f32.xlu0 %v298
        %v300 = vpop.xlane.xlu0 %299
        %v301 = vmax.f32 %v296, %v297
        %302 = vmax.xlane.f32.xlu0 %v301
        %v303 = vpop.xlane.xlu0 %302
        %v304 = vadd.f32 %v294, %v295
        %305 = vadd.xlane.f32.xlu0 %v304
        %v306 = vpop.xlane.xlu0 %305
        %v307 = vadd.f32 %v296, %v297
        %308 = vadd.xlane.f32.xlu0 %v307
        %v309 = vpop.xlane.xlu0 %308
        %v310 = vmul.f32 %v306, 0.00390625
        %v311 = vmul.f32 %v309, 0.00390625
        %v314 = vlaneseq
        %v315 = vand.u32 %v314, 127
        %v316 = vlaneseq
        %v317 = vshrl.u32 %v316, 7
        %v318 = vsub.s32 %v315, %v317
        %v319 = vrot.slane %v300, %v318
        %v320 = vadd.s32 %v315, 4294967288
        %v321 = vlaneseq
        %v322 = vshrl.u32 %v321, 7
        %v323 = vsub.s32 %v320, %v322
        %v324 = vrot.slane %v303, %v323
        %vm325 = vcmask 130112
        %v326 = vsel %vm325, %v324, %v319
        %v330 = vlaneseq
        %v331 = vshrl.u32 %v330, 7
        %v332 = vsub.s32 %v315, %v331
        %v333 = vrot.slane %v310, %v332
        %v334 = vlaneseq
        %v335 = vshrl.u32 %v334, 7
        %v336 = vsub.s32 %v320, %v335
        %v337 = vrot.slane %v311, %v336
        %v338 = vsel %vm325, %v337, %v333
        %vm340 = vcmask 1040384
        %v341 = vsel %vm340, %v326, %v338
        %v342 = vld [vmem:[%s1] sm:$0xff]
        %v343 = vld [vmem:[%s1 + $0x8] sm:$0xff]
        %v344 = vld [vmem:[%s2] sm:$0x3]
        %v345 = vlaneseq
        %v346 = vshrl.u32 %v345, 7
        %v347 = vsub.s32 0, %v346
        %v348 = vrot.slane %v341, %v347
        %350 = vbcast.lane.b32.xlu0 %v348, 256
        %v351 = vpop.permute.xlu0 %350
        %s353 = sor.u32 256, 8
        %354 = vbcast.lane.b32.xlu0 %v348, %s353
        %v355 = vpop.permute.xlu0 %354
        %v356 = vlaneseq
        %v357 = vshrl.u32 %v356, 7
        %v358 = vsub.s32 1, %v357
        %v359 = vrot.slane %v341, %v358
        %361 = vbcast.lane.b32.xlu0 %v359, 256
        %v362 = vpop.permute.xlu0 %361
        %s364 = sor.u32 256, 8
        %365 = vbcast.lane.b32.xlu0 %v359, %s364
        %v366 = vpop.permute.xlu0 %365
        %v367 = vmul.f32 %v351, %v342
        %v368 = vmul.f32 %v355, %v343
        %v369 = vmul.f32 %v362, %v342
        %v370 = vmul.f32 %v366, %v343
        %vm371 = vcmask 15360
        %v372 = vsel %vm371, %v367, 0.0
        %v373 = vsel %vm371, %v368, 0.0
        %v374 = vadd.f32 %v372, %v373
        %v375 = vrot.slane %v374, 4
        %v376 = vadd.f32 %v374, %v375
        %v377 = vrot.slane %v376, 2
        %v378 = vadd.f32 %v376, %v377
        %v379 = vrot.slane %v378, 1
        %v380 = vadd.f32 %v378, %v379
        %v381 = vsel %vm371, %v369, 0.0
        %v382 = vsel %vm371, %v370, 0.0
        %v383 = vadd.f32 %v381, %v382
        %v384 = vrot.slane %v383, 4
        %v385 = vadd.f32 %v383, %v384
        %v386 = vrot.slane %v385, 2
        %v387 = vadd.f32 %v385, %v386
        %v388 = vrot.slane %v387, 1
        %v389 = vadd.f32 %v387, %v388
        %v390 = vmax.f32 %v380, 0.0
        %v391 = vmax.f32 %v389, 0.0
        %393 = vbcast.lane.b32.xlu0 %v390, 256
        %v394 = vpop.permute.xlu0 %393
        %396 = vbcast.lane.b32.xlu0 %v391, 256
        %v397 = vpop.permute.xlu0 %396
        %v398 = vmul.f32 %v394, %v344
        %v399 = vmul.f32 %v397, %v344
        %vm400 = vcmask 123904
        %v401 = vsel %vm400, %v398, 0.0
        %v402 = vrot.slane %v401, 4
        %v403 = vadd.f32 %v401, %v402
        %v404 = vrot.slane %v403, 2
        %v405 = vadd.f32 %v403, %v404
        %v406 = vrot.slane %v405, 1
        %v407 = vadd.f32 %v405, %v406
        %v408 = vsel %vm400, %v399, 0.0
        %v409 = vrot.slane %v408, 4
        %v410 = vadd.f32 %v408, %v409
        %v411 = vrot.slane %v410, 2
        %v412 = vadd.f32 %v410, %v411
        %v413 = vrot.slane %v412, 1
        %v414 = vadd.f32 %v412, %v413
        %v415 = vadd.f32 %v407, %v414
        %v416 = vxor.u32 %v415, 2147483648
        %v417 = vmul.f32 %v416, 1.442695
        %v418 = vpow.pop %v417
        %v419 = vadd.f32 %v418, 1.0
        %v420 = vrcp.pop %v419
        %v421 = vmul.f32 1.0, %v420
        %422 = vst [vmem:[#allocation2] sm:$0x3] 0.0
        %423 = vst [vmem:[#allocation2 + $0x6] sm:$0x3] 0.0
        %425 = vbcast.lane.b32.xlu0 %v421, 256
        %v426 = vpop.permute.xlu0 %425
        %s428 = sor.u32 256, 8
        %429 = vbcast.lane.b32.xlu0 %v421, %s428
        %v430 = vpop.permute.xlu0 %429
        %v431 = vmul.f32 %v294, %v426
        %v432 = vmul.f32 %v295, %v426
        %v433 = vmul.f32 %v296, %v430
        %v434 = vmul.f32 %v297, %v430
        %v435 = vmax.f32 %v431, %v433
        %v436 = vrot.slane %v435, 4
        %v437 = vmax.f32 %v435, %v436
        %v438 = vrot.slane %v437, 2
        %v439 = vmax.f32 %v437, %v438
        %v440 = vrot.slane %v439, 1
        %v441 = vmax.f32 %v439, %v440
        %v442 = vmax.f32 %v432, %v434
        %v443 = vrot.slane %v442, 4
        %v444 = vmax.f32 %v442, %v443
        %v445 = vrot.slane %v444, 2
        %v446 = vmax.f32 %v444, %v445
        %v447 = vrot.slane %v446, 1
        %v448 = vmax.f32 %v446, %v447
        %v451 = vcombine.low %v441, %v448
        %v453 = vunpack.c.l.s4 1966171168
        %v454 = vunpack.c.0.s8 %v453
        %v455 = vlaneseq
        %v456 = vshrl.u32 %v455, 7
        %v457 = vsub.s32 %v454, %v456
        %v458 = vrot.slane %v451, %v457
        %v460 = vunpack.c.l.s4 1966171168
        %v461 = vunpack.c.0.s8 %v460
        %v462 = vlaneseq
        %v463 = vshrl.u32 %v462, 7
        %v464 = vsub.s32 %v461, %v463
        %v465 = vrot.slane %v458, %v464
        %v467 = vlaneseq
        %vm468 = vcmp.ge.s32.totalorder %v467, 0
        %vm469 = vcmp.lt.s32.totalorder %v467, 256
        %vm470 = vmand %vm468, %vm469
        %s471 = scalar_lea.vmem [#allocation2], 2
        %472 = vst.msk [vmem:[%s471] ss:$2 sm:$0x3] %vm470, %v465
        %v473 = vadd.f32 %v431, %v433
        %v474 = vrot.slane %v473, 4
        %v475 = vadd.f32 %v473, %v474
        %v476 = vrot.slane %v475, 2
        %v477 = vadd.f32 %v475, %v476
        %v478 = vrot.slane %v477, 1
        %v479 = vadd.f32 %v477, %v478
        %v480 = vadd.f32 %v432, %v434
        %v481 = vrot.slane %v480, 4
        %v482 = vadd.f32 %v480, %v481
        %v483 = vrot.slane %v482, 2
        %v484 = vadd.f32 %v482, %v483
        %v485 = vrot.slane %v484, 1
        %v486 = vadd.f32 %v484, %v485
        %v487 = vmul.f32 %v479, 0.0625
        %v488 = vmul.f32 %v486, 0.0625
        %v491 = vcombine.low %v487, %v488
        %v493 = vunpack.c.l.s4 1966171168
        %v494 = vunpack.c.0.s8 %v493
        %v495 = vlaneseq
        %v496 = vshrl.u32 %v495, 7
        %v497 = vsub.s32 %v494, %v496
        %v498 = vrot.slane %v491, %v497
        %v500 = vunpack.c.l.s4 1966171168
        %v501 = vunpack.c.0.s8 %v500
        %v502 = vlaneseq
        %v503 = vshrl.u32 %v502, 7
        %v504 = vsub.s32 %v501, %v503
        %v505 = vrot.slane %v498, %v504
        %s507 = scalar_lea.vmem [#allocation2], 3
        %508 = vst.msk [vmem:[%s507] ss:$2 sm:$0x3] %vm470, %v505
        %v509 = vlaneseq
        %v510 = vshrl.u32 %v509, 7
        %vm511 = vcmp.lt.s32.totalorder %v510, 1
        %v512 = vsel %vm511, 1, 0
        %v513 = vcvt.s32.f32 %v512
        %v514 = vsub.f32 1.0, %v513
        %v515 = vld [vmem:[#allocation2] sm:$0x3f]
        %s516 = sld [smem:[#allocation4]]
        %s517 = sld [smem:[#allocation4 + $0x31]]
        %v518 = vstv %s516
        %v519 = vmul.f32 %v518, %v513
        %v520 = vstv %s517
        %v521 = vmul.f32 %v520, %v514
        %v522 = vadd.f32 %v519, %v521
        %v524 = vcombine.high %v515, %v515
        %v526 = vunpack.c.l.s4 1983009808
        %v527 = vunpack.c.0.s8 %v526
        %v528 = vlaneseq
        %v529 = vshrl.u32 %v528, 7
        %v530 = vsub.s32 %v527, %v529
        %v531 = vrot.slane %v515, %v530
        %v533 = vunpack.c.l.s4 1983009808
        %v534 = vunpack.c.0.s8 %v533
        %v535 = vlaneseq
        %v536 = vshrl.u32 %v535, 7
        %v537 = vsub.s32 %v534, %v536
        %v538 = vrot.slane %v524, %v537
        %v539 = vcombine.high %v531, %v531
        %540 = vrot.lane.b32.xlu0 %v531, 51
        %v541 = vpop.permute.xlu0 %540
        %542 = vrot.lane.b32.xlu0 %v539, 51
        %v543 = vpop.permute.xlu0 %542
        %544 = vrot.lane.b32.xlu0 %v538, 51
        %v545 = vpop.permute.xlu0 %544
        %vm546 = vcmask 416768
        %v547 = vsel %vm546, %v541, %v543
        %v548 = vsel %vm546, %v543, %v545
        %v551 = vmul.f32 %v522, %v547
        %v552 = vmul.f32 %v522, %v548
        %v553 = vadd.f32 %v551, 0.0
        %v554 = vadd.f32 %v552, 0.0
        %v555 = vld [vmem:[#allocation2] sm:$0x3f]
        %s556 = sld [smem:[#allocation4 + $0x7]]
        %s557 = sld [smem:[#allocation4 + $0x38]]
        %v558 = vstv %s556
        %v559 = vmul.f32 %v558, %v513
        %v560 = vstv %s557
        %v561 = vmul.f32 %v560, %v514
        %v562 = vadd.f32 %v559, %v561
        %v564 = vcombine.high %v555, %v555
        %v566 = vunpack.c.l.s4 1983009808
        %v567 = vunpack.c.0.s8 %v566
        %v568 = vlaneseq
        %v569 = vshrl.u32 %v568, 7
        %v570 = vsub.s32 %v567, %v569
        %v571 = vrot.slane %v555, %v570
        %v573 = vunpack.c.l.s4 1983009808
        %v574 = vunpack.c.0.s8 %v573
        %v575 = vlaneseq
        %v576 = vshrl.u32 %v575, 7
        %v577 = vsub.s32 %v574, %v576
        %v578 = vrot.slane %v564, %v577
        %v579 = vcombine.high %v571, %v571
        %580 = vrot.lane.b32.xlu0 %v571, 35
        %v581 = vpop.permute.xlu0 %580
        %582 = vrot.lane.b32.xlu0 %v579, 35
        %v583 = vpop.permute.xlu0 %582
        %584 = vrot.lane.b32.xlu0 %v578, 35
        %v585 = vpop.permute.xlu0 %584
        %vm586 = vcmask 285696
        %v587 = vsel %vm586, %v581, %v583
        %v588 = vsel %vm586, %v583, %v585
        %v591 = vmul.f32 %v562, %v587
        %v592 = vmul.f32 %v562, %v588
        %v593 = vadd.f32 %v553, %v591
        %v594 = vadd.f32 %v554, %v592
        %v595 = vld [vmem:[#allocation2] sm:$0x3f]
        %s596 = sld [smem:[#allocation4 + $0xe]]
        %s597 = sld [smem:[#allocation4 + $0x3f]]
        %v598 = vstv %s596
        %v599 = vmul.f32 %v598, %v513
        %v600 = vstv %s597
        %v601 = vmul.f32 %v600, %v514
        %v602 = vadd.f32 %v599, %v601
        %v604 = vcombine.high %v595, %v595
        %v606 = vunpack.c.l.s4 1983009808
        %v607 = vunpack.c.0.s8 %v606
        %v608 = vlaneseq
        %v609 = vshrl.u32 %v608, 7
        %v610 = vsub.s32 %v607, %v609
        %v611 = vrot.slane %v595, %v610
        %v613 = vunpack.c.l.s4 1983009808
        %v614 = vunpack.c.0.s8 %v613
        %v615 = vlaneseq
        %v616 = vshrl.u32 %v615, 7
        %v617 = vsub.s32 %v614, %v616
        %v618 = vrot.slane %v604, %v617
        %v619 = vcombine.high %v611, %v611
        %620 = vrot.lane.b32.xlu0 %v611, 19
        %v621 = vpop.permute.xlu0 %620
        %622 = vrot.lane.b32.xlu0 %v619, 19
        %v623 = vpop.permute.xlu0 %622
        %624 = vrot.lane.b32.xlu0 %v618, 19
        %v625 = vpop.permute.xlu0 %624
        %vm626 = vcmask 154624
        %v627 = vsel %vm626, %v621, %v623
        %v628 = vsel %vm626, %v623, %v625
        %v631 = vmul.f32 %v602, %v627
        %v632 = vmul.f32 %v602, %v628
        %v633 = vadd.f32 %v593, %v631
        %v634 = vadd.f32 %v594, %v632
        %v635 = vld [vmem:[#allocation2] sm:$0x3f]
        %s636 = sld [smem:[#allocation4 + $0x15]]
        %s637 = sld [smem:[#allocation4 + $0x46]]
        %v638 = vstv %s636
        %v639 = vmul.f32 %v638, %v513
        %v640 = vstv %s637
        %v641 = vmul.f32 %v640, %v514
        %v642 = vadd.f32 %v639, %v641
        %v644 = vcombine.high %v635, %v635
        %v646 = vunpack.c.l.s4 1983009808
        %v647 = vunpack.c.0.s8 %v646
        %v648 = vlaneseq
        %v649 = vshrl.u32 %v648, 7
        %v650 = vsub.s32 %v647, %v649
        %v651 = vrot.slane %v635, %v650
        %v653 = vunpack.c.l.s4 1983009808
        %v654 = vunpack.c.0.s8 %v653
        %v655 = vlaneseq
        %v656 = vshrl.u32 %v655, 7
        %v657 = vsub.s32 %v654, %v656
        %v658 = vrot.slane %v644, %v657
        %v659 = vcombine.high %v651, %v651
        %660 = vrot.lane.b32.xlu0 %v651, 3
        %v661 = vpop.permute.xlu0 %660
        %662 = vrot.lane.b32.xlu0 %v659, 3
        %v663 = vpop.permute.xlu0 %662
        %664 = vrot.lane.b32.xlu0 %v658, 3
        %v665 = vpop.permute.xlu0 %664
        %vm666 = vcmask 23552
        %v667 = vsel %vm666, %v661, %v663
        %v668 = vsel %vm666, %v663, %v665
        %v671 = vmul.f32 %v642, %v667
        %v672 = vmul.f32 %v642, %v668
        %v673 = vadd.f32 %v633, %v671
        %v674 = vadd.f32 %v634, %v672
        %v675 = vld [vmem:[#allocation2 + $0x2] sm:$0x3f]
        %s676 = sld [smem:[#allocation4 + $0x1c]]
        %s677 = sld [smem:[#allocation4 + $0x4d]]
        %v678 = vstv %s676
        %v679 = vmul.f32 %v678, %v513
        %v680 = vstv %s677
        %v681 = vmul.f32 %v680, %v514
        %v682 = vadd.f32 %v679, %v681
        %v684 = vcombine.high %v675, %v675
        %v686 = vunpack.c.l.s4 1983009808
        %v687 = vunpack.c.0.s8 %v686
        %v688 = vlaneseq
        %v689 = vshrl.u32 %v688, 7
        %v690 = vsub.s32 %v687, %v689
        %v691 = vrot.slane %v675, %v690
        %v693 = vunpack.c.l.s4 1983009808
        %v694 = vunpack.c.0.s8 %v693
        %v695 = vlaneseq
        %v696 = vshrl.u32 %v695, 7
        %v697 = vsub.s32 %v694, %v696
        %v698 = vrot.slane %v684, %v697
        %v699 = vcombine.high %v691, %v691
        %700 = vrot.lane.b32.xlu0 %v691, 115
        %v701 = vpop.permute.xlu0 %700
        %702 = vrot.lane.b32.xlu0 %v699, 115
        %v703 = vpop.permute.xlu0 %702
        %704 = vrot.lane.b32.xlu0 %v698, 115
        %v705 = vpop.permute.xlu0 %704
        %vm706 = vcmask 941056
        %v707 = vsel %vm706, %v701, %v703
        %v708 = vsel %vm706, %v703, %v705
        %v711 = vmul.f32 %v682, %v707
        %v712 = vmul.f32 %v682, %v708
        %v713 = vadd.f32 %v673, %v711
        %v714 = vadd.f32 %v674, %v712
        %v715 = vld [vmem:[#allocation2 + $0x2] sm:$0x3f]
        %s716 = sld [smem:[#allocation4 + $0x23]]
        %s717 = sld [smem:[#allocation4 + $0x54]]
        %v718 = vstv %s716
        %v719 = vmul.f32 %v718, %v513
        %v720 = vstv %s717
        %v721 = vmul.f32 %v720, %v514
        %v722 = vadd.f32 %v719, %v721
        %v724 = vcombine.high %v715, %v715
        %v726 = vunpack.c.l.s4 1983009808
        %v727 = vunpack.c.0.s8 %v726
        %v728 = vlaneseq
        %v729 = vshrl.u32 %v728, 7
        %v730 = vsub.s32 %v727, %v729
        %v731 = vrot.slane %v715, %v730
        %v733 = vunpack.c.l.s4 1983009808
        %v734 = vunpack.c.0.s8 %v733
        %v735 = vlaneseq
        %v736 = vshrl.u32 %v735, 7
        %v737 = vsub.s32 %v734, %v736
        %v738 = vrot.slane %v724, %v737
        %v739 = vcombine.high %v731, %v731
        %740 = vrot.lane.b32.xlu0 %v731, 99
        %v741 = vpop.permute.xlu0 %740
        %742 = vrot.lane.b32.xlu0 %v739, 99
        %v743 = vpop.permute.xlu0 %742
        %744 = vrot.lane.b32.xlu0 %v738, 99
        %v745 = vpop.permute.xlu0 %744
        %vm746 = vcmask 809984
        %v747 = vsel %vm746, %v741, %v743
        %v748 = vsel %vm746, %v743, %v745
        %v751 = vmul.f32 %v722, %v747
        %v752 = vmul.f32 %v722, %v748
        %v753 = vadd.f32 %v713, %v751
        %v754 = vadd.f32 %v714, %v752
        %v755 = vld [vmem:[#allocation2 + $0x2] sm:$0x3f]
        %s756 = sld [smem:[#allocation4 + $0x2a]]
        %s757 = sld [smem:[#allocation4 + $0x5b]]
        %v758 = vstv %s756
        %v759 = vmul.f32 %v758, %v513
        %v760 = vstv %s757
        %v761 = vmul.f32 %v760, %v514
        %v762 = vadd.f32 %v759, %v761
        %v764 = vcombine.high %v755, %v755
        %v766 = vunpack.c.l.s4 1983009808
        %v767 = vunpack.c.0.s8 %v766
        %v768 = vlaneseq
        %v769 = vshrl.u32 %v768, 7
        %v770 = vsub.s32 %v767, %v769
        %v771 = vrot.slane %v755, %v770
        %v773 = vunpack.c.l.s4 1983009808
        %v774 = vunpack.c.0.s8 %v773
        %v775 = vlaneseq
        %v776 = vshrl.u32 %v775, 7
        %v777 = vsub.s32 %v774, %v776
        %v778 = vrot.slane %v764, %v777
        %v779 = vcombine.high %v771, %v771
        %780 = vrot.lane.b32.xlu0 %v771, 83
        %v781 = vpop.permute.xlu0 %780
        %782 = vrot.lane.b32.xlu0 %v779, 83
        %v783 = vpop.permute.xlu0 %782
        %784 = vrot.lane.b32.xlu0 %v778, 83
        %v785 = vpop.permute.xlu0 %784
        %vm786 = vcmask 678912
        %v787 = vsel %vm786, %v781, %v783
        %v788 = vsel %vm786, %v783, %v785
        %v791 = vmul.f32 %v762, %v787
        %v792 = vmul.f32 %v762, %v788
        %v793 = vadd.f32 %v753, %v791
        %v794 = vadd.f32 %v754, %v792
        %v795 = vld [vmem:[%s3] ss:$8 sm:$0x3]
        %v797 = vlaneseq
        %v798 = vshrl.u32 %v797, 7
        %v799 = vsub.s32 0, %v798
        %v800 = vrot.slane %v795, %v799
        %v801 = vlaneseq
        %v802 = vshrl.u32 %v801, 7
        %v803 = vsub.s32 1, %v802
        %v804 = vrot.slane %v795, %v803
        %v807 = vmul.f32 %v800, %v793
        %v808 = vmul.f32 %v804, %v794
        %v809 = vadd.f32 %v807, 0.0
        %v810 = vadd.f32 %v808, 0.0
        %v811 = vld [vmem:[#allocation2] sm:$0x3f]
        %s812 = sld [smem:[#allocation4 + $0x1]]
        %s813 = sld [smem:[#allocation4 + $0x32]]
        %v814 = vstv %s812
        %v815 = vmul.f32 %v814, %v513
        %v816 = vstv %s813
        %v817 = vmul.f32 %v816, %v514
        %v818 = vadd.f32 %v815, %v817
        %v820 = vcombine.high %v811, %v811
        %v822 = vunpack.c.l.s4 1983009808
        %v823 = vunpack.c.0.s8 %v822
        %v824 = vlaneseq
        %v825 = vshrl.u32 %v824, 7
        %v826 = vsub.s32 %v823, %v825
        %v827 = vrot.slane %v811, %v826
        %v829 = vunpack.c.l.s4 1983009808
        %v830 = vunpack.c.0.s8 %v829
        %v831 = vlaneseq
        %v832 = vshrl.u32 %v831, 7
        %v833 = vsub.s32 %v830, %v832
        %v834 = vrot.slane %v820, %v833
        %v835 = vcombine.high %v827, %v827
        %836 = vrot.lane.b32.xlu0 %v827, 50
        %v837 = vpop.permute.xlu0 %836
        %838 = vrot.lane.b32.xlu0 %v835, 50
        %v839 = vpop.permute.xlu0 %838
        %840 = vrot.lane.b32.xlu0 %v834, 50
        %v841 = vpop.permute.xlu0 %840
        %vm842 = vcmask 408576
        %v843 = vsel %vm842, %v837, %v839
        %v844 = vsel %vm842, %v839, %v841
        %v847 = vmul.f32 %v818, %v843
        %v848 = vmul.f32 %v818, %v844
        %v849 = vadd.f32 %v847, 0.0
        %v850 = vadd.f32 %v848, 0.0
        %v851 = vld [vmem:[#allocation2] sm:$0x3f]
        %s852 = sld [smem:[#allocation4 + $0x8]]
        %s853 = sld [smem:[#allocation4 + $0x39]]
        %v854 = vstv %s852
        %v855 = vmul.f32 %v854, %v513
        %v856 = vstv %s853
        %v857 = vmul.f32 %v856, %v514
        %v858 = vadd.f32 %v855, %v857
        %v860 = vcombine.high %v851, %v851
        %v862 = vunpack.c.l.s4 1983009808
        %v863 = vunpack.c.0.s8 %v862
        %v864 = vlaneseq
        %v865 = vshrl.u32 %v864, 7
        %v866 = vsub.s32 %v863, %v865
        %v867 = vrot.slane %v851, %v866
        %v869 = vunpack.c.l.s4 1983009808
        %v870 = vunpack.c.0.s8 %v869
        %v871 = vlaneseq
        %v872 = vshrl.u32 %v871, 7
        %v873 = vsub.s32 %v870, %v872
        %v874 = vrot.slane %v860, %v873
        %v875 = vcombine.high %v867, %v867
        %876 = vrot.lane.b32.xlu0 %v867, 34
        %v877 = vpop.permute.xlu0 %876
        %878 = vrot.lane.b32.xlu0 %v875, 34
        %v879 = vpop.permute.xlu0 %878
        %880 = vrot.lane.b32.xlu0 %v874, 34
        %v881 = vpop.permute.xlu0 %880
        %vm882 = vcmask 277504
        %v883 = vsel %vm882, %v877, %v879
        %v884 = vsel %vm882, %v879, %v881
        %v887 = vmul.f32 %v858, %v883
        %v888 = vmul.f32 %v858, %v884
        %v889 = vadd.f32 %v849, %v887
        %v890 = vadd.f32 %v850, %v888
        %v891 = vld [vmem:[#allocation2] sm:$0x3f]
        %s892 = sld [smem:[#allocation4 + $0xf]]
        %s893 = sld [smem:[#allocation4 + $0x40]]
        %v894 = vstv %s892
        %v895 = vmul.f32 %v894, %v513
        %v896 = vstv %s893
        %v897 = vmul.f32 %v896, %v514
        %v898 = vadd.f32 %v895, %v897
        %v900 = vcombine.high %v891, %v891
        %v902 = vunpack.c.l.s4 1983009808
        %v903 = vunpack.c.0.s8 %v902
        %v904 = vlaneseq
        %v905 = vshrl.u32 %v904, 7
        %v906 = vsub.s32 %v903, %v905
        %v907 = vrot.slane %v891, %v906
        %v909 = vunpack.c.l.s4 1983009808
        %v910 = vunpack.c.0.s8 %v909
        %v911 = vlaneseq
        %v912 = vshrl.u32 %v911, 7
        %v913 = vsub.s32 %v910, %v912
        %v914 = vrot.slane %v900, %v913
        %v915 = vcombine.high %v907, %v907
        %916 = vrot.lane.b32.xlu0 %v907, 18
        %v917 = vpop.permute.xlu0 %916
        %918 = vrot.lane.b32.xlu0 %v915, 18
        %v919 = vpop.permute.xlu0 %918
        %920 = vrot.lane.b32.xlu0 %v914, 18
        %v921 = vpop.permute.xlu0 %920
        %vm922 = vcmask 146432
        %v923 = vsel %vm922, %v917, %v919
        %v924 = vsel %vm922, %v919, %v921
        %v927 = vmul.f32 %v898, %v923
        %v928 = vmul.f32 %v898, %v924
        %v929 = vadd.f32 %v889, %v927
        %v930 = vadd.f32 %v890, %v928
        %v931 = vld [vmem:[#allocation2] sm:$0x3f]
        %s932 = sld [smem:[#allocation4 + $0x16]]
        %s933 = sld [smem:[#allocation4 + $0x47]]
        %v934 = vstv %s932
        %v935 = vmul.f32 %v934, %v513
        %v936 = vstv %s933
        %v937 = vmul.f32 %v936, %v514
        %v938 = vadd.f32 %v935, %v937
        %v940 = vcombine.high %v931, %v931
        %v942 = vunpack.c.l.s4 1983009808
        %v943 = vunpack.c.0.s8 %v942
        %v944 = vlaneseq
        %v945 = vshrl.u32 %v944, 7
        %v946 = vsub.s32 %v943, %v945
        %v947 = vrot.slane %v931, %v946
        %v949 = vunpack.c.l.s4 1983009808
        %v950 = vunpack.c.0.s8 %v949
        %v951 = vlaneseq
        %v952 = vshrl.u32 %v951, 7
        %v953 = vsub.s32 %v950, %v952
        %v954 = vrot.slane %v940, %v953
        %v955 = vcombine.high %v947, %v947
        %956 = vrot.lane.b32.xlu0 %v947, 2
        %v957 = vpop.permute.xlu0 %956
        %958 = vrot.lane.b32.xlu0 %v955, 2
        %v959 = vpop.permute.xlu0 %958
        %960 = vrot.lane.b32.xlu0 %v954, 2
        %v961 = vpop.permute.xlu0 %960
        %v962 = vsel %vm371, %v957, %v959
        %v963 = vsel %vm371, %v959, %v961
        %v966 = vmul.f32 %v938, %v962
        %v967 = vmul.f32 %v938, %v963
        %v968 = vadd.f32 %v929, %v966
        %v969 = vadd.f32 %v930, %v967
        %v970 = vld [vmem:[#allocation2 + $0x2] sm:$0x3f]
        %s971 = sld [smem:[#allocation4 + $0x1d]]
        %s972 = sld [smem:[#allocation4 + $0x4e]]
        %v973 = vstv %s971
        %v974 = vmul.f32 %v973, %v513
        %v975 = vstv %s972
        %v976 = vmul.f32 %v975, %v514
        %v977 = vadd.f32 %v974, %v976
        %v979 = vcombine.high %v970, %v970
        %v981 = vunpack.c.l.s4 1983009808
        %v982 = vunpack.c.0.s8 %v981
        %v983 = vlaneseq
        %v984 = vshrl.u32 %v983, 7
        %v985 = vsub.s32 %v982, %v984
        %v986 = vrot.slane %v970, %v985
        %v988 = vunpack.c.l.s4 1983009808
        %v989 = vunpack.c.0.s8 %v988
        %v990 = vlaneseq
        %v991 = vshrl.u32 %v990, 7
        %v992 = vsub.s32 %v989, %v991
        %v993 = vrot.slane %v979, %v992
        %v994 = vcombine.high %v986, %v986
        %995 = vrot.lane.b32.xlu0 %v986, 114
        %v996 = vpop.permute.xlu0 %995
        %997 = vrot.lane.b32.xlu0 %v994, 114
        %v998 = vpop.permute.xlu0 %997
        %999 = vrot.lane.b32.xlu0 %v993, 114
        %v1000 = vpop.permute.xlu0 %999
        %vm1001 = vcmask 932864
        %v1002 = vsel %vm1001, %v996, %v998
        %v1003 = vsel %vm1001, %v998, %v1000
        %v1006 = vmul.f32 %v977, %v1002
        %v1007 = vmul.f32 %v977, %v1003
        %v1008 = vadd.f32 %v968, %v1006
        %v1009 = vadd.f32 %v969, %v1007
        %v1010 = vld [vmem:[#allocation2 + $0x2] sm:$0x3f]
        %s1011 = sld [smem:[#allocation4 + $0x24]]
        %s1012 = sld [smem:[#allocation4 + $0x55]]
        %v1013 = vstv %s1011
        %v1014 = vmul.f32 %v1013, %v513
        %v1015 = vstv %s1012
        %v1016 = vmul.f32 %v1015, %v514
        %v1017 = vadd.f32 %v1014, %v1016
        %v1019 = vcombine.high %v1010, %v1010
        %v1021 = vunpack.c.l.s4 1983009808
        %v1022 = vunpack.c.0.s8 %v1021
        %v1023 = vlaneseq
        %v1024 = vshrl.u32 %v1023, 7
        %v1025 = vsub.s32 %v1022, %v1024
        %v1026 = vrot.slane %v1010, %v1025
        %v1028 = vunpack.c.l.s4 1983009808
        %v1029 = vunpack.c.0.s8 %v1028
        %v1030 = vlaneseq
        %v1031 = vshrl.u32 %v1030, 7
        %v1032 = vsub.s32 %v1029, %v1031
        %v1033 = vrot.slane %v1019, %v1032
        %v1034 = vcombine.high %v1026, %v1026
        %1035 = vrot.lane.b32.xlu0 %v1026, 98
        %v1036 = vpop.permute.xlu0 %1035
        %1037 = vrot.lane.b32.xlu0 %v1034, 98
        %v1038 = vpop.permute.xlu0 %1037
        %1039 = vrot.lane.b32.xlu0 %v1033, 98
        %v1040 = vpop.permute.xlu0 %1039
        %vm1041 = vcmask 801792
        %v1042 = vsel %vm1041, %v1036, %v1038
        %v1043 = vsel %vm1041, %v1038, %v1040
        %v1046 = vmul.f32 %v1017, %v1042
        %v1047 = vmul.f32 %v1017, %v1043
        %v1048 = vadd.f32 %v1008, %v1046
        %v1049 = vadd.f32 %v1009, %v1047
        %v1050 = vld [vmem:[#allocation2 + $0x2] sm:$0x3f]
        %s1051 = sld [smem:[#allocation4 + $0x2b]]
        %s1052 = sld [smem:[#allocation4 + $0x5c]]
        %v1053 = vstv %s1051
        %v1054 = vmul.f32 %v1053, %v513
        %v1055 = vstv %s1052
        %v1056 = vmul.f32 %v1055, %v514
        %v1057 = vadd.f32 %v1054, %v1056
        %v1059 = vcombine.high %v1050, %v1050
        %v1061 = vunpack.c.l.s4 1983009808
        %v1062 = vunpack.c.0.s8 %v1061
        %v1063 = vlaneseq
        %v1064 = vshrl.u32 %v1063, 7
        %v1065 = vsub.s32 %v1062, %v1064
        %v1066 = vrot.slane %v1050, %v1065
        %v1068 = vunpack.c.l.s4 1983009808
        %v1069 = vunpack.c.0.s8 %v1068
        %v1070 = vlaneseq
        %v1071 = vshrl.u32 %v1070, 7
        %v1072 = vsub.s32 %v1069, %v1071
        %v1073 = vrot.slane %v1059, %v1072
        %v1074 = vcombine.high %v1066, %v1066
        %1075 = vrot.lane.b32.xlu0 %v1066, 82
        %v1076 = vpop.permute.xlu0 %1075
        %1077 = vrot.lane.b32.xlu0 %v1074, 82
        %v1078 = vpop.permute.xlu0 %1077
        %1079 = vrot.lane.b32.xlu0 %v1073, 82
        %v1080 = vpop.permute.xlu0 %1079
        %vm1081 = vcmask 670720
        %v1082 = vsel %vm1081, %v1076, %v1078
        %v1083 = vsel %vm1081, %v1078, %v1080
        %v1086 = vmul.f32 %v1057, %v1082
        %v1087 = vmul.f32 %v1057, %v1083
        %v1088 = vadd.f32 %v1048, %v1086
        %v1089 = vadd.f32 %v1049, %v1087
        %s1090 = scalar_lea.vmem %s3, 1
        %v1091 = vld [vmem:[%s1090] ss:$8 sm:$0x3]
        %v1093 = vlaneseq
        %v1094 = vshrl.u32 %v1093, 7
        %v1095 = vsub.s32 0, %v1094
        %v1096 = vrot.slane %v1091, %v1095
        %v1097 = vlaneseq
        %v1098 = vshrl.u32 %v1097, 7
        %v1099 = vsub.s32 1, %v1098
        %v1100 = vrot.slane %v1091, %v1099
        %v1103 = vmul.f32 %v1096, %v1088
        %v1104 = vmul.f32 %v1100, %v1089
        %v1105 = vadd.f32 %v809, %v1103
        %v1106 = vadd.f32 %v810, %v1104
        %v1107 = vld [vmem:[#allocation2] sm:$0x3f]
        %s1108 = sld [smem:[#allocation4 + $0x2]]
        %s1109 = sld [smem:[#allocation4 + $0x33]]
        %v1110 = vstv %s1108
        %v1111 = vmul.f32 %v1110, %v513
        %v1112 = vstv %s1109
        %v1113 = vmul.f32 %v1112, %v514
        %v1114 = vadd.f32 %v1111, %v1113
        %v1116 = vcombine.high %v1107, %v1107
        %v1118 = vunpack.c.l.s4 1983009808
        %v1119 = vunpack.c.0.s8 %v1118
        %v1120 = vlaneseq
        %v1121 = vshrl.u32 %v1120, 7
        %v1122 = vsub.s32 %v1119, %v1121
        %v1123 = vrot.slane %v1107, %v1122
        %v1125 = vunpack.c.l.s4 1983009808
        %v1126 = vunpack.c.0.s8 %v1125
        %v1127 = vlaneseq
        %v1128 = vshrl.u32 %v1127, 7
        %v1129 = vsub.s32 %v1126, %v1128
        %v1130 = vrot.slane %v1116, %v1129
        %v1131 = vcombine.high %v1123, %v1123
        %1132 = vrot.lane.b32.xlu0 %v1123, 49
        %v1133 = vpop.permute.xlu0 %1132
        %1134 = vrot.lane.b32.xlu0 %v1131, 49
        %v1135 = vpop.permute.xlu0 %1134
        %1136 = vrot.lane.b32.xlu0 %v1130, 49
        %v1137 = vpop.permute.xlu0 %1136
        %vm1138 = vcmask 400384
        %v1139 = vsel %vm1138, %v1133, %v1135
        %v1140 = vsel %vm1138, %v1135, %v1137
        %v1143 = vmul.f32 %v1114, %v1139
        %v1144 = vmul.f32 %v1114, %v1140
        %v1145 = vadd.f32 %v1143, 0.0
        %v1146 = vadd.f32 %v1144, 0.0
        %v1147 = vld [vmem:[#allocation2] sm:$0x3f]
        %s1148 = sld [smem:[#allocation4 + $0x9]]
        %s1149 = sld [smem:[#allocation4 + $0x3a]]
        %v1150 = vstv %s1148
        %v1151 = vmul.f32 %v1150, %v513
        %v1152 = vstv %s1149
        %v1153 = vmul.f32 %v1152, %v514
        %v1154 = vadd.f32 %v1151, %v1153
        %v1156 = vcombine.high %v1147, %v1147
        %v1158 = vunpack.c.l.s4 1983009808
        %v1159 = vunpack.c.0.s8 %v1158
        %v1160 = vlaneseq
        %v1161 = vshrl.u32 %v1160, 7
        %v1162 = vsub.s32 %v1159, %v1161
        %v1163 = vrot.slane %v1147, %v1162
        %v1165 = vunpack.c.l.s4 1983009808
        %v1166 = vunpack.c.0.s8 %v1165
        %v1167 = vlaneseq
        %v1168 = vshrl.u32 %v1167, 7
        %v1169 = vsub.s32 %v1166, %v1168
        %v1170 = vrot.slane %v1156, %v1169
        %v1171 = vcombine.high %v1163, %v1163
        %1172 = vrot.lane.b32.xlu0 %v1163, 33
        %v1173 = vpop.permute.xlu0 %1172
        %1174 = vrot.lane.b32.xlu0 %v1171, 33
        %v1175 = vpop.permute.xlu0 %1174
        %1176 = vrot.lane.b32.xlu0 %v1170, 33
        %v1177 = vpop.permute.xlu0 %1176
        %vm1178 = vcmask 269312
        %v1179 = vsel %vm1178, %v1173, %v1175
        %v1180 = vsel %vm1178, %v1175, %v1177
        %v1183 = vmul.f32 %v1154, %v1179
        %v1184 = vmul.f32 %v1154, %v1180
        %v1185 = vadd.f32 %v1145, %v1183
        %v1186 = vadd.f32 %v1146, %v1184
        %v1187 = vld [vmem:[#allocation2] sm:$0x3f]
        %s1188 = sld [smem:[#allocation4 + $0x10]]
        %s1189 = sld [smem:[#allocation4 + $0x41]]
        %v1190 = vstv %s1188
        %v1191 = vmul.f32 %v1190, %v513
        %v1192 = vstv %s1189
        %v1193 = vmul.f32 %v1192, %v514
        %v1194 = vadd.f32 %v1191, %v1193
        %v1196 = vcombine.high %v1187, %v1187
        %v1198 = vunpack.c.l.s4 1983009808
        %v1199 = vunpack.c.0.s8 %v1198
        %v1200 = vlaneseq
        %v1201 = vshrl.u32 %v1200, 7
        %v1202 = vsub.s32 %v1199, %v1201
        %v1203 = vrot.slane %v1187, %v1202
        %v1205 = vunpack.c.l.s4 1983009808
        %v1206 = vunpack.c.0.s8 %v1205
        %v1207 = vlaneseq
        %v1208 = vshrl.u32 %v1207, 7
        %v1209 = vsub.s32 %v1206, %v1208
        %v1210 = vrot.slane %v1196, %v1209
        %v1211 = vcombine.high %v1203, %v1203
        %1212 = vrot.lane.b32.xlu0 %v1203, 17
        %v1213 = vpop.permute.xlu0 %1212
        %1214 = vrot.lane.b32.xlu0 %v1211, 17
        %v1215 = vpop.permute.xlu0 %1214
        %1216 = vrot.lane.b32.xlu0 %v1210, 17
        %v1217 = vpop.permute.xlu0 %1216
        %vm1218 = vcmask 138240
        %v1219 = vsel %vm1218, %v1213, %v1215
        %v1220 = vsel %vm1218, %v1215, %v1217
        %v1223 = vmul.f32 %v1194, %v1219
        %v1224 = vmul.f32 %v1194, %v1220
        %v1225 = vadd.f32 %v1185, %v1223
        %v1226 = vadd.f32 %v1186, %v1224
        %v1227 = vld [vmem:[#allocation2] sm:$0x3f]
        %s1228 = sld [smem:[#allocation4 + $0x17]]
        %s1229 = sld [smem:[#allocation4 + $0x48]]
        %v1230 = vstv %s1228
        %v1231 = vmul.f32 %v1230, %v513
        %v1232 = vstv %s1229
        %v1233 = vmul.f32 %v1232, %v514
        %v1234 = vadd.f32 %v1231, %v1233
        %v1236 = vcombine.high %v1227, %v1227
        %v1238 = vunpack.c.l.s4 1983009808
        %v1239 = vunpack.c.0.s8 %v1238
        %v1240 = vlaneseq
        %v1241 = vshrl.u32 %v1240, 7
        %v1242 = vsub.s32 %v1239, %v1241
        %v1243 = vrot.slane %v1227, %v1242
        %v1245 = vunpack.c.l.s4 1983009808
        %v1246 = vunpack.c.0.s8 %v1245
        %v1247 = vlaneseq
        %v1248 = vshrl.u32 %v1247, 7
        %v1249 = vsub.s32 %v1246, %v1248
        %v1250 = vrot.slane %v1236, %v1249
        %v1251 = vcombine.high %v1243, %v1243
        %1252 = vrot.lane.b32.xlu0 %v1243, 1
        %v1253 = vpop.permute.xlu0 %1252
        %1254 = vrot.lane.b32.xlu0 %v1251, 1
        %v1255 = vpop.permute.xlu0 %1254
        %1256 = vrot.lane.b32.xlu0 %v1250, 1
        %v1257 = vpop.permute.xlu0 %1256
        %vm1258 = vcmask 7168
        %v1259 = vsel %vm1258, %v1253, %v1255
        %v1260 = vsel %vm1258, %v1255, %v1257
        %v1263 = vmul.f32 %v1234, %v1259
        %v1264 = vmul.f32 %v1234, %v1260
        %v1265 = vadd.f32 %v1225, %v1263
        %v1266 = vadd.f32 %v1226, %v1264
        %v1267 = vld [vmem:[#allocation2 + $0x2] sm:$0x3f]
        %s1268 = sld [smem:[#allocation4 + $0x1e]]
        %s1269 = sld [smem:[#allocation4 + $0x4f]]
        %v1270 = vstv %s1268
        %v1271 = vmul.f32 %v1270, %v513
        %v1272 = vstv %s1269
        %v1273 = vmul.f32 %v1272, %v514
        %v1274 = vadd.f32 %v1271, %v1273
        %v1276 = vcombine.high %v1267, %v1267
        %v1278 = vunpack.c.l.s4 1983009808
        %v1279 = vunpack.c.0.s8 %v1278
        %v1280 = vlaneseq
        %v1281 = vshrl.u32 %v1280, 7
        %v1282 = vsub.s32 %v1279, %v1281
        %v1283 = vrot.slane %v1267, %v1282
        %v1285 = vunpack.c.l.s4 1983009808
        %v1286 = vunpack.c.0.s8 %v1285
        %v1287 = vlaneseq
        %v1288 = vshrl.u32 %v1287, 7
        %v1289 = vsub.s32 %v1286, %v1288
        %v1290 = vrot.slane %v1276, %v1289
        %v1291 = vcombine.high %v1283, %v1283
        %1292 = vrot.lane.b32.xlu0 %v1283, 113
        %v1293 = vpop.permute.xlu0 %1292
        %1294 = vrot.lane.b32.xlu0 %v1291, 113
        %v1295 = vpop.permute.xlu0 %1294
        %1296 = vrot.lane.b32.xlu0 %v1290, 113
        %v1297 = vpop.permute.xlu0 %1296
        %vm1298 = vcmask 924672
        %v1299 = vsel %vm1298, %v1293, %v1295
        %v1300 = vsel %vm1298, %v1295, %v1297
        %v1303 = vmul.f32 %v1274, %v1299
        %v1304 = vmul.f32 %v1274, %v1300
        %v1305 = vadd.f32 %v1265, %v1303
        %v1306 = vadd.f32 %v1266, %v1304
        %v1307 = vld [vmem:[#allocation2 + $0x2] sm:$0x3f]
        %s1308 = sld [smem:[#allocation4 + $0x25]]
        %s1309 = sld [smem:[#allocation4 + $0x56]]
        %v1310 = vstv %s1308
        %v1311 = vmul.f32 %v1310, %v513
        %v1312 = vstv %s1309
        %v1313 = vmul.f32 %v1312, %v514
        %v1314 = vadd.f32 %v1311, %v1313
        %v1316 = vcombine.high %v1307, %v1307
        %v1318 = vunpack.c.l.s4 1983009808
        %v1319 = vunpack.c.0.s8 %v1318
        %v1320 = vlaneseq
        %v1321 = vshrl.u32 %v1320, 7
        %v1322 = vsub.s32 %v1319, %v1321
        %v1323 = vrot.slane %v1307, %v1322
        %v1325 = vunpack.c.l.s4 1983009808
        %v1326 = vunpack.c.0.s8 %v1325
        %v1327 = vlaneseq
        %v1328 = vshrl.u32 %v1327, 7
        %v1329 = vsub.s32 %v1326, %v1328
        %v1330 = vrot.slane %v1316, %v1329
        %v1331 = vcombine.high %v1323, %v1323
        %1332 = vrot.lane.b32.xlu0 %v1323, 97
        %v1333 = vpop.permute.xlu0 %1332
        %1334 = vrot.lane.b32.xlu0 %v1331, 97
        %v1335 = vpop.permute.xlu0 %1334
        %1336 = vrot.lane.b32.xlu0 %v1330, 97
        %v1337 = vpop.permute.xlu0 %1336
        %vm1338 = vcmask 793600
        %v1339 = vsel %vm1338, %v1333, %v1335
        %v1340 = vsel %vm1338, %v1335, %v1337
        %v1343 = vmul.f32 %v1314, %v1339
        %v1344 = vmul.f32 %v1314, %v1340
        %v1345 = vadd.f32 %v1305, %v1343
        %v1346 = vadd.f32 %v1306, %v1344
        %v1347 = vld [vmem:[#allocation2 + $0x2] sm:$0x3f]
        %s1348 = sld [smem:[#allocation4 + $0x2c]]
        %s1349 = sld [smem:[#allocation4 + $0x5d]]
        %v1350 = vstv %s1348
        %v1351 = vmul.f32 %v1350, %v513
        %v1352 = vstv %s1349
        %v1353 = vmul.f32 %v1352, %v514
        %v1354 = vadd.f32 %v1351, %v1353
        %v1356 = vcombine.high %v1347, %v1347
        %v1358 = vunpack.c.l.s4 1983009808
        %v1359 = vunpack.c.0.s8 %v1358
        %v1360 = vlaneseq
        %v1361 = vshrl.u32 %v1360, 7
        %v1362 = vsub.s32 %v1359, %v1361
        %v1363 = vrot.slane %v1347, %v1362
        %v1365 = vunpack.c.l.s4 1983009808
        %v1366 = vunpack.c.0.s8 %v1365
        %v1367 = vlaneseq
        %v1368 = vshrl.u32 %v1367, 7
        %v1369 = vsub.s32 %v1366, %v1368
        %v1370 = vrot.slane %v1356, %v1369
        %v1371 = vcombine.high %v1363, %v1363
        %1372 = vrot.lane.b32.xlu0 %v1363, 81
        %v1373 = vpop.permute.xlu0 %1372
        %1374 = vrot.lane.b32.xlu0 %v1371, 81
        %v1375 = vpop.permute.xlu0 %1374
        %1376 = vrot.lane.b32.xlu0 %v1370, 81
        %v1377 = vpop.permute.xlu0 %1376
        %vm1378 = vcmask 662528
        %v1379 = vsel %vm1378, %v1373, %v1375
        %v1380 = vsel %vm1378, %v1375, %v1377
        %v1383 = vmul.f32 %v1354, %v1379
        %v1384 = vmul.f32 %v1354, %v1380
        %v1385 = vadd.f32 %v1345, %v1383
        %v1386 = vadd.f32 %v1346, %v1384
        %s1387 = scalar_lea.vmem %s3, 2
        %v1388 = vld [vmem:[%s1387] ss:$8 sm:$0x3]
        %v1390 = vlaneseq
        %v1391 = vshrl.u32 %v1390, 7
        %v1392 = vsub.s32 0, %v1391
        %v1393 = vrot.slane %v1388, %v1392
        %v1394 = vlaneseq
        %v1395 = vshrl.u32 %v1394, 7
        %v1396 = vsub.s32 1, %v1395
        %v1397 = vrot.slane %v1388, %v1396
        %v1400 = vmul.f32 %v1393, %v1385
        %v1401 = vmul.f32 %v1397, %v1386
        %v1402 = vadd.f32 %v1105, %v1400
        %v1403 = vadd.f32 %v1106, %v1401
        %v1404 = vld [vmem:[#allocation2] sm:$0x3f]
        %s1405 = sld [smem:[#allocation4 + $0x3]]
        %s1406 = sld [smem:[#allocation4 + $0x34]]
        %v1407 = vstv %s1405
        %v1408 = vmul.f32 %v1407, %v513
        %v1409 = vstv %s1406
        %v1410 = vmul.f32 %v1409, %v514
        %v1411 = vadd.f32 %v1408, %v1410
        %v1413 = vcombine.high %v1404, %v1404
        %v1415 = vunpack.c.l.s4 1983009808
        %v1416 = vunpack.c.0.s8 %v1415
        %v1417 = vlaneseq
        %v1418 = vshrl.u32 %v1417, 7
        %v1419 = vsub.s32 %v1416, %v1418
        %v1420 = vrot.slane %v1404, %v1419
        %v1422 = vunpack.c.l.s4 1983009808
        %v1423 = vunpack.c.0.s8 %v1422
        %v1424 = vlaneseq
        %v1425 = vshrl.u32 %v1424, 7
        %v1426 = vsub.s32 %v1423, %v1425
        %v1427 = vrot.slane %v1413, %v1426
        %v1428 = vcombine.high %v1420, %v1420
        %1429 = vrot.lane.b32.xlu0 %v1420, 48
        %v1430 = vpop.permute.xlu0 %1429
        %1431 = vrot.lane.b32.xlu0 %v1428, 48
        %v1432 = vpop.permute.xlu0 %1431
        %1433 = vrot.lane.b32.xlu0 %v1427, 48
        %v1434 = vpop.permute.xlu0 %1433
        %vm1435 = vcmask 392192
        %v1436 = vsel %vm1435, %v1430, %v1432
        %v1437 = vsel %vm1435, %v1432, %v1434
        %v1440 = vmul.f32 %v1411, %v1436
        %v1441 = vmul.f32 %v1411, %v1437
        %v1442 = vadd.f32 %v1440, 0.0
        %v1443 = vadd.f32 %v1441, 0.0
        %v1444 = vld [vmem:[#allocation2] sm:$0x3f]
        %s1445 = sld [smem:[#allocation4 + $0xa]]
        %s1446 = sld [smem:[#allocation4 + $0x3b]]
        %v1447 = vstv %s1445
        %v1448 = vmul.f32 %v1447, %v513
        %v1449 = vstv %s1446
        %v1450 = vmul.f32 %v1449, %v514
        %v1451 = vadd.f32 %v1448, %v1450
        %v1453 = vcombine.high %v1444, %v1444
        %v1455 = vunpack.c.l.s4 1983009808
        %v1456 = vunpack.c.0.s8 %v1455
        %v1457 = vlaneseq
        %v1458 = vshrl.u32 %v1457, 7
        %v1459 = vsub.s32 %v1456, %v1458
        %v1460 = vrot.slane %v1444, %v1459
        %v1462 = vunpack.c.l.s4 1983009808
        %v1463 = vunpack.c.0.s8 %v1462
        %v1464 = vlaneseq
        %v1465 = vshrl.u32 %v1464, 7
        %v1466 = vsub.s32 %v1463, %v1465
        %v1467 = vrot.slane %v1453, %v1466
        %v1468 = vcombine.high %v1460, %v1460
        %1469 = vrot.lane.b32.xlu0 %v1460, 32
        %v1470 = vpop.permute.xlu0 %1469
        %1471 = vrot.lane.b32.xlu0 %v1468, 32
        %v1472 = vpop.permute.xlu0 %1471
        %1473 = vrot.lane.b32.xlu0 %v1467, 32
        %v1474 = vpop.permute.xlu0 %1473
        %vm1475 = vcmask 261120
        %v1476 = vsel %vm1475, %v1470, %v1472
        %v1477 = vsel %vm1475, %v1472, %v1474
        %v1480 = vmul.f32 %v1451, %v1476
        %v1481 = vmul.f32 %v1451, %v1477
        %v1482 = vadd.f32 %v1442, %v1480
        %v1483 = vadd.f32 %v1443, %v1481
        %v1484 = vld [vmem:[#allocation2] sm:$0x3f]
        %s1485 = sld [smem:[#allocation4 + $0x11]]
        %s1486 = sld [smem:[#allocation4 + $0x42]]
        %v1487 = vstv %s1485
        %v1488 = vmul.f32 %v1487, %v513
        %v1489 = vstv %s1486
        %v1490 = vmul.f32 %v1489, %v514
        %v1491 = vadd.f32 %v1488, %v1490
        %v1493 = vcombine.high %v1484, %v1484
        %v1495 = vunpack.c.l.s4 1983009808
        %v1496 = vunpack.c.0.s8 %v1495
        %v1497 = vlaneseq
        %v1498 = vshrl.u32 %v1497, 7
        %v1499 = vsub.s32 %v1496, %v1498
        %v1500 = vrot.slane %v1484, %v1499
        %v1502 = vunpack.c.l.s4 1983009808
        %v1503 = vunpack.c.0.s8 %v1502
        %v1504 = vlaneseq
        %v1505 = vshrl.u32 %v1504, 7
        %v1506 = vsub.s32 %v1503, %v1505
        %v1507 = vrot.slane %v1493, %v1506
        %v1508 = vcombine.high %v1500, %v1500
        %1509 = vrot.lane.b32.xlu0 %v1500, 16
        %v1510 = vpop.permute.xlu0 %1509
        %1511 = vrot.lane.b32.xlu0 %v1508, 16
        %v1512 = vpop.permute.xlu0 %1511
        %1513 = vrot.lane.b32.xlu0 %v1507, 16
        %v1514 = vpop.permute.xlu0 %1513
        %vm1515 = vcmask 130048
        %v1516 = vsel %vm1515, %v1510, %v1512
        %v1517 = vsel %vm1515, %v1512, %v1514
        %v1520 = vmul.f32 %v1491, %v1516
        %v1521 = vmul.f32 %v1491, %v1517
        %v1522 = vadd.f32 %v1482, %v1520
        %v1523 = vadd.f32 %v1483, %v1521
        %v1524 = vld [vmem:[#allocation2 + $0x2] sm:$0xf]
        %s1525 = sld [smem:[#allocation4 + $0x18]]
        %s1526 = sld [smem:[#allocation4 + $0x49]]
        %v1527 = vstv %s1525
        %v1528 = vmul.f32 %v1527, %v513
        %v1529 = vstv %s1526
        %v1530 = vmul.f32 %v1529, %v514
        %v1531 = vadd.f32 %v1528, %v1530
        %v1534 = vunpack.c.l.s4 1983009808
        %v1535 = vunpack.c.0.s8 %v1534
        %v1536 = vlaneseq
        %v1537 = vshrl.u32 %v1536, 7
        %v1538 = vsub.s32 %v1535, %v1537
        %v1539 = vrot.slane %v1524, %v1538
        %v1540 = vcombine.high %v1539, %v1539
        %v1543 = vmul.f32 %v1531, %v1539
        %v1544 = vmul.f32 %v1531, %v1540
        %v1545 = vadd.f32 %v1522, %v1543
        %v1546 = vadd.f32 %v1523, %v1544
        %v1547 = vld [vmem:[#allocation2 + $0x2] sm:$0x3f]
        %s1548 = sld [smem:[#allocation4 + $0x1f]]
        %s1549 = sld [smem:[#allocation4 + $0x50]]
        %v1550 = vstv %s1548
        %v1551 = vmul.f32 %v1550, %v513
        %v1552 = vstv %s1549
        %v1553 = vmul.f32 %v1552, %v514
        %v1554 = vadd.f32 %v1551, %v1553
        %v1556 = vcombine.high %v1547, %v1547
        %v1558 = vunpack.c.l.s4 1983009808
        %v1559 = vunpack.c.0.s8 %v1558
        %v1560 = vlaneseq
        %v1561 = vshrl.u32 %v1560, 7
        %v1562 = vsub.s32 %v1559, %v1561
        %v1563 = vrot.slane %v1547, %v1562
        %v1565 = vunpack.c.l.s4 1983009808
        %v1566 = vunpack.c.0.s8 %v1565
        %v1567 = vlaneseq
        %v1568 = vshrl.u32 %v1567, 7
        %v1569 = vsub.s32 %v1566, %v1568
        %v1570 = vrot.slane %v1556, %v1569
        %v1571 = vcombine.high %v1563, %v1563
        %1572 = vrot.lane.b32.xlu0 %v1563, 112
        %v1573 = vpop.permute.xlu0 %1572
        %1574 = vrot.lane.b32.xlu0 %v1571, 112
        %v1575 = vpop.permute.xlu0 %1574
        %1576 = vrot.lane.b32.xlu0 %v1570, 112
        %v1577 = vpop.permute.xlu0 %1576
        %vm1578 = vcmask 916480
        %v1579 = vsel %vm1578, %v1573, %v1575
        %v1580 = vsel %vm1578, %v1575, %v1577
        %v1583 = vmul.f32 %v1554, %v1579
        %v1584 = vmul.f32 %v1554, %v1580
        %v1585 = vadd.f32 %v1545, %v1583
        %v1586 = vadd.f32 %v1546, %v1584
        %v1587 = vld [vmem:[#allocation2 + $0x2] sm:$0x3f]
        %s1588 = sld [smem:[#allocation4 + $0x26]]
        %s1589 = sld [smem:[#allocation4 + $0x57]]
        %v1590 = vstv %s1588
        %v1591 = vmul.f32 %v1590, %v513
        %v1592 = vstv %s1589
        %v1593 = vmul.f32 %v1592, %v514
        %v1594 = vadd.f32 %v1591, %v1593
        %v1596 = vcombine.high %v1587, %v1587
        %v1598 = vunpack.c.l.s4 1983009808
        %v1599 = vunpack.c.0.s8 %v1598
        %v1600 = vlaneseq
        %v1601 = vshrl.u32 %v1600, 7
        %v1602 = vsub.s32 %v1599, %v1601
        %v1603 = vrot.slane %v1587, %v1602
        %v1605 = vunpack.c.l.s4 1983009808
        %v1606 = vunpack.c.0.s8 %v1605
        %v1607 = vlaneseq
        %v1608 = vshrl.u32 %v1607, 7
        %v1609 = vsub.s32 %v1606, %v1608
        %v1610 = vrot.slane %v1596, %v1609
        %v1611 = vcombine.high %v1603, %v1603
        %1612 = vrot.lane.b32.xlu0 %v1603, 96
        %v1613 = vpop.permute.xlu0 %1612
        %1614 = vrot.lane.b32.xlu0 %v1611, 96
        %v1615 = vpop.permute.xlu0 %1614
        %1616 = vrot.lane.b32.xlu0 %v1610, 96
        %v1617 = vpop.permute.xlu0 %1616
        %vm1618 = vcmask 785408
        %v1619 = vsel %vm1618, %v1613, %v1615
        %v1620 = vsel %vm1618, %v1615, %v1617
        %v1623 = vmul.f32 %v1594, %v1619
        %v1624 = vmul.f32 %v1594, %v1620
        %v1625 = vadd.f32 %v1585, %v1623
        %v1626 = vadd.f32 %v1586, %v1624
        %v1627 = vld [vmem:[#allocation2 + $0x2] sm:$0x3f]
        %s1628 = sld [smem:[#allocation4 + $0x2d]]
        %s1629 = sld [smem:[#allocation4 + $0x5e]]
        %v1630 = vstv %s1628
        %v1631 = vmul.f32 %v1630, %v513
        %v1632 = vstv %s1629
        %v1633 = vmul.f32 %v1632, %v514
        %v1634 = vadd.f32 %v1631, %v1633
        %v1636 = vcombine.high %v1627, %v1627
        %v1638 = vunpack.c.l.s4 1983009808
        %v1639 = vunpack.c.0.s8 %v1638
        %v1640 = vlaneseq
        %v1641 = vshrl.u32 %v1640, 7
        %v1642 = vsub.s32 %v1639, %v1641
        %v1643 = vrot.slane %v1627, %v1642
        %v1645 = vunpack.c.l.s4 1983009808
        %v1646 = vunpack.c.0.s8 %v1645
        %v1647 = vlaneseq
        %v1648 = vshrl.u32 %v1647, 7
        %v1649 = vsub.s32 %v1646, %v1648
        %v1650 = vrot.slane %v1636, %v1649
        %v1651 = vcombine.high %v1643, %v1643
        %1652 = vrot.lane.b32.xlu0 %v1643, 80
        %v1653 = vpop.permute.xlu0 %1652
        %1654 = vrot.lane.b32.xlu0 %v1651, 80
        %v1655 = vpop.permute.xlu0 %1654
        %1656 = vrot.lane.b32.xlu0 %v1650, 80
        %v1657 = vpop.permute.xlu0 %1656
        %vm1658 = vcmask 654336
        %v1659 = vsel %vm1658, %v1653, %v1655
        %v1660 = vsel %vm1658, %v1655, %v1657
        %v1663 = vmul.f32 %v1634, %v1659
        %v1664 = vmul.f32 %v1634, %v1660
        %v1665 = vadd.f32 %v1625, %v1663
        %v1666 = vadd.f32 %v1626, %v1664
        %s1667 = scalar_lea.vmem %s3, 3
        %v1668 = vld [vmem:[%s1667] ss:$8 sm:$0x3]
        %v1670 = vlaneseq
        %v1671 = vshrl.u32 %v1670, 7
        %v1672 = vsub.s32 0, %v1671
        %v1673 = vrot.slane %v1668, %v1672
        %v1674 = vlaneseq
        %v1675 = vshrl.u32 %v1674, 7
        %v1676 = vsub.s32 1, %v1675
        %v1677 = vrot.slane %v1668, %v1676
        %v1680 = vmul.f32 %v1673, %v1665
        %v1681 = vmul.f32 %v1677, %v1666
        %v1682 = vadd.f32 %v1402, %v1680
        %v1683 = vadd.f32 %v1403, %v1681
        %v1684 = vld [vmem:[#allocation2] sm:$0x3f]
        %s1685 = sld [smem:[#allocation4 + $0x4]]
        %s1686 = sld [smem:[#allocation4 + $0x35]]
        %v1687 = vstv %s1685
        %v1688 = vmul.f32 %v1687, %v513
        %v1689 = vstv %s1686
        %v1690 = vmul.f32 %v1689, %v514
        %v1691 = vadd.f32 %v1688, %v1690
        %v1693 = vcombine.high %v1684, %v1684
        %v1695 = vunpack.c.l.s4 1983009808
        %v1696 = vunpack.c.0.s8 %v1695
        %v1697 = vlaneseq
        %v1698 = vshrl.u32 %v1697, 7
        %v1699 = vsub.s32 %v1696, %v1698
        %v1700 = vrot.slane %v1684, %v1699
        %v1702 = vunpack.c.l.s4 1983009808
        %v1703 = vunpack.c.0.s8 %v1702
        %v1704 = vlaneseq
        %v1705 = vshrl.u32 %v1704, 7
        %v1706 = vsub.s32 %v1703, %v1705
        %v1707 = vrot.slane %v1693, %v1706
        %v1708 = vcombine.high %v1700, %v1700
        %1709 = vrot.lane.b32.xlu0 %v1700, 47
        %v1710 = vpop.permute.xlu0 %1709
        %1711 = vrot.lane.b32.xlu0 %v1708, 47
        %v1712 = vpop.permute.xlu0 %1711
        %1713 = vrot.lane.b32.xlu0 %v1707, 47
        %v1714 = vpop.permute.xlu0 %1713
        %vm1715 = vcmask 384000
        %v1716 = vsel %vm1715, %v1710, %v1712
        %v1717 = vsel %vm1715, %v1712, %v1714
        %v1720 = vmul.f32 %v1691, %v1716
        %v1721 = vmul.f32 %v1691, %v1717
        %v1722 = vadd.f32 %v1720, 0.0
        %v1723 = vadd.f32 %v1721, 0.0
        %v1724 = vld [vmem:[#allocation2] sm:$0x3f]
        %s1725 = sld [smem:[#allocation4 + $0xb]]
        %s1726 = sld [smem:[#allocation4 + $0x3c]]
        %v1727 = vstv %s1725
        %v1728 = vmul.f32 %v1727, %v513
        %v1729 = vstv %s1726
        %v1730 = vmul.f32 %v1729, %v514
        %v1731 = vadd.f32 %v1728, %v1730
        %v1733 = vcombine.high %v1724, %v1724
        %v1735 = vunpack.c.l.s4 1983009808
        %v1736 = vunpack.c.0.s8 %v1735
        %v1737 = vlaneseq
        %v1738 = vshrl.u32 %v1737, 7
        %v1739 = vsub.s32 %v1736, %v1738
        %v1740 = vrot.slane %v1724, %v1739
        %v1742 = vunpack.c.l.s4 1983009808
        %v1743 = vunpack.c.0.s8 %v1742
        %v1744 = vlaneseq
        %v1745 = vshrl.u32 %v1744, 7
        %v1746 = vsub.s32 %v1743, %v1745
        %v1747 = vrot.slane %v1733, %v1746
        %v1748 = vcombine.high %v1740, %v1740
        %1749 = vrot.lane.b32.xlu0 %v1740, 31
        %v1750 = vpop.permute.xlu0 %1749
        %1751 = vrot.lane.b32.xlu0 %v1748, 31
        %v1752 = vpop.permute.xlu0 %1751
        %1753 = vrot.lane.b32.xlu0 %v1747, 31
        %v1754 = vpop.permute.xlu0 %1753
        %vm1755 = vcmask 252928
        %v1756 = vsel %vm1755, %v1750, %v1752
        %v1757 = vsel %vm1755, %v1752, %v1754
        %v1760 = vmul.f32 %v1731, %v1756
        %v1761 = vmul.f32 %v1731, %v1757
        %v1762 = vadd.f32 %v1722, %v1760
        %v1763 = vadd.f32 %v1723, %v1761
        %v1764 = vld [vmem:[#allocation2] sm:$0x3f]
        %s1765 = sld [smem:[#allocation4 + $0x12]]
        %s1766 = sld [smem:[#allocation4 + $0x43]]
        %v1767 = vstv %s1765
        %v1768 = vmul.f32 %v1767, %v513
        %v1769 = vstv %s1766
        %v1770 = vmul.f32 %v1769, %v514
        %v1771 = vadd.f32 %v1768, %v1770
        %v1773 = vcombine.high %v1764, %v1764
        %v1775 = vunpack.c.l.s4 1983009808
        %v1776 = vunpack.c.0.s8 %v1775
        %v1777 = vlaneseq
        %v1778 = vshrl.u32 %v1777, 7
        %v1779 = vsub.s32 %v1776, %v1778
        %v1780 = vrot.slane %v1764, %v1779
        %v1782 = vunpack.c.l.s4 1983009808
        %v1783 = vunpack.c.0.s8 %v1782
        %v1784 = vlaneseq
        %v1785 = vshrl.u32 %v1784, 7
        %v1786 = vsub.s32 %v1783, %v1785
        %v1787 = vrot.slane %v1773, %v1786
        %v1788 = vcombine.high %v1780, %v1780
        %1789 = vrot.lane.b32.xlu0 %v1780, 15
        %v1790 = vpop.permute.xlu0 %1789
        %1791 = vrot.lane.b32.xlu0 %v1788, 15
        %v1792 = vpop.permute.xlu0 %1791
        %1793 = vrot.lane.b32.xlu0 %v1787, 15
        %v1794 = vpop.permute.xlu0 %1793
        %vm1795 = vcmask 121856
        %v1796 = vsel %vm1795, %v1790, %v1792
        %v1797 = vsel %vm1795, %v1792, %v1794
        %v1800 = vmul.f32 %v1771, %v1796
        %v1801 = vmul.f32 %v1771, %v1797
        %v1802 = vadd.f32 %v1762, %v1800
        %v1803 = vadd.f32 %v1763, %v1801
        %v1804 = vld [vmem:[#allocation2 + $0x2] sm:$0x3f]
        %s1805 = sld [smem:[#allocation4 + $0x19]]
        %s1806 = sld [smem:[#allocation4 + $0x4a]]
        %v1807 = vstv %s1805
        %v1808 = vmul.f32 %v1807, %v513
        %v1809 = vstv %s1806
        %v1810 = vmul.f32 %v1809, %v514
        %v1811 = vadd.f32 %v1808, %v1810
        %v1813 = vcombine.high %v1804, %v1804
        %v1815 = vunpack.c.l.s4 1983009808
        %v1816 = vunpack.c.0.s8 %v1815
        %v1817 = vlaneseq
        %v1818 = vshrl.u32 %v1817, 7
        %v1819 = vsub.s32 %v1816, %v1818
        %v1820 = vrot.slane %v1804, %v1819
        %v1822 = vunpack.c.l.s4 1983009808
        %v1823 = vunpack.c.0.s8 %v1822
        %v1824 = vlaneseq
        %v1825 = vshrl.u32 %v1824, 7
        %v1826 = vsub.s32 %v1823, %v1825
        %v1827 = vrot.slane %v1813, %v1826
        %v1828 = vcombine.high %v1820, %v1820
        %1829 = vrot.lane.b32.xlu0 %v1820, 127
        %v1830 = vpop.permute.xlu0 %1829
        %1831 = vrot.lane.b32.xlu0 %v1828, 127
        %v1832 = vpop.permute.xlu0 %1831
        %1833 = vrot.lane.b32.xlu0 %v1827, 127
        %v1834 = vpop.permute.xlu0 %1833
        %vm1835 = vcmask 1039360
        %v1836 = vsel %vm1835, %v1830, %v1832
        %v1837 = vsel %vm1835, %v1832, %v1834
        %v1840 = vmul.f32 %v1811, %v1836
        %v1841 = vmul.f32 %v1811, %v1837
        %v1842 = vadd.f32 %v1802, %v1840
        %v1843 = vadd.f32 %v1803, %v1841
        %v1844 = vld [vmem:[#allocation2 + $0x2] sm:$0x3f]
        %s1845 = sld [smem:[#allocation4 + $0x20]]
        %s1846 = sld [smem:[#allocation4 + $0x51]]
        %v1847 = vstv %s1845
        %v1848 = vmul.f32 %v1847, %v513
        %v1849 = vstv %s1846
        %v1850 = vmul.f32 %v1849, %v514
        %v1851 = vadd.f32 %v1848, %v1850
        %v1853 = vcombine.high %v1844, %v1844
        %v1855 = vunpack.c.l.s4 1983009808
        %v1856 = vunpack.c.0.s8 %v1855
        %v1857 = vlaneseq
        %v1858 = vshrl.u32 %v1857, 7
        %v1859 = vsub.s32 %v1856, %v1858
        %v1860 = vrot.slane %v1844, %v1859
        %v1862 = vunpack.c.l.s4 1983009808
        %v1863 = vunpack.c.0.s8 %v1862
        %v1864 = vlaneseq
        %v1865 = vshrl.u32 %v1864, 7
        %v1866 = vsub.s32 %v1863, %v1865
        %v1867 = vrot.slane %v1853, %v1866
        %v1868 = vcombine.high %v1860, %v1860
        %1869 = vrot.lane.b32.xlu0 %v1860, 111
        %v1870 = vpop.permute.xlu0 %1869
        %1871 = vrot.lane.b32.xlu0 %v1868, 111
        %v1872 = vpop.permute.xlu0 %1871
        %1873 = vrot.lane.b32.xlu0 %v1867, 111
        %v1874 = vpop.permute.xlu0 %1873
        %vm1875 = vcmask 908288
        %v1876 = vsel %vm1875, %v1870, %v1872
        %v1877 = vsel %vm1875, %v1872, %v1874
        %v1880 = vmul.f32 %v1851, %v1876
        %v1881 = vmul.f32 %v1851, %v1877
        %v1882 = vadd.f32 %v1842, %v1880
        %v1883 = vadd.f32 %v1843, %v1881
        %v1884 = vld [vmem:[#allocation2 + $0x2] sm:$0x3f]
        %s1885 = sld [smem:[#allocation4 + $0x27]]
        %s1886 = sld [smem:[#allocation4 + $0x58]]
        %v1887 = vstv %s1885
        %v1888 = vmul.f32 %v1887, %v513
        %v1889 = vstv %s1886
        %v1890 = vmul.f32 %v1889, %v514
        %v1891 = vadd.f32 %v1888, %v1890
        %v1893 = vcombine.high %v1884, %v1884
        %v1895 = vunpack.c.l.s4 1983009808
        %v1896 = vunpack.c.0.s8 %v1895
        %v1897 = vlaneseq
        %v1898 = vshrl.u32 %v1897, 7
        %v1899 = vsub.s32 %v1896, %v1898
        %v1900 = vrot.slane %v1884, %v1899
        %v1902 = vunpack.c.l.s4 1983009808
        %v1903 = vunpack.c.0.s8 %v1902
        %v1904 = vlaneseq
        %v1905 = vshrl.u32 %v1904, 7
        %v1906 = vsub.s32 %v1903, %v1905
        %v1907 = vrot.slane %v1893, %v1906
        %v1908 = vcombine.high %v1900, %v1900
        %1909 = vrot.lane.b32.xlu0 %v1900, 95
        %v1910 = vpop.permute.xlu0 %1909
        %1911 = vrot.lane.b32.xlu0 %v1908, 95
        %v1912 = vpop.permute.xlu0 %1911
        %1913 = vrot.lane.b32.xlu0 %v1907, 95
        %v1914 = vpop.permute.xlu0 %1913
        %vm1915 = vcmask 777216
        %v1916 = vsel %vm1915, %v1910, %v1912
        %v1917 = vsel %vm1915, %v1912, %v1914
        %v1920 = vmul.f32 %v1891, %v1916
        %v1921 = vmul.f32 %v1891, %v1917
        %v1922 = vadd.f32 %v1882, %v1920
        %v1923 = vadd.f32 %v1883, %v1921
        %v1924 = vld [vmem:[#allocation2 + $0x2] sm:$0x3f]
        %s1925 = sld [smem:[#allocation4 + $0x2e]]
        %s1926 = sld [smem:[#allocation4 + $0x5f]]
        %v1927 = vstv %s1925
        %v1928 = vmul.f32 %v1927, %v513
        %v1929 = vstv %s1926
        %v1930 = vmul.f32 %v1929, %v514
        %v1931 = vadd.f32 %v1928, %v1930
        %v1933 = vcombine.high %v1924, %v1924
        %v1935 = vunpack.c.l.s4 1983009808
        %v1936 = vunpack.c.0.s8 %v1935
        %v1937 = vlaneseq
        %v1938 = vshrl.u32 %v1937, 7
        %v1939 = vsub.s32 %v1936, %v1938
        %v1940 = vrot.slane %v1924, %v1939
        %v1942 = vunpack.c.l.s4 1983009808
        %v1943 = vunpack.c.0.s8 %v1942
        %v1944 = vlaneseq
        %v1945 = vshrl.u32 %v1944, 7
        %v1946 = vsub.s32 %v1943, %v1945
        %v1947 = vrot.slane %v1933, %v1946
        %v1948 = vcombine.high %v1940, %v1940
        %1949 = vrot.lane.b32.xlu0 %v1940, 79
        %v1950 = vpop.permute.xlu0 %1949
        %1951 = vrot.lane.b32.xlu0 %v1948, 79
        %v1952 = vpop.permute.xlu0 %1951
        %1953 = vrot.lane.b32.xlu0 %v1947, 79
        %v1954 = vpop.permute.xlu0 %1953
        %vm1955 = vcmask 646144
        %v1956 = vsel %vm1955, %v1950, %v1952
        %v1957 = vsel %vm1955, %v1952, %v1954
        %v1960 = vmul.f32 %v1931, %v1956
        %v1961 = vmul.f32 %v1931, %v1957
        %v1962 = vadd.f32 %v1922, %v1960
        %v1963 = vadd.f32 %v1923, %v1961
        %s1964 = scalar_lea.vmem %s3, 4
        %v1965 = vld [vmem:[%s1964] ss:$8 sm:$0x3]
        %v1967 = vlaneseq
        %v1968 = vshrl.u32 %v1967, 7
        %v1969 = vsub.s32 0, %v1968
        %v1970 = vrot.slane %v1965, %v1969
        %v1971 = vlaneseq
        %v1972 = vshrl.u32 %v1971, 7
        %v1973 = vsub.s32 1, %v1972
        %v1974 = vrot.slane %v1965, %v1973
        %v1977 = vmul.f32 %v1970, %v1962
        %v1978 = vmul.f32 %v1974, %v1963
        %v1979 = vadd.f32 %v1682, %v1977
        %v1980 = vadd.f32 %v1683, %v1978
        %v1981 = vld [vmem:[#allocation2] sm:$0x3f]
        %s1982 = sld [smem:[#allocation4 + $0x5]]
        %s1983 = sld [smem:[#allocation4 + $0x36]]
        %v1984 = vstv %s1982
        %v1985 = vmul.f32 %v1984, %v513
        %v1986 = vstv %s1983
        %v1987 = vmul.f32 %v1986, %v514
        %v1988 = vadd.f32 %v1985, %v1987
        %v1990 = vcombine.high %v1981, %v1981
        %v1992 = vunpack.c.l.s4 1983009808
        %v1993 = vunpack.c.0.s8 %v1992
        %v1994 = vlaneseq
        %v1995 = vshrl.u32 %v1994, 7
        %v1996 = vsub.s32 %v1993, %v1995
        %v1997 = vrot.slane %v1981, %v1996
        %v1999 = vunpack.c.l.s4 1983009808
        %v2000 = vunpack.c.0.s8 %v1999
        %v2001 = vlaneseq
        %v2002 = vshrl.u32 %v2001, 7
        %v2003 = vsub.s32 %v2000, %v2002
        %v2004 = vrot.slane %v1990, %v2003
        %v2005 = vcombine.high %v1997, %v1997
        %2006 = vrot.lane.b32.xlu0 %v1997, 46
        %v2007 = vpop.permute.xlu0 %2006
        %2008 = vrot.lane.b32.xlu0 %v2005, 46
        %v2009 = vpop.permute.xlu0 %2008
        %2010 = vrot.lane.b32.xlu0 %v2004, 46
        %v2011 = vpop.permute.xlu0 %2010
        %vm2012 = vcmask 375808
        %v2013 = vsel %vm2012, %v2007, %v2009
        %v2014 = vsel %vm2012, %v2009, %v2011
        %v2017 = vmul.f32 %v1988, %v2013
        %v2018 = vmul.f32 %v1988, %v2014
        %v2019 = vadd.f32 %v2017, 0.0
        %v2020 = vadd.f32 %v2018, 0.0
        %v2021 = vld [vmem:[#allocation2] sm:$0x3f]
        %s2022 = sld [smem:[#allocation4 + $0xc]]
        %s2023 = sld [smem:[#allocation4 + $0x3d]]
        %v2024 = vstv %s2022
        %v2025 = vmul.f32 %v2024, %v513
        %v2026 = vstv %s2023
        %v2027 = vmul.f32 %v2026, %v514
        %v2028 = vadd.f32 %v2025, %v2027
        %v2030 = vcombine.high %v2021, %v2021
        %v2032 = vunpack.c.l.s4 1983009808
        %v2033 = vunpack.c.0.s8 %v2032
        %v2034 = vlaneseq
        %v2035 = vshrl.u32 %v2034, 7
        %v2036 = vsub.s32 %v2033, %v2035
        %v2037 = vrot.slane %v2021, %v2036
        %v2039 = vunpack.c.l.s4 1983009808
        %v2040 = vunpack.c.0.s8 %v2039
        %v2041 = vlaneseq
        %v2042 = vshrl.u32 %v2041, 7
        %v2043 = vsub.s32 %v2040, %v2042
        %v2044 = vrot.slane %v2030, %v2043
        %v2045 = vcombine.high %v2037, %v2037
        %2046 = vrot.lane.b32.xlu0 %v2037, 30
        %v2047 = vpop.permute.xlu0 %2046
        %2048 = vrot.lane.b32.xlu0 %v2045, 30
        %v2049 = vpop.permute.xlu0 %2048
        %2050 = vrot.lane.b32.xlu0 %v2044, 30
        %v2051 = vpop.permute.xlu0 %2050
        %vm2052 = vcmask 244736
        %v2053 = vsel %vm2052, %v2047, %v2049
        %v2054 = vsel %vm2052, %v2049, %v2051
        %v2057 = vmul.f32 %v2028, %v2053
        %v2058 = vmul.f32 %v2028, %v2054
        %v2059 = vadd.f32 %v2019, %v2057
        %v2060 = vadd.f32 %v2020, %v2058
        %v2061 = vld [vmem:[#allocation2] sm:$0x3f]
        %s2062 = sld [smem:[#allocation4 + $0x13]]
        %s2063 = sld [smem:[#allocation4 + $0x44]]
        %v2064 = vstv %s2062
        %v2065 = vmul.f32 %v2064, %v513
        %v2066 = vstv %s2063
        %v2067 = vmul.f32 %v2066, %v514
        %v2068 = vadd.f32 %v2065, %v2067
        %v2070 = vcombine.high %v2061, %v2061
        %v2072 = vunpack.c.l.s4 1983009808
        %v2073 = vunpack.c.0.s8 %v2072
        %v2074 = vlaneseq
        %v2075 = vshrl.u32 %v2074, 7
        %v2076 = vsub.s32 %v2073, %v2075
        %v2077 = vrot.slane %v2061, %v2076
        %v2079 = vunpack.c.l.s4 1983009808
        %v2080 = vunpack.c.0.s8 %v2079
        %v2081 = vlaneseq
        %v2082 = vshrl.u32 %v2081, 7
        %v2083 = vsub.s32 %v2080, %v2082
        %v2084 = vrot.slane %v2070, %v2083
        %v2085 = vcombine.high %v2077, %v2077
        %2086 = vrot.lane.b32.xlu0 %v2077, 14
        %v2087 = vpop.permute.xlu0 %2086
        %2088 = vrot.lane.b32.xlu0 %v2085, 14
        %v2089 = vpop.permute.xlu0 %2088
        %2090 = vrot.lane.b32.xlu0 %v2084, 14
        %v2091 = vpop.permute.xlu0 %2090
        %vm2092 = vcmask 113664
        %v2093 = vsel %vm2092, %v2087, %v2089
        %v2094 = vsel %vm2092, %v2089, %v2091
        %v2097 = vmul.f32 %v2068, %v2093
        %v2098 = vmul.f32 %v2068, %v2094
        %v2099 = vadd.f32 %v2059, %v2097
        %v2100 = vadd.f32 %v2060, %v2098
        %v2101 = vld [vmem:[#allocation2 + $0x2] sm:$0x3f]
        %s2102 = sld [smem:[#allocation4 + $0x1a]]
        %s2103 = sld [smem:[#allocation4 + $0x4b]]
        %v2104 = vstv %s2102
        %v2105 = vmul.f32 %v2104, %v513
        %v2106 = vstv %s2103
        %v2107 = vmul.f32 %v2106, %v514
        %v2108 = vadd.f32 %v2105, %v2107
        %v2110 = vcombine.high %v2101, %v2101
        %v2112 = vunpack.c.l.s4 1983009808
        %v2113 = vunpack.c.0.s8 %v2112
        %v2114 = vlaneseq
        %v2115 = vshrl.u32 %v2114, 7
        %v2116 = vsub.s32 %v2113, %v2115
        %v2117 = vrot.slane %v2101, %v2116
        %v2119 = vunpack.c.l.s4 1983009808
        %v2120 = vunpack.c.0.s8 %v2119
        %v2121 = vlaneseq
        %v2122 = vshrl.u32 %v2121, 7
        %v2123 = vsub.s32 %v2120, %v2122
        %v2124 = vrot.slane %v2110, %v2123
        %v2125 = vcombine.high %v2117, %v2117
        %2126 = vrot.lane.b32.xlu0 %v2117, 126
        %v2127 = vpop.permute.xlu0 %2126
        %2128 = vrot.lane.b32.xlu0 %v2125, 126
        %v2129 = vpop.permute.xlu0 %2128
        %2130 = vrot.lane.b32.xlu0 %v2124, 126
        %v2131 = vpop.permute.xlu0 %2130
        %vm2132 = vcmask 1031168
        %v2133 = vsel %vm2132, %v2127, %v2129
        %v2134 = vsel %vm2132, %v2129, %v2131
        %v2137 = vmul.f32 %v2108, %v2133
        %v2138 = vmul.f32 %v2108, %v2134
        %v2139 = vadd.f32 %v2099, %v2137
        %v2140 = vadd.f32 %v2100, %v2138
        %v2141 = vld [vmem:[#allocation2 + $0x2] sm:$0x3f]
        %s2142 = sld [smem:[#allocation4 + $0x21]]
        %s2143 = sld [smem:[#allocation4 + $0x52]]
        %v2144 = vstv %s2142
        %v2145 = vmul.f32 %v2144, %v513
        %v2146 = vstv %s2143
        %v2147 = vmul.f32 %v2146, %v514
        %v2148 = vadd.f32 %v2145, %v2147
        %v2150 = vcombine.high %v2141, %v2141
        %v2152 = vunpack.c.l.s4 1983009808
        %v2153 = vunpack.c.0.s8 %v2152
        %v2154 = vlaneseq
        %v2155 = vshrl.u32 %v2154, 7
        %v2156 = vsub.s32 %v2153, %v2155
        %v2157 = vrot.slane %v2141, %v2156
        %v2159 = vunpack.c.l.s4 1983009808
        %v2160 = vunpack.c.0.s8 %v2159
        %v2161 = vlaneseq
        %v2162 = vshrl.u32 %v2161, 7
        %v2163 = vsub.s32 %v2160, %v2162
        %v2164 = vrot.slane %v2150, %v2163
        %v2165 = vcombine.high %v2157, %v2157
        %2166 = vrot.lane.b32.xlu0 %v2157, 110
        %v2167 = vpop.permute.xlu0 %2166
        %2168 = vrot.lane.b32.xlu0 %v2165, 110
        %v2169 = vpop.permute.xlu0 %2168
        %2170 = vrot.lane.b32.xlu0 %v2164, 110
        %v2171 = vpop.permute.xlu0 %2170
        %vm2172 = vcmask 900096
        %v2173 = vsel %vm2172, %v2167, %v2169
        %v2174 = vsel %vm2172, %v2169, %v2171
        %v2177 = vmul.f32 %v2148, %v2173
        %v2178 = vmul.f32 %v2148, %v2174
        %v2179 = vadd.f32 %v2139, %v2177
        %v2180 = vadd.f32 %v2140, %v2178
        %v2181 = vld [vmem:[#allocation2 + $0x2] sm:$0x3f]
        %s2182 = sld [smem:[#allocation4 + $0x28]]
        %s2183 = sld [smem:[#allocation4 + $0x59]]
        %v2184 = vstv %s2182
        %v2185 = vmul.f32 %v2184, %v513
        %v2186 = vstv %s2183
        %v2187 = vmul.f32 %v2186, %v514
        %v2188 = vadd.f32 %v2185, %v2187
        %v2190 = vcombine.high %v2181, %v2181
        %v2192 = vunpack.c.l.s4 1983009808
        %v2193 = vunpack.c.0.s8 %v2192
        %v2194 = vlaneseq
        %v2195 = vshrl.u32 %v2194, 7
        %v2196 = vsub.s32 %v2193, %v2195
        %v2197 = vrot.slane %v2181, %v2196
        %v2199 = vunpack.c.l.s4 1983009808
        %v2200 = vunpack.c.0.s8 %v2199
        %v2201 = vlaneseq
        %v2202 = vshrl.u32 %v2201, 7
        %v2203 = vsub.s32 %v2200, %v2202
        %v2204 = vrot.slane %v2190, %v2203
        %v2205 = vcombine.high %v2197, %v2197
        %2206 = vrot.lane.b32.xlu0 %v2197, 94
        %v2207 = vpop.permute.xlu0 %2206
        %2208 = vrot.lane.b32.xlu0 %v2205, 94
        %v2209 = vpop.permute.xlu0 %2208
        %2210 = vrot.lane.b32.xlu0 %v2204, 94
        %v2211 = vpop.permute.xlu0 %2210
        %vm2212 = vcmask 769024
        %v2213 = vsel %vm2212, %v2207, %v2209
        %v2214 = vsel %vm2212, %v2209, %v2211
        %v2217 = vmul.f32 %v2188, %v2213
        %v2218 = vmul.f32 %v2188, %v2214
        %v2219 = vadd.f32 %v2179, %v2217
        %v2220 = vadd.f32 %v2180, %v2218
        %v2221 = vld [vmem:[#allocation2 + $0x2] sm:$0x3f]
        %s2222 = sld [smem:[#allocation4 + $0x2f]]
        %s2223 = sld [smem:[#allocation4 + $0x60]]
        %v2224 = vstv %s2222
        %v2225 = vmul.f32 %v2224, %v513
        %v2226 = vstv %s2223
        %v2227 = vmul.f32 %v2226, %v514
        %v2228 = vadd.f32 %v2225, %v2227
        %v2230 = vcombine.high %v2221, %v2221
        %v2232 = vunpack.c.l.s4 1983009808
        %v2233 = vunpack.c.0.s8 %v2232
        %v2234 = vlaneseq
        %v2235 = vshrl.u32 %v2234, 7
        %v2236 = vsub.s32 %v2233, %v2235
        %v2237 = vrot.slane %v2221, %v2236
        %v2239 = vunpack.c.l.s4 1983009808
        %v2240 = vunpack.c.0.s8 %v2239
        %v2241 = vlaneseq
        %v2242 = vshrl.u32 %v2241, 7
        %v2243 = vsub.s32 %v2240, %v2242
        %v2244 = vrot.slane %v2230, %v2243
        %v2245 = vcombine.high %v2237, %v2237
        %2246 = vrot.lane.b32.xlu0 %v2237, 78
        %v2247 = vpop.permute.xlu0 %2246
        %2248 = vrot.lane.b32.xlu0 %v2245, 78
        %v2249 = vpop.permute.xlu0 %2248
        %2250 = vrot.lane.b32.xlu0 %v2244, 78
        %v2251 = vpop.permute.xlu0 %2250
        %vm2252 = vcmask 637952
        %v2253 = vsel %vm2252, %v2247, %v2249
        %v2254 = vsel %vm2252, %v2249, %v2251
        %v2257 = vmul.f32 %v2228, %v2253
        %v2258 = vmul.f32 %v2228, %v2254
        %v2259 = vadd.f32 %v2219, %v2257
        %v2260 = vadd.f32 %v2220, %v2258
        %s2261 = scalar_lea.vmem %s3, 5
        %v2262 = vld [vmem:[%s2261] ss:$8 sm:$0x3]
        %v2264 = vlaneseq
        %v2265 = vshrl.u32 %v2264, 7
        %v2266 = vsub.s32 0, %v2265
        %v2267 = vrot.slane %v2262, %v2266
        %v2268 = vlaneseq
        %v2269 = vshrl.u32 %v2268, 7
        %v2270 = vsub.s32 1, %v2269
        %v2271 = vrot.slane %v2262, %v2270
        %v2274 = vmul.f32 %v2267, %v2259
        %v2275 = vmul.f32 %v2271, %v2260
        %v2276 = vadd.f32 %v1979, %v2274
        %v2277 = vadd.f32 %v1980, %v2275
        %v2278 = vld [vmem:[#allocation2] sm:$0x3f]
        %s2279 = sld [smem:[#allocation4 + $0x6]]
        %s2280 = sld [smem:[#allocation4 + $0x37]]
        %v2281 = vstv %s2279
        %v2282 = vmul.f32 %v2281, %v513
        %v2283 = vstv %s2280
        %v2284 = vmul.f32 %v2283, %v514
        %v2285 = vadd.f32 %v2282, %v2284
        %v2287 = vcombine.high %v2278, %v2278
        %v2289 = vunpack.c.l.s4 1983009808
        %v2290 = vunpack.c.0.s8 %v2289
        %v2291 = vlaneseq
        %v2292 = vshrl.u32 %v2291, 7
        %v2293 = vsub.s32 %v2290, %v2292
        %v2294 = vrot.slane %v2278, %v2293
        %v2296 = vunpack.c.l.s4 1983009808
        %v2297 = vunpack.c.0.s8 %v2296
        %v2298 = vlaneseq
        %v2299 = vshrl.u32 %v2298, 7
        %v2300 = vsub.s32 %v2297, %v2299
        %v2301 = vrot.slane %v2287, %v2300
        %v2302 = vcombine.high %v2294, %v2294
        %2303 = vrot.lane.b32.xlu0 %v2294, 45
        %v2304 = vpop.permute.xlu0 %2303
        %2305 = vrot.lane.b32.xlu0 %v2302, 45
        %v2306 = vpop.permute.xlu0 %2305
        %2307 = vrot.lane.b32.xlu0 %v2301, 45
        %v2308 = vpop.permute.xlu0 %2307
        %vm2309 = vcmask 367616
        %v2310 = vsel %vm2309, %v2304, %v2306
        %v2311 = vsel %vm2309, %v2306, %v2308
        %v2314 = vmul.f32 %v2285, %v2310
        %v2315 = vmul.f32 %v2285, %v2311
        %v2316 = vadd.f32 %v2314, 0.0
        %v2317 = vadd.f32 %v2315, 0.0
        %v2318 = vld [vmem:[#allocation2] sm:$0x3f]
        %s2319 = sld [smem:[#allocation4 + $0xd]]
        %s2320 = sld [smem:[#allocation4 + $0x3e]]
        %v2321 = vstv %s2319
        %v2322 = vmul.f32 %v2321, %v513
        %v2323 = vstv %s2320
        %v2324 = vmul.f32 %v2323, %v514
        %v2325 = vadd.f32 %v2322, %v2324
        %v2327 = vcombine.high %v2318, %v2318
        %v2329 = vunpack.c.l.s4 1983009808
        %v2330 = vunpack.c.0.s8 %v2329
        %v2331 = vlaneseq
        %v2332 = vshrl.u32 %v2331, 7
        %v2333 = vsub.s32 %v2330, %v2332
        %v2334 = vrot.slane %v2318, %v2333
        %v2336 = vunpack.c.l.s4 1983009808
        %v2337 = vunpack.c.0.s8 %v2336
        %v2338 = vlaneseq
        %v2339 = vshrl.u32 %v2338, 7
        %v2340 = vsub.s32 %v2337, %v2339
        %v2341 = vrot.slane %v2327, %v2340
        %v2342 = vcombine.high %v2334, %v2334
        %2343 = vrot.lane.b32.xlu0 %v2334, 29
        %v2344 = vpop.permute.xlu0 %2343
        %2345 = vrot.lane.b32.xlu0 %v2342, 29
        %v2346 = vpop.permute.xlu0 %2345
        %2347 = vrot.lane.b32.xlu0 %v2341, 29
        %v2348 = vpop.permute.xlu0 %2347
        %vm2349 = vcmask 236544
        %v2350 = vsel %vm2349, %v2344, %v2346
        %v2351 = vsel %vm2349, %v2346, %v2348
        %v2354 = vmul.f32 %v2325, %v2350
        %v2355 = vmul.f32 %v2325, %v2351
        %v2356 = vadd.f32 %v2316, %v2354
        %v2357 = vadd.f32 %v2317, %v2355
        %v2358 = vld [vmem:[#allocation2] sm:$0x3f]
        %s2359 = sld [smem:[#allocation4 + $0x14]]
        %s2360 = sld [smem:[#allocation4 + $0x45]]
        %v2361 = vstv %s2359
        %v2362 = vmul.f32 %v2361, %v513
        %v2363 = vstv %s2360
        %v2364 = vmul.f32 %v2363, %v514
        %v2365 = vadd.f32 %v2362, %v2364
        %v2367 = vcombine.high %v2358, %v2358
        %v2369 = vunpack.c.l.s4 1983009808
        %v2370 = vunpack.c.0.s8 %v2369
        %v2371 = vlaneseq
        %v2372 = vshrl.u32 %v2371, 7
        %v2373 = vsub.s32 %v2370, %v2372
        %v2374 = vrot.slane %v2358, %v2373
        %v2376 = vunpack.c.l.s4 1983009808
        %v2377 = vunpack.c.0.s8 %v2376
        %v2378 = vlaneseq
        %v2379 = vshrl.u32 %v2378, 7
        %v2380 = vsub.s32 %v2377, %v2379
        %v2381 = vrot.slane %v2367, %v2380
        %v2382 = vcombine.high %v2374, %v2374
        %2383 = vrot.lane.b32.xlu0 %v2374, 13
        %v2384 = vpop.permute.xlu0 %2383
        %2385 = vrot.lane.b32.xlu0 %v2382, 13
        %v2386 = vpop.permute.xlu0 %2385
        %2387 = vrot.lane.b32.xlu0 %v2381, 13
        %v2388 = vpop.permute.xlu0 %2387
        %vm2389 = vcmask 105472
        %v2390 = vsel %vm2389, %v2384, %v2386
        %v2391 = vsel %vm2389, %v2386, %v2388
        %v2394 = vmul.f32 %v2365, %v2390
        %v2395 = vmul.f32 %v2365, %v2391
        %v2396 = vadd.f32 %v2356, %v2394
        %v2397 = vadd.f32 %v2357, %v2395
        %v2398 = vld [vmem:[#allocation2 + $0x2] sm:$0x3f]
        %s2399 = sld [smem:[#allocation4 + $0x1b]]
        %s2400 = sld [smem:[#allocation4 + $0x4c]]
        %v2401 = vstv %s2399
        %v2402 = vmul.f32 %v2401, %v513
        %v2403 = vstv %s2400
        %v2404 = vmul.f32 %v2403, %v514
        %v2405 = vadd.f32 %v2402, %v2404
        %v2407 = vcombine.high %v2398, %v2398
        %v2409 = vunpack.c.l.s4 1983009808
        %v2410 = vunpack.c.0.s8 %v2409
        %v2411 = vlaneseq
        %v2412 = vshrl.u32 %v2411, 7
        %v2413 = vsub.s32 %v2410, %v2412
        %v2414 = vrot.slane %v2398, %v2413
        %v2416 = vunpack.c.l.s4 1983009808
        %v2417 = vunpack.c.0.s8 %v2416
        %v2418 = vlaneseq
        %v2419 = vshrl.u32 %v2418, 7
        %v2420 = vsub.s32 %v2417, %v2419
        %v2421 = vrot.slane %v2407, %v2420
        %v2422 = vcombine.high %v2414, %v2414
        %2423 = vrot.lane.b32.xlu0 %v2414, 125
        %v2424 = vpop.permute.xlu0 %2423
        %2425 = vrot.lane.b32.xlu0 %v2422, 125
        %v2426 = vpop.permute.xlu0 %2425
        %2427 = vrot.lane.b32.xlu0 %v2421, 125
        %v2428 = vpop.permute.xlu0 %2427
        %vm2429 = vcmask 1022976
        %v2430 = vsel %vm2429, %v2424, %v2426
        %v2431 = vsel %vm2429, %v2426, %v2428
        %v2434 = vmul.f32 %v2405, %v2430
        %v2435 = vmul.f32 %v2405, %v2431
        %v2436 = vadd.f32 %v2396, %v2434
        %v2437 = vadd.f32 %v2397, %v2435
        %v2438 = vld [vmem:[#allocation2 + $0x2] sm:$0x3f]
        %s2439 = sld [smem:[#allocation4 + $0x22]]
        %s2440 = sld [smem:[#allocation4 + $0x53]]
        %v2441 = vstv %s2439
        %v2442 = vmul.f32 %v2441, %v513
        %v2443 = vstv %s2440
        %v2444 = vmul.f32 %v2443, %v514
        %v2445 = vadd.f32 %v2442, %v2444
        %v2447 = vcombine.high %v2438, %v2438
        %v2449 = vunpack.c.l.s4 1983009808
        %v2450 = vunpack.c.0.s8 %v2449
        %v2451 = vlaneseq
        %v2452 = vshrl.u32 %v2451, 7
        %v2453 = vsub.s32 %v2450, %v2452
        %v2454 = vrot.slane %v2438, %v2453
        %v2456 = vunpack.c.l.s4 1983009808
        %v2457 = vunpack.c.0.s8 %v2456
        %v2458 = vlaneseq
        %v2459 = vshrl.u32 %v2458, 7
        %v2460 = vsub.s32 %v2457, %v2459
        %v2461 = vrot.slane %v2447, %v2460
        %v2462 = vcombine.high %v2454, %v2454
        %2463 = vrot.lane.b32.xlu0 %v2454, 109
        %v2464 = vpop.permute.xlu0 %2463
        %2465 = vrot.lane.b32.xlu0 %v2462, 109
        %v2466 = vpop.permute.xlu0 %2465
        %2467 = vrot.lane.b32.xlu0 %v2461, 109
        %v2468 = vpop.permute.xlu0 %2467
        %vm2469 = vcmask 891904
        %v2470 = vsel %vm2469, %v2464, %v2466
        %v2471 = vsel %vm2469, %v2466, %v2468
        %v2474 = vmul.f32 %v2445, %v2470
        %v2475 = vmul.f32 %v2445, %v2471
        %v2476 = vadd.f32 %v2436, %v2474
        %v2477 = vadd.f32 %v2437, %v2475
        %v2478 = vld [vmem:[#allocation2 + $0x2] sm:$0x3f]
        %s2479 = sld [smem:[#allocation4 + $0x29]]
        %s2480 = sld [smem:[#allocation4 + $0x5a]]
        %v2481 = vstv %s2479
        %v2482 = vmul.f32 %v2481, %v513
        %v2483 = vstv %s2480
        %v2484 = vmul.f32 %v2483, %v514
        %v2485 = vadd.f32 %v2482, %v2484
        %v2487 = vcombine.high %v2478, %v2478
        %v2489 = vunpack.c.l.s4 1983009808
        %v2490 = vunpack.c.0.s8 %v2489
        %v2491 = vlaneseq
        %v2492 = vshrl.u32 %v2491, 7
        %v2493 = vsub.s32 %v2490, %v2492
        %v2494 = vrot.slane %v2478, %v2493
        %v2496 = vunpack.c.l.s4 1983009808
        %v2497 = vunpack.c.0.s8 %v2496
        %v2498 = vlaneseq
        %v2499 = vshrl.u32 %v2498, 7
        %v2500 = vsub.s32 %v2497, %v2499
        %v2501 = vrot.slane %v2487, %v2500
        %v2502 = vcombine.high %v2494, %v2494
        %2503 = vrot.lane.b32.xlu0 %v2494, 93
        %v2504 = vpop.permute.xlu0 %2503
        %2505 = vrot.lane.b32.xlu0 %v2502, 93
        %v2506 = vpop.permute.xlu0 %2505
        %2507 = vrot.lane.b32.xlu0 %v2501, 93
        %v2508 = vpop.permute.xlu0 %2507
        %vm2509 = vcmask 760832
        %v2510 = vsel %vm2509, %v2504, %v2506
        %v2511 = vsel %vm2509, %v2506, %v2508
        %v2514 = vmul.f32 %v2485, %v2510
        %v2515 = vmul.f32 %v2485, %v2511
        %v2516 = vadd.f32 %v2476, %v2514
        %v2517 = vadd.f32 %v2477, %v2515
        %v2518 = vld [vmem:[#allocation2 + $0x2] sm:$0x3f]
        %s2519 = sld [smem:[#allocation4 + $0x30]]
        %s2520 = sld [smem:[#allocation4 + $0x61]]
        %v2521 = vstv %s2519
        %v2522 = vmul.f32 %v2521, %v513
        %v2523 = vstv %s2520
        %v2524 = vmul.f32 %v2523, %v514
        %v2525 = vadd.f32 %v2522, %v2524
        %v2527 = vcombine.high %v2518, %v2518
        %v2529 = vunpack.c.l.s4 1983009808
        %v2530 = vunpack.c.0.s8 %v2529
        %v2531 = vlaneseq
        %v2532 = vshrl.u32 %v2531, 7
        %v2533 = vsub.s32 %v2530, %v2532
        %v2534 = vrot.slane %v2518, %v2533
        %v2536 = vunpack.c.l.s4 1983009808
        %v2537 = vunpack.c.0.s8 %v2536
        %v2538 = vlaneseq
        %v2539 = vshrl.u32 %v2538, 7
        %v2540 = vsub.s32 %v2537, %v2539
        %v2541 = vrot.slane %v2527, %v2540
        %v2542 = vcombine.high %v2534, %v2534
        %2543 = vrot.lane.b32.xlu0 %v2534, 77
        %v2544 = vpop.permute.xlu0 %2543
        %2545 = vrot.lane.b32.xlu0 %v2542, 77
        %v2546 = vpop.permute.xlu0 %2545
        %2547 = vrot.lane.b32.xlu0 %v2541, 77
        %v2548 = vpop.permute.xlu0 %2547
        %vm2549 = vcmask 629760
        %v2550 = vsel %vm2549, %v2544, %v2546
        %v2551 = vsel %vm2549, %v2546, %v2548
        %v2554 = vmul.f32 %v2525, %v2550
        %v2555 = vmul.f32 %v2525, %v2551
        %v2556 = vadd.f32 %v2516, %v2554
        %v2557 = vadd.f32 %v2517, %v2555
        %s2558 = scalar_lea.vmem %s3, 6
        %v2559 = vld [vmem:[%s2558] ss:$8 sm:$0x3]
        %v2561 = vlaneseq
        %v2562 = vshrl.u32 %v2561, 7
        %v2563 = vsub.s32 0, %v2562
        %v2564 = vrot.slane %v2559, %v2563
        %v2565 = vlaneseq
        %v2566 = vshrl.u32 %v2565, 7
        %v2567 = vsub.s32 1, %v2566
        %v2568 = vrot.slane %v2559, %v2567
        %v2571 = vmul.f32 %v2564, %v2556
        %v2572 = vmul.f32 %v2568, %v2557
        %v2573 = vadd.f32 %v2276, %v2571
        %v2574 = vadd.f32 %v2277, %v2572
        %v2577 = vrot.slane %v2573, 1
        %v2578 = vrot.slane %v2574, 1
        %v2581 = vadd.f32 %v2573, %v2577
        %v2582 = vadd.f32 %v2574, %v2578
        %s2583 = sld [smem:[#allocation3]]
        %v2584 = vstv %s2583
        %v2585 = vadd.f32 %v2581, %v2584
        %v2586 = vadd.f32 %v2582, %v2584
        %v2587 = vxor.u32 %v2585, 2147483648
        %v2588 = vxor.u32 %v2586, 2147483648
        %v2589 = vmul.f32 %v2587, 1.442695
        %v2590 = vpow.pop %v2589
        %v2591 = vmul.f32 %v2588, 1.442695
        %v2592 = vpow.pop %v2591
        %v2593 = vadd.f32 %v2590, 1.0
        %v2594 = vadd.f32 %v2592, 1.0
        %v2595 = vrcp.pop %v2593
        %v2596 = vmul.f32 1.0, %v2595
        %v2597 = vrcp.pop %v2594
        %v2598 = vmul.f32 1.0, %v2597
        %v2599 = vlaneseq
        %v2600 = vshrl.u32 %v2599, 7
        %v2601 = vsub.s32 0, %v2600
        %v2602 = vrot.slane %v2596, %v2601
        %v2603 = vlaneseq
        %v2604 = vshrl.u32 %v2603, 7
        %v2605 = vsub.s32 0, %v2604
        %v2606 = vrot.slane %v2598, %v2605
        %v2607 = vmul.f32 %v431, %v2602
        %v2608 = vmul.f32 %v432, %v2606
        %v2609 = vmul.f32 %v433, %v2602
        %v2610 = vmul.f32 %v434, %v2606
        %2611 = vst [vmem:[%s293] sm:$0xff] %v2607
        %2612 = vst [vmem:[%s293 + $0x8] sm:$0xff] %v2608
        %2613 = vst [vmem:[%s293 + $0x10] sm:$0xff] %v2609
        %2614 = vst [vmem:[%s293 + $0x18] sm:$0xff] %v2610
        %p2615 = scmp.lt.s32.totalorder %s20, 1
        %s2616 = scalar_select %p2615, %s20, 1
        %s2617 = smul.addr %s2616, 4
        %s2618 = smul.addr %s2617, 8
        %s2619 = scalar_lea.vmem %s7, %s2618
        // Predicated region
        $region53: #{cbam_forward.1} parent=47 // pred_check
          %p2620 = pneg %p190
        $region54: #{cbam_forward.1} parent=47 // pred_check_branch
          %2622 = sbr.rel (%p2620) target = $region56
        $region55: #{cbam_forward.1} parent=47 // pred_region
          _
        $region56: #{cbam_forward.1} parent=47 // pred_fallthru
          _
      $region48: #{cbam_forward.1} parent=5 // pred_fallthru
        _
      %p2623 = scmp.le.s32.totalorder 2, %s15
      // Predicated region
      $region57: #{cbam_forward.1} parent=5 // pred_check
        %p2624 = pneg %p2623
      $region58: #{cbam_forward.1} parent=5 // pred_check_branch
        %2626 = sbr.rel (%p2624) target = $region60
      $region59: #{cbam_forward.1} parent=5 // pred_region
        %s2627 = ssub.s32 %s15, 2
        // Predicated region
        $region61: #{cbam_forward.1} parent=59 // pred_check
          %p2628 = pneg %p196
        $region62: #{cbam_forward.1} parent=59 // pred_check_branch
          %2630 = sbr.rel (%p2628) target = $region64
        $region63: #{cbam_forward.1} parent=59 // pred_region
          %p2631 = scmp.lt.s32.totalorder %s21, 1
          %s2632 = scalar_select %p2631, %s21, 1
          %s2633 = smul.addr %s2632, 4
          %s2634 = smul.addr %s2633, 8
          %s2635 = scalar_lea.vmem %s7, %s2634
        $region64: #{cbam_forward.1} parent=59 // pred_fallthru
          _
      $region60: #{cbam_forward.1} parent=5 // pred_fallthru
        _
    $region6: #{cbam_forward.1} parent=1 // loop_footer
      %s19 = sadd.s32 1, %s15
    $region7: #{cbam_forward.1} parent=1 // loop_footer_branch
      %14 = sbr.rel target = $region3
    $region8: #{cbam_forward.1} parent=1 // loop_exit
      _
    %2636 = vsyncpa [#allocation5], 1
    %s2637 = scalar_lea.sflag [#allocation5], 1
    %2638 = vsyncpa %s2637, 1

</llo_original>
